<compile_context>
chip_gen: v6e
topology: v6e:2x2x1
jax: 0.10.0
libtpu: 0.0.40
codegen_flags: <defaults>
</compile_context>

<pallas_src>
import functools

import jax
import jax.numpy as jnp
from jax.experimental import pallas as pl
from jax.experimental.pallas import tpu as pltpu

TM_MAX = 512                    # lane-dim (M = N*OH*OW) tile size
BN_EPS = 1e-5
STAGE_STRIDES = (1, 2, 2, 2)    # static config, kept OUT of the jitted pytree
                                # (previous version put strides inside params and
                                #  they became tracers under jit -> slice error)


def _round_up(x, m):
    return ((x + m - 1) // m) * m


# ----------------------------------------------------------------------------
# Pallas MXU kernels: Out(OC, M) = W(OC, K) @ A(K, M) + bias [+ residual] [ReLU]
# ----------------------------------------------------------------------------
def _mm_kernel(w_ref, a_ref, b_ref, o_ref, *, relu):
    out = jnp.dot(w_ref[...], a_ref[...], preferred_element_type=jnp.float32)
    out = out + b_ref[...]
    if relu:
        out = jnp.maximum(out, 0.0)
    o_ref[...] = out


def _mm_add_kernel(w_ref, a_ref, b_ref, r_ref, o_ref, *, relu):
    out = jnp.dot(w_ref[...], a_ref[...], preferred_element_type=jnp.float32)
    out = out + b_ref[...] + r_ref[...]
    if relu:
        out = jnp.maximum(out, 0.0)
    o_ref[...] = out


def matmul_bias_act(w, a, bias, relu, add=None):
    """(OC,K) @ (K,M) + bias(OC,) [+ add(OC,M)], optional ReLU, on the MXU.

    Single full-K block (no reduction axis / accumulator scratch), M tiled on
    the lane axis, bf16 operands with f32 accumulation & epilogue.
    """
    OC, K = w.shape
    _, M = a.shape
    OCp = _round_up(OC, 8)
    tm = min(TM_MAX, _round_up(M, 128))
    Mp = _round_up(M, tm)

    w_p = jnp.pad(w, ((0, OCp - OC), (0, 0))).astype(jnp.bfloat16)
    a_p = jnp.pad(a, ((0, 0), (0, Mp - M))).astype(jnp.bfloat16)
    bias_p = jnp.pad(bias, (0, OCp - OC)).reshape(OCp, 1).astype(jnp.float32)

    w_spec = pl.BlockSpec((OCp, K), lambda i: (0, 0))
    a_spec = pl.BlockSpec((K, tm), lambda i: (0, i))
    b_spec = pl.BlockSpec((OCp, 1), lambda i: (0, 0))
    o_spec = pl.BlockSpec((OCp, tm), lambda i: (0, i))

    if add is None:
        kernel = functools.partial(_mm_kernel, relu=relu)
        in_specs = [w_spec, a_spec, b_spec]
        args = (w_p, a_p, bias_p)
    else:
        add_p = jnp.pad(add, ((0, OCp - OC), (0, Mp - M))).astype(jnp.float32)
        kernel = functools.partial(_mm_add_kernel, relu=relu)
        in_specs = [w_spec, a_spec, b_spec,
                    pl.BlockSpec((OCp, tm), lambda i: (0, i))]
        args = (w_p, a_p, bias_p, add_p)

    out = pl.pallas_call(
        kernel,
        out_shape=jax.ShapeDtypeStruct((OCp, Mp), jnp.float32),
        grid_spec=pltpu.PrefetchScalarGridSpec(
            num_scalar_prefetch=0,
            grid=(Mp // tm,),
            in_specs=in_specs,
            out_specs=o_spec,
        ),
        compiler_params=pltpu.CompilerParams(
            dimension_semantics=("parallel",)),
    )(*args)
    return out[:OC, :M]


# ----------------------------------------------------------------------------
# Conv / pool glue (transposed im2col + Pallas matmul), CNHW layout
# ----------------------------------------------------------------------------
def _im2col_t(x, KH, KW, stride, padding):
    """x: (C, N, H, W) -> transposed patch matrix (C*KH*KW, N*OH*OW).

    Only major axes are permuted (the (OH, OW) minor dims stay in place), so
    the relayout emitted between pallas_calls is cheap."""
    C, N, H, W = x.shape
    (pt, pb), (pl_, pr) = padding
    xp = jnp.pad(x, ((0, 0), (0, 0), (pt, pb), (pl_, pr)))
    OH = (H + pt + pb - KH) // stride + 1
    OW = (W + pl_ + pr - KW) // stride + 1
    cols = []
    for i in range(KH):
        for j in range(KW):
            cols.append(
                xp[:, :, i:i + stride * OH:stride, j:j + stride * OW:stride])
    patches = jnp.stack(cols, axis=0)             # (KH*KW, C, N, OH, OW)
    patches = patches.transpose(1, 0, 2, 3, 4)    # (C, KH*KW, N, OH, OW)
    return patches.reshape(C * KH * KW, N * OH * OW), OH, OW


def conv2d(x, w, b, stride=1, padding=0, relu=False, add=None):
    """x: (C, N, H, W), w: (OC, IC, KH, KW), b: (OC,).
    Optional `add`: (OC, N, OH, OW) residual fused into the matmul epilogue."""
    OC, IC, KH, KW = w.shape
    if isinstance(padding, int):
        padding = ((padding, padding), (padding, padding))
    C, N, H, W = x.shape
    a, OH, OW = _im2col_t(x.astype(jnp.bfloat16), KH, KW, stride, padding)
    wm = w.reshape(OC, IC * KH * KW)
    add_m = None if add is None else add.reshape(OC, N * OH * OW)
    out = matmul_bias_act(wm, a, b, relu=relu, add=add_m)
    return out.reshape(OC, N, OH, OW)


def deconv2d(x, w_conv, b, relu=True):
    """ConvTranspose2d(k=4, s=2, p=1) via sub-pixel decomposition.

    Each output parity (a, b) is an independent 2x2 conv of the *undilated*
    input with kernel slice w[:, :, a::2, b::2] and asymmetric padding
    ((1-a, a), (1-b, b)); the four results are interleaved into the 2x output.
    w_conv is already in regular-conv (OC, IC, 4, 4) flipped-kernel form."""
    C, N, H, W = x.shape
    OC = w_conv.shape[0]
    parts = []
    for pa in (0, 1):
        for pb in (0, 1):
            w_sub = w_conv[:, :, pa::2, pb::2]                # (OC, IC, 2, 2)
            pad = ((1 - pa, pa), (1 - pb, pb))
            parts.append(conv2d(x, w_sub, b, stride=1, padding=pad, relu=relu))
    stacked = jnp.stack(parts, axis=0).reshape(2, 2, OC, N, H, W)
    # out[oc, n, 2h + a, 2w + b] = parts[a][b][oc, n, h, w]
    return stacked.transpose(2, 3, 4, 0, 5, 1).reshape(OC, N, 2 * H, 2 * W)


def maxpool2d(x, k=3, stride=2, padding=1):
    # TODO(synk): stem pool kept as a small XLA elementwise-max loop (single op
    # in the net); a dedicated NHWC Pallas kernel would help at large inputs.
    C, N, H, W = x.shape
    xp = jnp.pad(x, ((0, 0), (0, 0), (padding, padding), (padding, padding)),
                 constant_values=-jnp.inf)
    OH = (H + 2 * padding - k) // stride + 1
    OW = (W + 2 * padding - k) // stride + 1
    out = jnp.full((C, N, OH, OW), -jnp.inf, x.dtype)
    for i in range(k):
        for j in range(k):
            out = jnp.maximum(
                out, xp[:, :, i:i + stride * OH:stride, j:j + stride * OW:stride])
    return out


# ----------------------------------------------------------------------------
# Deterministic parameter init (BatchNorm folded into conv weight/bias)
# ----------------------------------------------------------------------------
def _fold_bn(w, gamma, beta, mean, var):
    scale = gamma / jnp.sqrt(var + BN_EPS)
    return w * scale[:, None, None, None], beta - mean * scale


def _init_conv_bn(key, oc, ic, k):
    kw, kg, kb, km, kv = jax.random.split(key, 5)
    w = 0.05 * jax.random.normal(kw, (oc, ic, k, k), jnp.float32)
    gamma = 1.0 + 0.1 * jax.random.normal(kg, (oc,), jnp.float32)
    beta = 0.1 * jax.random.normal(kb, (oc,), jnp.float32)
    mean = 0.1 * jax.random.normal(km, (oc,), jnp.float32)
    var = 1.0 + 0.1 * jnp.abs(jax.random.normal(kv, (oc,), jnp.float32))
    wf, bf = _fold_bn(w, gamma, beta, mean, var)
    return {"w": wf, "b": bf}


def _init_deconv_bn(key, ic, oc):
    kw, kg, kb, km, kv = jax.random.split(key, 5)
    w_t = 0.05 * jax.random.normal(kw, (ic, oc, 4, 4), jnp.float32)  # PyTorch layout
    w_conv = jnp.flip(w_t, axis=(2, 3)).transpose(1, 0, 2, 3)        # (OC, IC, 4, 4)
    gamma = 1.0 + 0.1 * jax.random.normal(kg, (oc,), jnp.float32)
    beta = 0.1 * jax.random.normal(kb, (oc,), jnp.float32)
    mean = 0.1 * jax.random.normal(km, (oc,), jnp.float32)
    var = 1.0 + 0.1 * jnp.abs(jax.random.normal(kv, (oc,), jnp.float32))
    wf, bf = _fold_bn(w_conv, gamma, beta, mean, var)
    return {"w": wf, "b": bf}


def init_moc_backbone(key):
    stem_c = 16
    stage_c = [16, 32, 64, 64]       # scaled-down ResNet stage widths
    deconv_c = [64, 64, 64]          # MOC/CenterNet deconv head -> 64-ch out
    keys = jax.random.split(key, 32)
    ki = iter(range(32))

    params = {"stem": _init_conv_bn(keys[next(ki)], stem_c, 3, 7),
              "blocks": [], "deconv": []}

    in_c = stem_c
    for oc, s in zip(stage_c, STAGE_STRIDES):
        blk = {
            "conv1": _init_conv_bn(keys[next(ki)], oc, in_c, 3),
            "conv2": _init_conv_bn(keys[next(ki)], oc, oc, 3),
        }
        if s != 1 or in_c != oc:
            blk["down"] = _init_conv_bn(keys[next(ki)], oc, in_c, 1)
        params["blocks"].append(blk)
        in_c = oc

    for oc in deconv_c:
        params["deconv"].append(_init_deconv_bn(keys[next(ki)], in_c, oc))
        in_c = oc
    return params


# ----------------------------------------------------------------------------
# Forward pass (MOC_Backbone.forward)
# ----------------------------------------------------------------------------
def basic_block(x, p, stride):
    out = conv2d(x, p["conv1"]["w"], p["conv1"]["b"],
                 stride=stride, padding=1, relu=True)
    if "down" in p:
        shortcut = conv2d(x, p["down"]["w"], p["down"]["b"],
                          stride=stride, padding=0, relu=False)
    else:
        shortcut = x
    # conv2 + BN + residual add + ReLU fused into one MXU epilogue.
    return conv2d(out, p["conv2"]["w"], p["conv2"]["b"],
                  stride=1, padding=1, relu=True, add=shortcut)


def moc_backbone_forward(params, x):
    # NCHW -> CNHW once; every conv then produces (OC, N, OH, OW) directly.
    x = jnp.transpose(x, (1, 0, 2, 3))
    # stem: conv7x7 s2 -> BN -> ReLU -> maxpool3x3 s2
    x = conv2d(x, params["stem"]["w"], params["stem"]["b"],
               stride=2, padding=3, relu=True)
    x = maxpool2d(x, k=3, stride=2, padding=1)
    # residual stages (static strides -> no tracer leaks into slicing)
    for blk, s in zip(params["blocks"], STAGE_STRIDES):
        x = basic_block(x, blk, s)
    # deconv upsampling head (x2 per layer, BN+ReLU fused)
    for dc in params["deconv"]:
        x = deconv2d(x, dc["w"], dc["b"], relu=True)
    return jnp.transpose(x, (1, 0, 2, 3))  # back to NCHW: (N, 64, H/4, W/4)


# ----------------------------------------------------------------------------
if __name__ == "__main__":
    key = jax.random.PRNGKey(0)
    pkey, xkey = jax.random.split(key)

    params = init_moc_backbone(pkey)
    x = jax.random.normal(xkey, (2, 3, 32, 32), jnp.float32)  # NCHW, small

    fwd = jax.jit(moc_backbone_forward)
    out = fwd(params, x)
    out = jax.block_until_ready(out)

    assert out.shape == (2, 64, 8, 8), out.shape
    assert out.dtype == jnp.float32
    assert bool(jnp.all(jnp.isfinite(out)))
    print("KERNEL_OK")
</pallas_src>

<mosaic_0001>
module attributes {stable_mosaic.version = 11 : i64} {
  func.func @_mm_kernel(%arg0: i32, %arg1: memref<16x147xbf16, #tpu.memory_space<vmem>>, %arg2: memref<147x512xbf16, #tpu.memory_space<vmem>>, %arg3: memref<16x1xf32, #tpu.memory_space<vmem>>, %arg4: memref<16x512xf32, #tpu.memory_space<vmem>>) attributes {dimension_semantics = [#tpu.dimension_semantics<parallel>], iteration_bounds = array<i64: 1>, scalar_prefetch = 0 : i64, scratch_operands = 0 : i64, tpu.core_type = #tpu.core_type<tc>, window_params = [{pipeline_mode = #tpu.pipeline_mode<synchronous>, transform_indices = @transform_0, window_bounds = array<i64: 16, 147>}, {transform_indices = @transform_1, window_bounds = array<i64: 147, 512>}, {pipeline_mode = #tpu.pipeline_mode<synchronous>, transform_indices = @transform_2, window_bounds = array<i64: 16, 1>}, {transform_indices = @transform_3, window_bounds = array<i64: 16, 512>}]} {
    %c0 = arith.constant 0 : index
    %c0_0 = arith.constant 0 : index
    %0 = vector.load %arg1[%c0, %c0_0] : memref<16x147xbf16, #tpu.memory_space<vmem>>, vector<16x147xbf16>
    %c0_1 = arith.constant 0 : index
    %c0_2 = arith.constant 0 : index
    %1 = vector.load %arg2[%c0_1, %c0_2] : memref<147x512xbf16, #tpu.memory_space<vmem>>, vector<147x512xbf16>
    %cst = arith.constant dense<0.000000e+00> : vector<16x512xf32>
    %2 = tpu.matmul %0, %1, %cst {dimension_numbers = #tpu.dot_dimension_numbers<[1], [0], [0], [1], [0, 0, 1, 1], [], []>} : vector<16x147xbf16>, vector<147x512xbf16>, vector<16x512xf32> -> vector<16x512xf32>
    %c0_3 = arith.constant 0 : index
    %c0_4 = arith.constant 0 : index
    %3 = vector.load %arg3[%c0_3, %c0_4] : memref<16x1xf32, #tpu.memory_space<vmem>>, vector<16x1xf32>
    %4 = vector.broadcast %3 : vector<16x1xf32> to vector<16x512xf32>
    %5 = arith.addf %2, %4 : vector<16x512xf32>
    %cst_5 = arith.constant 0.000000e+00 : f32
    %6 = vector.broadcast %cst_5 : f32 to vector<16x512xf32>
    %7 = arith.maximumf %5, %6 : vector<16x512xf32>
    %c0_6 = arith.constant 0 : index
    %c0_7 = arith.constant 0 : index
    %8 = vector.load %arg4[%c0_6, %c0_7] : memref<16x512xf32, #tpu.memory_space<vmem>>, vector<16x512xf32>
    tpu.vector_store %arg4[%c0_6, %c0_7], %7 {strides = array<i32>} : memref<16x512xf32, #tpu.memory_space<vmem>>, vector<16x512xf32>,
    return
  }
  func.func @transform_0(%arg0: i32) -> (i32, i32) {
    %c0_i32 = arith.constant 0 : i32
    %c0_i32_0 = arith.constant 0 : i32
    %c0_i32_1 = arith.constant 0 : i32
    return %c0_i32, %c0_i32_0 : i32, i32
  }
  func.func @transform_1(%arg0: i32) -> (i32, i32) {
    %c0_i32 = arith.constant 0 : i32
    %c0_i32_0 = arith.constant 0 : i32
    return %c0_i32, %arg0 : i32, i32
  }
  func.func @transform_2(%arg0: i32) -> (i32, i32) {
    %c0_i32 = arith.constant 0 : i32
    %c0_i32_0 = arith.constant 0 : i32
    %c0_i32_1 = arith.constant 0 : i32
    return %c0_i32, %c0_i32_0 : i32, i32
  }
  func.func @transform_3(%arg0: i32) -> (i32, i32) {
    %c0_i32 = arith.constant 0 : i32
    %c0_i32_0 = arith.constant 0 : i32
    return %c0_i32, %arg0 : i32, i32
  }
}

module attributes {stable_mosaic.version = 11 : i64} {
  func.func @_mm_kernel(%arg0: i32, %arg1: memref<16x144xbf16, #tpu.memory_space<vmem>>, %arg2: memref<144x128xbf16, #tpu.memory_space<vmem>>, %arg3: memref<16x1xf32, #tpu.memory_space<vmem>>, %arg4: memref<16x128xf32, #tpu.memory_space<vmem>>) attributes {dimension_semantics = [#tpu.dimension_semantics<parallel>], iteration_bounds = array<i64: 1>, scalar_prefetch = 0 : i64, scratch_operands = 0 : i64, tpu.core_type = #tpu.core_type<tc>, window_params = [{pipeline_mode = #tpu.pipeline_mode<synchronous>, transform_indices = @transform_0, window_bounds = array<i64: 16, 144>}, {transform_indices = @transform_1, window_bounds = array<i64: 144, 128>}, {pipeline_mode = #tpu.pipeline_mode<synchronous>, transform_indices = @transform_2, window_bounds = array<i64: 16, 1>}, {transform_indices = @transform_3, window_bounds = array<i64: 16, 128>}]} {
    %c0 = arith.constant 0 : index
    %c0_0 = arith.constant 0 : index
    %0 = vector.load %arg1[%c0, %c0_0] : memref<16x144xbf16, #tpu.memory_space<vmem>>, vector<16x144xbf16>
    %c0_1 = arith.constant 0 : index
    %c0_2 = arith.constant 0 : index
    %1 = vector.load %arg2[%c0_1, %c0_2] : memref<144x128xbf16, #tpu.memory_space<vmem>>, vector<144x128xbf16>
    %cst = arith.constant dense<0.000000e+00> : vector<16x128xf32>
    %2 = tpu.matmul %0, %1, %cst {dimension_numbers = #tpu.dot_dimension_numbers<[1], [0], [0], [1], [0, 0, 1, 1], [], []>} : vector<16x144xbf16>, vector<144x128xbf16>, vector<16x128xf32> -> vector<16x128xf32>
    %c0_3 = arith.constant 0 : index
    %c0_4 = arith.constant 0 : index
    %3 = vector.load %arg3[%c0_3, %c0_4] : memref<16x1xf32, #tpu.memory_space<vmem>>, vector<16x1xf32>
    %4 = vector.broadcast %3 : vector<16x1xf32> to vector<16x128xf32>
    %5 = arith.addf %2, %4 : vector<16x128xf32>
    %cst_5 = arith.constant 0.000000e+00 : f32
    %6 = vector.broadcast %cst_5 : f32 to vector<16x128xf32>
    %7 = arith.maximumf %5, %6 : vector<16x128xf32>
    %c0_6 = arith.constant 0 : index
    %c0_7 = arith.constant 0 : index
    %8 = vector.load %arg4[%c0_6, %c0_7] : memref<16x128xf32, #tpu.memory_space<vmem>>, vector<16x128xf32>
    tpu.vector_store %arg4[%c0_6, %c0_7], %7 {strides = array<i32>} : memref<16x128xf32, #tpu.memory_space<vmem>>, vector<16x128xf32>,
    return
  }
  func.func @transform_0(%arg0: i32) -> (i32, i32) {
    %c0_i32 = arith.constant 0 : i32
    %c0_i32_0 = arith.constant 0 : i32
    %c0_i32_1 = arith.constant 0 : i32
    return %c0_i32, %c0_i32_0 : i32, i32
  }
  func.func @transform_1(%arg0: i32) -> (i32, i32) {
    %c0_i32 = arith.constant 0 : i32
    %c0_i32_0 = arith.constant 0 : i32
    return %c0_i32, %arg0 : i32, i32
  }
  func.func @transform_2(%arg0: i32) -> (i32, i32) {
    %c0_i32 = arith.constant 0 : i32
    %c0_i32_0 = arith.constant 0 : i32
    %c0_i32_1 = arith.constant 0 : i32
    return %c0_i32, %c0_i32_0 : i32, i32
  }
  func.func @transform_3(%arg0: i32) -> (i32, i32) {
    %c0_i32 = arith.constant 0 : i32
    %c0_i32_0 = arith.constant 0 : i32
    return %c0_i32, %arg0 : i32, i32
  }
}

module attributes {stable_mosaic.version = 11 : i64} {
  func.func @_mm_add_kernel(%arg0: i32, %arg1: memref<16x144xbf16, #tpu.memory_space<vmem>>, %arg2: memref<144x128xbf16, #tpu.memory_space<vmem>>, %arg3: memref<16x1xf32, #tpu.memory_space<vmem>>, %arg4: memref<16x128xf32, #tpu.memory_space<vmem>>, %arg5: memref<16x128xf32, #tpu.memory_space<vmem>>) attributes {dimension_semantics = [#tpu.dimension_semantics<parallel>], iteration_bounds = array<i64: 1>, scalar_prefetch = 0 : i64, scratch_operands = 0 : i64, tpu.core_type = #tpu.core_type<tc>, window_params = [{pipeline_mode = #tpu.pipeline_mode<synchronous>, transform_indices = @transform_0, window_bounds = array<i64: 16, 144>}, {transform_indices = @transform_1, window_bounds = array<i64: 144, 128>}, {pipeline_mode = #tpu.pipeline_mode<synchronous>, transform_indices = @transform_2, window_bounds = array<i64: 16, 1>}, {transform_indices = @transform_3, window_bounds = array<i64: 16, 128>}, {transform_indices = @transform_4, window_bounds = array<i64: 16, 128>}]} {
    %c0 = arith.constant 0 : index
    %c0_0 = arith.constant 0 : index
    %0 = vector.load %arg1[%c0, %c0_0] : memref<16x144xbf16, #tpu.memory_space<vmem>>, vector<16x144xbf16>
    %c0_1 = arith.constant 0 : index
    %c0_2 = arith.constant 0 : index
    %1 = vector.load %arg2[%c0_1, %c0_2] : memref<144x128xbf16, #tpu.memory_space<vmem>>, vector<144x128xbf16>
    %cst = arith.constant dense<0.000000e+00> : vector<16x128xf32>
    %2 = tpu.matmul %0, %1, %cst {dimension_numbers = #tpu.dot_dimension_numbers<[1], [0], [0], [1], [0, 0, 1, 1], [], []>} : vector<16x144xbf16>, vector<144x128xbf16>, vector<16x128xf32> -> vector<16x128xf32>
    %c0_3 = arith.constant 0 : index
    %c0_4 = arith.constant 0 : index
    %3 = vector.load %arg3[%c0_3, %c0_4] : memref<16x1xf32, #tpu.memory_space<vmem>>, vector<16x1xf32>
    %4 = vector.broadcast %3 : vector<16x1xf32> to vector<16x128xf32>
    %5 = arith.addf %2, %4 : vector<16x128xf32>
    %c0_5 = arith.constant 0 : index
    %c0_6 = arith.constant 0 : index
    %6 = vector.load %arg4[%c0_5, %c0_6] : memref<16x128xf32, #tpu.memory_space<vmem>>, vector<16x128xf32>
    %7 = arith.addf %5, %6 : vector<16x128xf32>
    %cst_7 = arith.constant 0.000000e+00 : f32
    %8 = vector.broadcast %cst_7 : f32 to vector<16x128xf32>
    %9 = arith.maximumf %7, %8 : vector<16x128xf32>
    %c0_8 = arith.constant 0 : index
    %c0_9 = arith.constant 0 : index
    %10 = vector.load %arg5[%c0_8, %c0_9] : memref<16x128xf32, #tpu.memory_space<vmem>>, vector<16x128xf32>
    tpu.vector_store %arg5[%c0_8, %c0_9], %9 {strides = array<i32>} : memref<16x128xf32, #tpu.memory_space<vmem>>, vector<16x128xf32>,
    return
  }
  func.func @transform_0(%arg0: i32) -> (i32, i32) {
    %c0_i32 = arith.constant 0 : i32
    %c0_i32_0 = arith.constant 0 : i32
    %c0_i32_1 = arith.constant 0 : i32
    return %c0_i32, %c0_i32_0 : i32, i32
  }
  func.func @transform_1(%arg0: i32) -> (i32, i32) {
    %c0_i32 = arith.constant 0 : i32
    %c0_i32_0 = arith.constant 0 : i32
    return %c0_i32, %arg0 : i32, i32
  }
  func.func @transform_2(%arg0: i32) -> (i32, i32) {
    %c0_i32 = arith.constant 0 : i32
    %c0_i32_0 = arith.constant 0 : i32
    %c0_i32_1 = arith.constant 0 : i32
    return %c0_i32, %c0_i32_0 : i32, i32
  }
  func.func @transform_3(%arg0: i32) -> (i32, i32) {
    %c0_i32 = arith.constant 0 : i32
    %c0_i32_0 = arith.constant 0 : i32
    return %c0_i32, %arg0 : i32, i32
  }
  func.func @transform_4(%arg0: i32) -> (i32, i32) {
    %c0_i32 = arith.constant 0 : i32
    %c0_i32_0 = arith.constant 0 : i32
    return %c0_i32, %arg0 : i32, i32
  }
}

module attributes {stable_mosaic.version = 11 : i64} {
  func.func @_mm_kernel(%arg0: i32, %arg1: memref<32x144xbf16, #tpu.memory_space<vmem>>, %arg2: memref<144x128xbf16, #tpu.memory_space<vmem>>, %arg3: memref<32x1xf32, #tpu.memory_space<vmem>>, %arg4: memref<32x128xf32, #tpu.memory_space<vmem>>) attributes {dimension_semantics = [#tpu.dimension_semantics<parallel>], iteration_bounds = array<i64: 1>, scalar_prefetch = 0 : i64, scratch_operands = 0 : i64, tpu.core_type = #tpu.core_type<tc>, window_params = [{pipeline_mode = #tpu.pipeline_mode<synchronous>, transform_indices = @transform_0, window_bounds = array<i64: 32, 144>}, {transform_indices = @transform_1, window_bounds = array<i64: 144, 128>}, {pipeline_mode = #tpu.pipeline_mode<synchronous>, transform_indices = @transform_2, window_bounds = array<i64: 32, 1>}, {transform_indices = @transform_3, window_bounds = array<i64: 32, 128>}]} {
    %c0 = arith.constant 0 : index
    %c0_0 = arith.constant 0 : index
    %0 = vector.load %arg1[%c0, %c0_0] : memref<32x144xbf16, #tpu.memory_space<vmem>>, vector<32x144xbf16>
    %c0_1 = arith.constant 0 : index
    %c0_2 = arith.constant 0 : index
    %1 = vector.load %arg2[%c0_1, %c0_2] : memref<144x128xbf16, #tpu.memory_space<vmem>>, vector<144x128xbf16>
    %cst = arith.constant dense<0.000000e+00> : vector<32x128xf32>
    %2 = tpu.matmul %0, %1, %cst {dimension_numbers = #tpu.dot_dimension_numbers<[1], [0], [0], [1], [0, 0, 1, 1], [], []>} : vector<32x144xbf16>, vector<144x128xbf16>, vector<32x128xf32> -> vector<32x128xf32>
    %c0_3 = arith.constant 0 : index
    %c0_4 = arith.constant 0 : index
    %3 = vector.load %arg3[%c0_3, %c0_4] : memref<32x1xf32, #tpu.memory_space<vmem>>, vector<32x1xf32>
    %4 = vector.broadcast %3 : vector<32x1xf32> to vector<32x128xf32>
    %5 = arith.addf %2, %4 : vector<32x128xf32>
    %cst_5 = arith.constant 0.000000e+00 : f32
    %6 = vector.broadcast %cst_5 : f32 to vector<32x128xf32>
    %7 = arith.maximumf %5, %6 : vector<32x128xf32>
    %c0_6 = arith.constant 0 : index
    %c0_7 = arith.constant 0 : index
    %8 = vector.load %arg4[%c0_6, %c0_7] : memref<32x128xf32, #tpu.memory_space<vmem>>, vector<32x128xf32>
    tpu.vector_store %arg4[%c0_6, %c0_7], %7 {strides = array<i32>} : memref<32x128xf32, #tpu.memory_space<vmem>>, vector<32x128xf32>,
    return
  }
  func.func @transform_0(%arg0: i32) -> (i32, i32) {
    %c0_i32 = arith.constant 0 : i32
    %c0_i32_0 = arith.constant 0 : i32
    %c0_i32_1 = arith.constant 0 : i32
    return %c0_i32, %c0_i32_0 : i32, i32
  }
  func.func @transform_1(%arg0: i32) -> (i32, i32) {
    %c0_i32 = arith.constant 0 : i32
    %c0_i32_0 = arith.constant 0 : i32
    return %c0_i32, %arg0 : i32, i32
  }
  func.func @transform_2(%arg0: i32) -> (i32, i32) {
    %c0_i32 = arith.constant 0 : i32
    %c0_i32_0 = arith.constant 0 : i32
    %c0_i32_1 = arith.constant 0 : i32
    return %c0_i32, %c0_i32_0 : i32, i32
  }
  func.func @transform_3(%arg0: i32) -> (i32, i32) {
    %c0_i32 = arith.constant 0 : i32
    %c0_i32_0 = arith.constant 0 : i32
    return %c0_i32, %arg0 : i32, i32
  }
}

module attributes {stable_mosaic.version = 11 : i64} {
  func.func @_mm_kernel(%arg0: i32, %arg1: memref<32x16xbf16, #tpu.memory_space<vmem>>, %arg2: memref<16x128xbf16, #tpu.memory_space<vmem>>, %arg3: memref<32x1xf32, #tpu.memory_space<vmem>>, %arg4: memref<32x128xf32, #tpu.memory_space<vmem>>) attributes {dimension_semantics = [#tpu.dimension_semantics<parallel>], iteration_bounds = array<i64: 1>, scalar_prefetch = 0 : i64, scratch_operands = 0 : i64, tpu.core_type = #tpu.core_type<tc>, window_params = [{pipeline_mode = #tpu.pipeline_mode<synchronous>, transform_indices = @transform_0, window_bounds = array<i64: 32, 16>}, {transform_indices = @transform_1, window_bounds = array<i64: 16, 128>}, {pipeline_mode = #tpu.pipeline_mode<synchronous>, transform_indices = @transform_2, window_bounds = array<i64: 32, 1>}, {transform_indices = @transform_3, window_bounds = array<i64: 32, 128>}]} {
    %c0 = arith.constant 0 : index
    %c0_0 = arith.constant 0 : index
    %0 = vector.load %arg1[%c0, %c0_0] : memref<32x16xbf16, #tpu.memory_space<vmem>>, vector<32x16xbf16>
    %c0_1 = arith.constant 0 : index
    %c0_2 = arith.constant 0 : index
    %1 = vector.load %arg2[%c0_1, %c0_2] : memref<16x128xbf16, #tpu.memory_space<vmem>>, vector<16x128xbf16>
    %cst = arith.constant dense<0.000000e+00> : vector<32x128xf32>
    %2 = tpu.matmul %0, %1, %cst {dimension_numbers = #tpu.dot_dimension_numbers<[1], [0], [0], [1], [0, 0, 1, 1], [], []>} : vector<32x16xbf16>, vector<16x128xbf16>, vector<32x128xf32> -> vector<32x128xf32>
    %c0_3 = arith.constant 0 : index
    %c0_4 = arith.constant 0 : index
    %3 = vector.load %arg3[%c0_3, %c0_4] : memref<32x1xf32, #tpu.memory_space<vmem>>, vector<32x1xf32>
    %4 = vector.broadcast %3 : vector<32x1xf32> to vector<32x128xf32>
    %5 = arith.addf %2, %4 : vector<32x128xf32>
    %c0_5 = arith.constant 0 : index
    %c0_6 = arith.constant 0 : index
    %6 = vector.load %arg4[%c0_5, %c0_6] : memref<32x128xf32, #tpu.memory_space<vmem>>, vector<32x128xf32>
    tpu.vector_store %arg4[%c0_5, %c0_6], %5 {strides = array<i32>} : memref<32x128xf32, #tpu.memory_space<vmem>>, vector<32x128xf32>,
    return
  }
  func.func @transform_0(%arg0: i32) -> (i32, i32) {
    %c0_i32 = arith.constant 0 : i32
    %c0_i32_0 = arith.constant 0 : i32
    %c0_i32_1 = arith.constant 0 : i32
    return %c0_i32, %c0_i32_0 : i32, i32
  }
  func.func @transform_1(%arg0: i32) -> (i32, i32) {
    %c0_i32 = arith.constant 0 : i32
    %c0_i32_0 = arith.constant 0 : i32
    return %c0_i32, %arg0 : i32, i32
  }
  func.func @transform_2(%arg0: i32) -> (i32, i32) {
    %c0_i32 = arith.constant 0 : i32
    %c0_i32_0 = arith.constant 0 : i32
    %c0_i32_1 = arith.constant 0 : i32
    return %c0_i32, %c0_i32_0 : i32, i32
  }
  func.func @transform_3(%arg0: i32) -> (i32, i32) {
    %c0_i32 = arith.constant 0 : i32
    %c0_i32_0 = arith.constant 0 : i32
    return %c0_i32, %arg0 : i32, i32
  }
}

module attributes {stable_mosaic.version = 11 : i64} {
  func.func @_mm_add_kernel(%arg0: i32, %arg1: memref<32x288xbf16, #tpu.memory_space<vmem>>, %arg2: memref<288x128xbf16, #tpu.memory_space<vmem>>, %arg3: memref<32x1xf32, #tpu.memory_space<vmem>>, %arg4: memref<32x128xf32, #tpu.memory_space<vmem>>, %arg5: memref<32x128xf32, #tpu.memory_space<vmem>>) attributes {dimension_semantics = [#tpu.dimension_semantics<parallel>], iteration_bounds = array<i64: 1>, scalar_prefetch = 0 : i64, scratch_operands = 0 : i64, tpu.core_type = #tpu.core_type<tc>, window_params = [{pipeline_mode = #tpu.pipeline_mode<synchronous>, transform_indices = @transform_0, window_bounds = array<i64: 32, 288>}, {transform_indices = @transform_1, window_bounds = array<i64: 288, 128>}, {pipeline_mode = #tpu.pipeline_mode<synchronous>, transform_indices = @transform_2, window_bounds = array<i64: 32, 1>}, {transform_indices = @transform_3, window_bounds = array<i64: 32, 128>}, {transform_indices = @transform_4, window_bounds = array<i64: 32, 128>}]} {
    %c0 = arith.constant 0 : index
    %c0_0 = arith.constant 0 : index
    %0 = vector.load %arg1[%c0, %c0_0] : memref<32x288xbf16, #tpu.memory_space<vmem>>, vector<32x288xbf16>
    %c0_1 = arith.constant 0 : index
    %c0_2 = arith.constant 0 : index
    %1 = vector.load %arg2[%c0_1, %c0_2] : memref<288x128xbf16, #tpu.memory_space<vmem>>, vector<288x128xbf16>
    %cst = arith.constant dense<0.000000e+00> : vector<32x128xf32>
    %2 = tpu.matmul %0, %1, %cst {dimension_numbers = #tpu.dot_dimension_numbers<[1], [0], [0], [1], [0, 0, 1, 1], [], []>} : vector<32x288xbf16>, vector<288x128xbf16>, vector<32x128xf32> -> vector<32x128xf32>
    %c0_3 = arith.constant 0 : index
    %c0_4 = arith.constant 0 : index
    %3 = vector.load %arg3[%c0_3, %c0_4] : memref<32x1xf32, #tpu.memory_space<vmem>>, vector<32x1xf32>
    %4 = vector.broadcast %3 : vector<32x1xf32> to vector<32x128xf32>
    %5 = arith.addf %2, %4 : vector<32x128xf32>
    %c0_5 = arith.constant 0 : index
    %c0_6 = arith.constant 0 : index
    %6 = vector.load %arg4[%c0_5, %c0_6] : memref<32x128xf32, #tpu.memory_space<vmem>>, vector<32x128xf32>
    %7 = arith.addf %5, %6 : vector<32x128xf32>
    %cst_7 = arith.constant 0.000000e+00 : f32
    %8 = vector.broadcast %cst_7 : f32 to vector<32x128xf32>
    %9 = arith.maximumf %7, %8 : vector<32x128xf32>
    %c0_8 = arith.constant 0 : index
    %c0_9 = arith.constant 0 : index
    %10 = vector.load %arg5[%c0_8, %c0_9] : memref<32x128xf32, #tpu.memory_space<vmem>>, vector<32x128xf32>
    tpu.vector_store %arg5[%c0_8, %c0_9], %9 {strides = array<i32>} : memref<32x128xf32, #tpu.memory_space<vmem>>, vector<32x128xf32>,
    return
  }
  func.func @transform_0(%arg0: i32) -> (i32, i32) {
    %c0_i32 = arith.constant 0 : i32
    %c0_i32_0 = arith.constant 0 : i32
    %c0_i32_1 = arith.constant 0 : i32
    return %c0_i32, %c0_i32_0 : i32, i32
  }
  func.func @transform_1(%arg0: i32) -> (i32, i32) {
    %c0_i32 = arith.constant 0 : i32
    %c0_i32_0 = arith.constant 0 : i32
    return %c0_i32, %arg0 : i32, i32
  }
  func.func @transform_2(%arg0: i32) -> (i32, i32) {
    %c0_i32 = arith.constant 0 : i32
    %c0_i32_0 = arith.constant 0 : i32
    %c0_i32_1 = arith.constant 0 : i32
    return %c0_i32, %c0_i32_0 : i32, i32
  }
  func.func @transform_3(%arg0: i32) -> (i32, i32) {
    %c0_i32 = arith.constant 0 : i32
    %c0_i32_0 = arith.constant 0 : i32
    return %c0_i32, %arg0 : i32, i32
  }
  func.func @transform_4(%arg0: i32) -> (i32, i32) {
    %c0_i32 = arith.constant 0 : i32
    %c0_i32_0 = arith.constant 0 : i32
    return %c0_i32, %arg0 : i32, i32
  }
}

module attributes {stable_mosaic.version = 11 : i64} {
  func.func @_mm_kernel(%arg0: i32, %arg1: memref<64x288xbf16, #tpu.memory_space<vmem>>, %arg2: memref<288x128xbf16, #tpu.memory_space<vmem>>, %arg3: memref<64x1xf32, #tpu.memory_space<vmem>>, %arg4: memref<64x128xf32, #tpu.memory_space<vmem>>) attributes {dimension_semantics = [#tpu.dimension_semantics<parallel>], iteration_bounds = array<i64: 1>, scalar_prefetch = 0 : i64, scratch_operands = 0 : i64, tpu.core_type = #tpu.core_type<tc>, window_params = [{pipeline_mode = #tpu.pipeline_mode<synchronous>, transform_indices = @transform_0, window_bounds = array<i64: 64, 288>}, {transform_indices = @transform_1, window_bounds = array<i64: 288, 128>}, {pipeline_mode = #tpu.pipeline_mode<synchronous>, transform_indices = @transform_2, window_bounds = array<i64: 64, 1>}, {transform_indices = @transform_3, window_bounds = array<i64: 64, 128>}]} {
    %c0 = arith.constant 0 : index
    %c0_0 = arith.constant 0 : index
    %0 = vector.load %arg1[%c0, %c0_0] : memref<64x288xbf16, #tpu.memory_space<vmem>>, vector<64x288xbf16>
    %c0_1 = arith.constant 0 : index
    %c0_2 = arith.constant 0 : index
    %1 = vector.load %arg2[%c0_1, %c0_2] : memref<288x128xbf16, #tpu.memory_space<vmem>>, vector<288x128xbf16>
    %cst = arith.constant dense<0.000000e+00> : vector<64x128xf32>
    %2 = tpu.matmul %0, %1, %cst {dimension_numbers = #tpu.dot_dimension_numbers<[1], [0], [0], [1], [0, 0, 1, 1], [], []>} : vector<64x288xbf16>, vector<288x128xbf16>, vector<64x128xf32> -> vector<64x128xf32>
    %c0_3 = arith.constant 0 : index
    %c0_4 = arith.constant 0 : index
    %3 = vector.load %arg3[%c0_3, %c0_4] : memref<64x1xf32, #tpu.memory_space<vmem>>, vector<64x1xf32>
    %4 = vector.broadcast %3 : vector<64x1xf32> to vector<64x128xf32>
    %5 = arith.addf %2, %4 : vector<64x128xf32>
    %cst_5 = arith.constant 0.000000e+00 : f32
    %6 = vector.broadcast %cst_5 : f32 to vector<64x128xf32>
    %7 = arith.maximumf %5, %6 : vector<64x128xf32>
    %c0_6 = arith.constant 0 : index
    %c0_7 = arith.constant 0 : index
    %8 = vector.load %arg4[%c0_6, %c0_7] : memref<64x128xf32, #tpu.memory_space<vmem>>, vector<64x128xf32>
    tpu.vector_store %arg4[%c0_6, %c0_7], %7 {strides = array<i32>} : memref<64x128xf32, #tpu.memory_space<vmem>>, vector<64x128xf32>,
    return
  }
  func.func @transform_0(%arg0: i32) -> (i32, i32) {
    %c0_i32 = arith.constant 0 : i32
    %c0_i32_0 = arith.constant 0 : i32
    %c0_i32_1 = arith.constant 0 : i32
    return %c0_i32, %c0_i32_0 : i32, i32
  }
  func.func @transform_1(%arg0: i32) -> (i32, i32) {
    %c0_i32 = arith.constant 0 : i32
    %c0_i32_0 = arith.constant 0 : i32
    return %c0_i32, %arg0 : i32, i32
  }
  func.func @transform_2(%arg0: i32) -> (i32, i32) {
    %c0_i32 = arith.constant 0 : i32
    %c0_i32_0 = arith.constant 0 : i32
    %c0_i32_1 = arith.constant 0 : i32
    return %c0_i32, %c0_i32_0 : i32, i32
  }
  func.func @transform_3(%arg0: i32) -> (i32, i32) {
    %c0_i32 = arith.constant 0 : i32
    %c0_i32_0 = arith.constant 0 : i32
    return %c0_i32, %arg0 : i32, i32
  }
}

module attributes {stable_mosaic.version = 11 : i64} {
  func.func @_mm_kernel(%arg0: i32, %arg1: memref<64x32xbf16, #tpu.memory_space<vmem>>, %arg2: memref<32x128xbf16, #tpu.memory_space<vmem>>, %arg3: memref<64x1xf32, #tpu.memory_space<vmem>>, %arg4: memref<64x128xf32, #tpu.memory_space<vmem>>) attributes {dimension_semantics = [#tpu.dimension_semantics<parallel>], iteration_bounds = array<i64: 1>, scalar_prefetch = 0 : i64, scratch_operands = 0 : i64, tpu.core_type = #tpu.core_type<tc>, window_params = [{pipeline_mode = #tpu.pipeline_mode<synchronous>, transform_indices = @transform_0, window_bounds = array<i64: 64, 32>}, {transform_indices = @transform_1, window_bounds = array<i64: 32, 128>}, {pipeline_mode = #tpu.pipeline_mode<synchronous>, transform_indices = @transform_2, window_bounds = array<i64: 64, 1>}, {transform_indices = @transform_3, window_bounds = array<i64: 64, 128>}]} {
    %c0 = arith.constant 0 : index
    %c0_0 = arith.constant 0 : index
    %0 = vector.load %arg1[%c0, %c0_0] : memref<64x32xbf16, #tpu.memory_space<vmem>>, vector<64x32xbf16>
    %c0_1 = arith.constant 0 : index
    %c0_2 = arith.constant 0 : index
    %1 = vector.load %arg2[%c0_1, %c0_2] : memref<32x128xbf16, #tpu.memory_space<vmem>>, vector<32x128xbf16>
    %cst = arith.constant dense<0.000000e+00> : vector<64x128xf32>
    %2 = tpu.matmul %0, %1, %cst {dimension_numbers = #tpu.dot_dimension_numbers<[1], [0], [0], [1], [0, 0, 1, 1], [], []>} : vector<64x32xbf16>, vector<32x128xbf16>, vector<64x128xf32> -> vector<64x128xf32>
    %c0_3 = arith.constant 0 : index
    %c0_4 = arith.constant 0 : index
    %3 = vector.load %arg3[%c0_3, %c0_4] : memref<64x1xf32, #tpu.memory_space<vmem>>, vector<64x1xf32>
    %4 = vector.broadcast %3 : vector<64x1xf32> to vector<64x128xf32>
    %5 = arith.addf %2, %4 : vector<64x128xf32>
    %c0_5 = arith.constant 0 : index
    %c0_6 = arith.constant 0 : index
    %6 = vector.load %arg4[%c0_5, %c0_6] : memref<64x128xf32, #tpu.memory_space<vmem>>, vector<64x128xf32>
    tpu.vector_store %arg4[%c0_5, %c0_6], %5 {strides = array<i32>} : memref<64x128xf32, #tpu.memory_space<vmem>>, vector<64x128xf32>,
    return
  }
  func.func @transform_0(%arg0: i32) -> (i32, i32) {
    %c0_i32 = arith.constant 0 : i32
    %c0_i32_0 = arith.constant 0 : i32
    %c0_i32_1 = arith.constant 0 : i32
    return %c0_i32, %c0_i32_0 : i32, i32
  }
  func.func @transform_1(%arg0: i32) -> (i32, i32) {
    %c0_i32 = arith.constant 0 : i32
    %c0_i32_0 = arith.constant 0 : i32
    return %c0_i32, %arg0 : i32, i32
  }
  func.func @transform_2(%arg0: i32) -> (i32, i32) {
    %c0_i32 = arith.constant 0 : i32
    %c0_i32_0 = arith.constant 0 : i32
    %c0_i32_1 = arith.constant 0 : i32
    return %c0_i32, %c0_i32_0 : i32, i32
  }
  func.func @transform_3(%arg0: i32) -> (i32, i32) {
    %c0_i32 = arith.constant 0 : i32
    %c0_i32_0 = arith.constant 0 : i32
    return %c0_i32, %arg0 : i32, i32
  }
}

module attributes {stable_mosaic.version = 11 : i64} {
  func.func @_mm_add_kernel(%arg0: i32, %arg1: memref<64x576xbf16, #tpu.memory_space<vmem>>, %arg2: memref<576x128xbf16, #tpu.memory_space<vmem>>, %arg3: memref<64x1xf32, #tpu.memory_space<vmem>>, %arg4: memref<64x128xf32, #tpu.memory_space<vmem>>, %arg5: memref<64x128xf32, #tpu.memory_space<vmem>>) attributes {dimension_semantics = [#tpu.dimension_semantics<parallel>], iteration_bounds = array<i64: 1>, scalar_prefetch = 0 : i64, scratch_operands = 0 : i64, tpu.core_type = #tpu.core_type<tc>, window_params = [{pipeline_mode = #tpu.pipeline_mode<synchronous>, transform_indices = @transform_0, window_bounds = array<i64: 64, 576>}, {transform_indices = @transform_1, window_bounds = array<i64: 576, 128>}, {pipeline_mode = #tpu.pipeline_mode<synchronous>, transform_indices = @transform_2, window_bounds = array<i64: 64, 1>}, {transform_indices = @transform_3, window_bounds = array<i64: 64, 128>}, {transform_indices = @transform_4, window_bounds = array<i64: 64, 128>}]} {
    %c0 = arith.constant 0 : index
    %c0_0 = arith.constant 0 : index
    %0 = vector.load %arg1[%c0, %c0_0] : memref<64x576xbf16, #tpu.memory_space<vmem>>, vector<64x576xbf16>
    %c0_1 = arith.constant 0 : index
    %c0_2 = arith.constant 0 : index
    %1 = vector.load %arg2[%c0_1, %c0_2] : memref<576x128xbf16, #tpu.memory_space<vmem>>, vector<576x128xbf16>
    %cst = arith.constant dense<0.000000e+00> : vector<64x128xf32>
    %2 = tpu.matmul %0, %1, %cst {dimension_numbers = #tpu.dot_dimension_numbers<[1], [0], [0], [1], [0, 0, 1, 1], [], []>} : vector<64x576xbf16>, vector<576x128xbf16>, vector<64x128xf32> -> vector<64x128xf32>
    %c0_3 = arith.constant 0 : index
    %c0_4 = arith.constant 0 : index
    %3 = vector.load %arg3[%c0_3, %c0_4] : memref<64x1xf32, #tpu.memory_space<vmem>>, vector<64x1xf32>
    %4 = vector.broadcast %3 : vector<64x1xf32> to vector<64x128xf32>
    %5 = arith.addf %2, %4 : vector<64x128xf32>
    %c0_5 = arith.constant 0 : index
    %c0_6 = arith.constant 0 : index
    %6 = vector.load %arg4[%c0_5, %c0_6] : memref<64x128xf32, #tpu.memory_space<vmem>>, vector<64x128xf32>
    %7 = arith.addf %5, %6 : vector<64x128xf32>
    %cst_7 = arith.constant 0.000000e+00 : f32
    %8 = vector.broadcast %cst_7 : f32 to vector<64x128xf32>
    %9 = arith.maximumf %7, %8 : vector<64x128xf32>
    %c0_8 = arith.constant 0 : index
    %c0_9 = arith.constant 0 : index
    %10 = vector.load %arg5[%c0_8, %c0_9] : memref<64x128xf32, #tpu.memory_space<vmem>>, vector<64x128xf32>
    tpu.vector_store %arg5[%c0_8, %c0_9], %9 {strides = array<i32>} : memref<64x128xf32, #tpu.memory_space<vmem>>, vector<64x128xf32>,
    return
  }
  func.func @transform_0(%arg0: i32) -> (i32, i32) {
    %c0_i32 = arith.constant 0 : i32
    %c0_i32_0 = arith.constant 0 : i32
    %c0_i32_1 = arith.constant 0 : i32
    return %c0_i32, %c0_i32_0 : i32, i32
  }
  func.func @transform_1(%arg0: i32) -> (i32, i32) {
    %c0_i32 = arith.constant 0 : i32
    %c0_i32_0 = arith.constant 0 : i32
    return %c0_i32, %arg0 : i32, i32
  }
  func.func @transform_2(%arg0: i32) -> (i32, i32) {
    %c0_i32 = arith.constant 0 : i32
    %c0_i32_0 = arith.constant 0 : i32
    %c0_i32_1 = arith.constant 0 : i32
    return %c0_i32, %c0_i32_0 : i32, i32
  }
  func.func @transform_3(%arg0: i32) -> (i32, i32) {
    %c0_i32 = arith.constant 0 : i32
    %c0_i32_0 = arith.constant 0 : i32
    return %c0_i32, %arg0 : i32, i32
  }
  func.func @transform_4(%arg0: i32) -> (i32, i32) {
    %c0_i32 = arith.constant 0 : i32
    %c0_i32_0 = arith.constant 0 : i32
    return %c0_i32, %arg0 : i32, i32
  }
}

module attributes {stable_mosaic.version = 11 : i64} {
  func.func @_mm_kernel(%arg0: i32, %arg1: memref<64x576xbf16, #tpu.memory_space<vmem>>, %arg2: memref<576x128xbf16, #tpu.memory_space<vmem>>, %arg3: memref<64x1xf32, #tpu.memory_space<vmem>>, %arg4: memref<64x128xf32, #tpu.memory_space<vmem>>) attributes {dimension_semantics = [#tpu.dimension_semantics<parallel>], iteration_bounds = array<i64: 1>, scalar_prefetch = 0 : i64, scratch_operands = 0 : i64, tpu.core_type = #tpu.core_type<tc>, window_params = [{pipeline_mode = #tpu.pipeline_mode<synchronous>, transform_indices = @transform_0, window_bounds = array<i64: 64, 576>}, {transform_indices = @transform_1, window_bounds = array<i64: 576, 128>}, {pipeline_mode = #tpu.pipeline_mode<synchronous>, transform_indices = @transform_2, window_bounds = array<i64: 64, 1>}, {transform_indices = @transform_3, window_bounds = array<i64: 64, 128>}]} {
    %c0 = arith.constant 0 : index
    %c0_0 = arith.constant 0 : index
    %0 = vector.load %arg1[%c0, %c0_0] : memref<64x576xbf16, #tpu.memory_space<vmem>>, vector<64x576xbf16>
    %c0_1 = arith.constant 0 : index
    %c0_2 = arith.constant 0 : index
    %1 = vector.load %arg2[%c0_1, %c0_2] : memref<576x128xbf16, #tpu.memory_space<vmem>>, vector<576x128xbf16>
    %cst = arith.constant dense<0.000000e+00> : vector<64x128xf32>
    %2 = tpu.matmul %0, %1, %cst {dimension_numbers = #tpu.dot_dimension_numbers<[1], [0], [0], [1], [0, 0, 1, 1], [], []>} : vector<64x576xbf16>, vector<576x128xbf16>, vector<64x128xf32> -> vector<64x128xf32>
    %c0_3 = arith.constant 0 : index
    %c0_4 = arith.constant 0 : index
    %3 = vector.load %arg3[%c0_3, %c0_4] : memref<64x1xf32, #tpu.memory_space<vmem>>, vector<64x1xf32>
    %4 = vector.broadcast %3 : vector<64x1xf32> to vector<64x128xf32>
    %5 = arith.addf %2, %4 : vector<64x128xf32>
    %cst_5 = arith.constant 0.000000e+00 : f32
    %6 = vector.broadcast %cst_5 : f32 to vector<64x128xf32>
    %7 = arith.maximumf %5, %6 : vector<64x128xf32>
    %c0_6 = arith.constant 0 : index
    %c0_7 = arith.constant 0 : index
    %8 = vector.load %arg4[%c0_6, %c0_7] : memref<64x128xf32, #tpu.memory_space<vmem>>, vector<64x128xf32>
    tpu.vector_store %arg4[%c0_6, %c0_7], %7 {strides = array<i32>} : memref<64x128xf32, #tpu.memory_space<vmem>>, vector<64x128xf32>,
    return
  }
  func.func @transform_0(%arg0: i32) -> (i32, i32) {
    %c0_i32 = arith.constant 0 : i32
    %c0_i32_0 = arith.constant 0 : i32
    %c0_i32_1 = arith.constant 0 : i32
    return %c0_i32, %c0_i32_0 : i32, i32
  }
  func.func @transform_1(%arg0: i32) -> (i32, i32) {
    %c0_i32 = arith.constant 0 : i32
    %c0_i32_0 = arith.constant 0 : i32
    return %c0_i32, %arg0 : i32, i32
  }
  func.func @transform_2(%arg0: i32) -> (i32, i32) {
    %c0_i32 = arith.constant 0 : i32
    %c0_i32_0 = arith.constant 0 : i32
    %c0_i32_1 = arith.constant 0 : i32
    return %c0_i32, %c0_i32_0 : i32, i32
  }
  func.func @transform_3(%arg0: i32) -> (i32, i32) {
    %c0_i32 = arith.constant 0 : i32
    %c0_i32_0 = arith.constant 0 : i32
    return %c0_i32, %arg0 : i32, i32
  }
}

module attributes {stable_mosaic.version = 11 : i64} {
  func.func @_mm_kernel(%arg0: i32, %arg1: memref<64x64xbf16, #tpu.memory_space<vmem>>, %arg2: memref<64x128xbf16, #tpu.memory_space<vmem>>, %arg3: memref<64x1xf32, #tpu.memory_space<vmem>>, %arg4: memref<64x128xf32, #tpu.memory_space<vmem>>) attributes {dimension_semantics = [#tpu.dimension_semantics<parallel>], iteration_bounds = array<i64: 1>, scalar_prefetch = 0 : i64, scratch_operands = 0 : i64, tpu.core_type = #tpu.core_type<tc>, window_params = [{pipeline_mode = #tpu.pipeline_mode<synchronous>, transform_indices = @transform_0, window_bounds = array<i64: 64, 64>}, {transform_indices = @transform_1, window_bounds = array<i64: 64, 128>}, {pipeline_mode = #tpu.pipeline_mode<synchronous>, transform_indices = @transform_2, window_bounds = array<i64: 64, 1>}, {transform_indices = @transform_3, window_bounds = array<i64: 64, 128>}]} {
    %c0 = arith.constant 0 : index
    %c0_0 = arith.constant 0 : index
    %0 = vector.load %arg1[%c0, %c0_0] : memref<64x64xbf16, #tpu.memory_space<vmem>>, vector<64x64xbf16>
    %c0_1 = arith.constant 0 : index
    %c0_2 = arith.constant 0 : index
    %1 = vector.load %arg2[%c0_1, %c0_2] : memref<64x128xbf16, #tpu.memory_space<vmem>>, vector<64x128xbf16>
    %cst = arith.constant dense<0.000000e+00> : vector<64x128xf32>
    %2 = tpu.matmul %0, %1, %cst {dimension_numbers = #tpu.dot_dimension_numbers<[1], [0], [0], [1], [0, 0, 1, 1], [], []>} : vector<64x64xbf16>, vector<64x128xbf16>, vector<64x128xf32> -> vector<64x128xf32>
    %c0_3 = arith.constant 0 : index
    %c0_4 = arith.constant 0 : index
    %3 = vector.load %arg3[%c0_3, %c0_4] : memref<64x1xf32, #tpu.memory_space<vmem>>, vector<64x1xf32>
    %4 = vector.broadcast %3 : vector<64x1xf32> to vector<64x128xf32>
    %5 = arith.addf %2, %4 : vector<64x128xf32>
    %c0_5 = arith.constant 0 : index
    %c0_6 = arith.constant 0 : index
    %6 = vector.load %arg4[%c0_5, %c0_6] : memref<64x128xf32, #tpu.memory_space<vmem>>, vector<64x128xf32>
    tpu.vector_store %arg4[%c0_5, %c0_6], %5 {strides = array<i32>} : memref<64x128xf32, #tpu.memory_space<vmem>>, vector<64x128xf32>,
    return
  }
  func.func @transform_0(%arg0: i32) -> (i32, i32) {
    %c0_i32 = arith.constant 0 : i32
    %c0_i32_0 = arith.constant 0 : i32
    %c0_i32_1 = arith.constant 0 : i32
    return %c0_i32, %c0_i32_0 : i32, i32
  }
  func.func @transform_1(%arg0: i32) -> (i32, i32) {
    %c0_i32 = arith.constant 0 : i32
    %c0_i32_0 = arith.constant 0 : i32
    return %c0_i32, %arg0 : i32, i32
  }
  func.func @transform_2(%arg0: i32) -> (i32, i32) {
    %c0_i32 = arith.constant 0 : i32
    %c0_i32_0 = arith.constant 0 : i32
    %c0_i32_1 = arith.constant 0 : i32
    return %c0_i32, %c0_i32_0 : i32, i32
  }
  func.func @transform_3(%arg0: i32) -> (i32, i32) {
    %c0_i32 = arith.constant 0 : i32
    %c0_i32_0 = arith.constant 0 : i32
    return %c0_i32, %arg0 : i32, i32
  }
}

module attributes {stable_mosaic.version = 11 : i64} {
  func.func @_mm_kernel(%arg0: i32, %arg1: memref<64x256xbf16, #tpu.memory_space<vmem>>, %arg2: memref<256x128xbf16, #tpu.memory_space<vmem>>, %arg3: memref<64x1xf32, #tpu.memory_space<vmem>>, %arg4: memref<64x128xf32, #tpu.memory_space<vmem>>) attributes {dimension_semantics = [#tpu.dimension_semantics<parallel>], iteration_bounds = array<i64: 1>, scalar_prefetch = 0 : i64, scratch_operands = 0 : i64, tpu.core_type = #tpu.core_type<tc>, window_params = [{pipeline_mode = #tpu.pipeline_mode<synchronous>, transform_indices = @transform_0, window_bounds = array<i64: 64, 256>}, {transform_indices = @transform_1, window_bounds = array<i64: 256, 128>}, {pipeline_mode = #tpu.pipeline_mode<synchronous>, transform_indices = @transform_2, window_bounds = array<i64: 64, 1>}, {transform_indices = @transform_3, window_bounds = array<i64: 64, 128>}]} {
    %c0 = arith.constant 0 : index
    %c0_0 = arith.constant 0 : index
    %0 = vector.load %arg1[%c0, %c0_0] : memref<64x256xbf16, #tpu.memory_space<vmem>>, vector<64x256xbf16>
    %c0_1 = arith.constant 0 : index
    %c0_2 = arith.constant 0 : index
    %1 = vector.load %arg2[%c0_1, %c0_2] : memref<256x128xbf16, #tpu.memory_space<vmem>>, vector<256x128xbf16>
    %cst = arith.constant dense<0.000000e+00> : vector<64x128xf32>
    %2 = tpu.matmul %0, %1, %cst {dimension_numbers = #tpu.dot_dimension_numbers<[1], [0], [0], [1], [0, 0, 1, 1], [], []>} : vector<64x256xbf16>, vector<256x128xbf16>, vector<64x128xf32> -> vector<64x128xf32>
    %c0_3 = arith.constant 0 : index
    %c0_4 = arith.constant 0 : index
    %3 = vector.load %arg3[%c0_3, %c0_4] : memref<64x1xf32, #tpu.memory_space<vmem>>, vector<64x1xf32>
    %4 = vector.broadcast %3 : vector<64x1xf32> to vector<64x128xf32>
    %5 = arith.addf %2, %4 : vector<64x128xf32>
    %cst_5 = arith.constant 0.000000e+00 : f32
    %6 = vector.broadcast %cst_5 : f32 to vector<64x128xf32>
    %7 = arith.maximumf %5, %6 : vector<64x128xf32>
    %c0_6 = arith.constant 0 : index
    %c0_7 = arith.constant 0 : index
    %8 = vector.load %arg4[%c0_6, %c0_7] : memref<64x128xf32, #tpu.memory_space<vmem>>, vector<64x128xf32>
    tpu.vector_store %arg4[%c0_6, %c0_7], %7 {strides = array<i32>} : memref<64x128xf32, #tpu.memory_space<vmem>>, vector<64x128xf32>,
    return
  }
  func.func @transform_0(%arg0: i32) -> (i32, i32) {
    %c0_i32 = arith.constant 0 : i32
    %c0_i32_0 = arith.constant 0 : i32
    %c0_i32_1 = arith.constant 0 : i32
    return %c0_i32, %c0_i32_0 : i32, i32
  }
  func.func @transform_1(%arg0: i32) -> (i32, i32) {
    %c0_i32 = arith.constant 0 : i32
    %c0_i32_0 = arith.constant 0 : i32
    return %c0_i32, %arg0 : i32, i32
  }
  func.func @transform_2(%arg0: i32) -> (i32, i32) {
    %c0_i32 = arith.constant 0 : i32
    %c0_i32_0 = arith.constant 0 : i32
    %c0_i32_1 = arith.constant 0 : i32
    return %c0_i32, %c0_i32_0 : i32, i32
  }
  func.func @transform_3(%arg0: i32) -> (i32, i32) {
    %c0_i32 = arith.constant 0 : i32
    %c0_i32_0 = arith.constant 0 : i32
    return %c0_i32, %arg0 : i32, i32
  }
}

</mosaic_0001>

<llo_original>
// kernel: moc_backbone_forward.24
$region0: #{moc_backbone_forward.24}
  #allocation0 [shape = 'u32[]', space=smem, size = 0x4, offset = 0x4, fixed_abs, tag = 'smem constant byte address 0x4 - core index']
  #allocation1 [shape = 'u32[144,128]{1,0:T(1,128)}', space=vmem, size = 0x12000, scoped, tag = 'internal scratch']
  %s0 = inlined_call_operand.vmem [shape: bf16[16,147], index: 0, kind: input, shape index: {}]
  %s1 = inlined_call_operand.vmem [shape: bf16[147,512], index: 1, kind: input, shape index: {}]
  %s2 = inlined_call_operand.vmem [shape: f32[16,1], index: 2, kind: input, shape index: {}]
  %s3 = inlined_call_operand.vmem [shape: f32[16,512], index: 3, kind: output, shape index: {}]
  %s4 = sld [smem:[#allocation0]]
  $region22: #{moc_backbone_forward.24} parent=0
    _
  %s6 = ssub.s32 1, %s4
  %s7 = scalar_select 0, %s6, %s4
  // Predicated region
  $region2: #{moc_backbone_forward.24} parent=0 // pred_check
    _
  $region3: #{moc_backbone_forward.24} parent=0 // pred_check_branch
    %9 = sbr.rel (0) target = $region5
  $region4: #{moc_backbone_forward.24} parent=0 // pred_region
    _
  $region5: #{moc_backbone_forward.24} parent=0 // pred_fallthru
    _
  // Predicated region
  $region6: #{moc_backbone_forward.24} parent=0 // pred_check
    _
  $region7: #{moc_backbone_forward.24} parent=0 // pred_check_branch
    %11 = sbr.rel (0) target = $region9
  $region8: #{moc_backbone_forward.24} parent=0 // pred_region
    _
  $region9: #{moc_backbone_forward.24} parent=0 // pred_fallthru
    _
  // Predicated region
  $region10: #{moc_backbone_forward.24} parent=0 // pred_check
    _
  $region11: #{moc_backbone_forward.24} parent=0 // pred_check_branch
    %13 = sbr.rel (0) target = $region13
  $region12: #{moc_backbone_forward.24} parent=0 // pred_region
    _
  $region13: #{moc_backbone_forward.24} parent=0 // pred_fallthru
    _
  %v15 = vld [vmem:[%s0] sm:$0xff]
  %v16 = vld [vmem:[%s0 + $0x8] sm:$0xff]
  %v17 = vld [vmem:[%s1] sm:$0xff]
  %v18 = vld [vmem:[%s1 + $0x8] sm:$0xff]
  %v19 = vld [vmem:[%s1 + $0x10] sm:$0xff]
  %v20 = vld [vmem:[%s1 + $0x18] sm:$0xff]
  %v21 = vld [vmem:[%s1 + $0x20] sm:$0xff]
  %v22 = vld [vmem:[%s1 + $0x28] sm:$0xff]
  %v23 = vld [vmem:[%s1 + $0x30] sm:$0xff]
  %v24 = vld [vmem:[%s1 + $0x38] sm:$0xff]
  %v25 = vld [vmem:[%s1 + $0x40] sm:$0xff]
  %v26 = vld [vmem:[%s1 + $0x48] sm:$0xff]
  %v27 = vld [vmem:[%s1 + $0x50] sm:$0xff]
  %v28 = vld [vmem:[%s1 + $0x58] sm:$0xff]
  %v29 = vld [vmem:[%s1 + $0x60] sm:$0xff]
  %v30 = vld [vmem:[%s1 + $0x68] sm:$0xff]
  %v31 = vld [vmem:[%s1 + $0x70] sm:$0xff]
  %v32 = vld [vmem:[%s1 + $0x78] sm:$0xff]
  %v33 = vld [vmem:[%s1 + $0x80] sm:$0xff]
  %v34 = vld [vmem:[%s1 + $0x88] sm:$0xff]
  %v35 = vld [vmem:[%s1 + $0x90] sm:$0xff]
  %v36 = vld [vmem:[%s1 + $0x98] sm:$0xff]
  %v37 = vld [vmem:[%s1 + $0xa0] sm:$0xff]
  %v38 = vld [vmem:[%s1 + $0xa8] sm:$0xff]
  %v39 = vld [vmem:[%s1 + $0xb0] sm:$0xff]
  %v40 = vld [vmem:[%s1 + $0xb8] sm:$0xff]
  %v41 = vld [vmem:[%s1 + $0xc0] sm:$0xff]
  %v42 = vld [vmem:[%s1 + $0xc8] sm:$0xff]
  %v43 = vld [vmem:[%s1 + $0xd0] sm:$0xff]
  %v44 = vld [vmem:[%s1 + $0xd8] sm:$0xff]
  %v45 = vld [vmem:[%s1 + $0xe0] sm:$0xff]
  %v46 = vld [vmem:[%s1 + $0xe8] sm:$0xff]
  %v47 = vld [vmem:[%s1 + $0xf0] sm:$0xff]
  %v48 = vld [vmem:[%s1 + $0xf8] sm:$0xff]
  %v49 = vld [vmem:[%s1 + $0x100] sm:$0xff]
  %v50 = vld [vmem:[%s1 + $0x108] sm:$0xff]
  %v51 = vld [vmem:[%s1 + $0x110] sm:$0xff]
  %v52 = vld [vmem:[%s1 + $0x118] sm:$0xff]
  %v53 = vld [vmem:[%s1 + $0x120] sm:$0x33]
  %v54 = vld [vmem:[%s1 + $0x128] sm:$0x33]
  %v55 = vld [vmem:[%s2] sm:$0xff]
  %v56 = vld [vmem:[%s2 + $0x8] sm:$0xff]
  %58 = vset.pattern.permute.xlu0 0
  %59 = vperm.xlu0 %58, %v55
  %v60 = vpop.permute.xlu0 %59
  %63 = vset.pattern.permute.xlu0 0
  %64 = vperm.xlu0 %63, %v56
  %v65 = vpop.permute.xlu0 %64
  %v69 = vunpack.c.l.b16 %v15
  %v70 = vunpack.c.h.b16 %v15
  %v71 = vunpack.c.l.b16 %v16
  %v72 = vunpack.c.h.b16 %v16
  %v73 = vpack.c.b16 %v71, %v69
  %v74 = vpack.c.b16 %v72, %v70
  %v114 = vunpack.c.l.b16 %v17
  %v115 = vunpack.c.h.b16 %v17
  %v116 = vunpack.c.l.b16 %v18
  %v117 = vunpack.c.h.b16 %v18
  %v118 = vunpack.c.l.b16 %v19
  %v119 = vunpack.c.h.b16 %v19
  %v120 = vunpack.c.l.b16 %v20
  %v121 = vunpack.c.h.b16 %v20
  %v122 = vunpack.c.l.b16 %v21
  %v123 = vunpack.c.h.b16 %v21
  %v124 = vunpack.c.l.b16 %v22
  %v125 = vunpack.c.h.b16 %v22
  %v126 = vunpack.c.l.b16 %v23
  %v127 = vunpack.c.h.b16 %v23
  %v128 = vunpack.c.l.b16 %v24
  %v129 = vunpack.c.h.b16 %v24
  %v130 = vunpack.c.l.b16 %v25
  %v131 = vunpack.c.h.b16 %v25
  %v132 = vunpack.c.l.b16 %v26
  %v133 = vunpack.c.h.b16 %v26
  %v134 = vunpack.c.l.b16 %v27
  %v135 = vunpack.c.h.b16 %v27
  %v136 = vunpack.c.l.b16 %v28
  %v137 = vunpack.c.h.b16 %v28
  %v138 = vunpack.c.l.b16 %v29
  %v139 = vunpack.c.h.b16 %v29
  %v140 = vunpack.c.l.b16 %v30
  %v141 = vunpack.c.h.b16 %v30
  %v142 = vunpack.c.l.b16 %v31
  %v143 = vunpack.c.h.b16 %v31
  %v144 = vunpack.c.l.b16 %v32
  %v145 = vunpack.c.h.b16 %v32
  %v146 = vunpack.c.l.b16 %v33
  %v147 = vunpack.c.h.b16 %v33
  %v148 = vunpack.c.l.b16 %v34
  %v149 = vunpack.c.h.b16 %v34
  %v150 = vunpack.c.l.b16 %v35
  %v151 = vunpack.c.h.b16 %v35
  %v152 = vunpack.c.l.b16 %v36
  %v153 = vunpack.c.h.b16 %v36
  %v154 = vunpack.c.l.b16 %v37
  %v155 = vunpack.c.h.b16 %v37
  %v156 = vunpack.c.l.b16 %v38
  %v157 = vunpack.c.h.b16 %v38
  %v158 = vunpack.c.l.b16 %v39
  %v159 = vunpack.c.h.b16 %v39
  %v160 = vunpack.c.l.b16 %v40
  %v161 = vunpack.c.h.b16 %v40
  %v162 = vunpack.c.l.b16 %v41
  %v163 = vunpack.c.h.b16 %v41
  %v164 = vunpack.c.l.b16 %v42
  %v165 = vunpack.c.h.b16 %v42
  %v166 = vunpack.c.l.b16 %v43
  %v167 = vunpack.c.h.b16 %v43
  %v168 = vunpack.c.l.b16 %v44
  %v169 = vunpack.c.h.b16 %v44
  %v170 = vunpack.c.l.b16 %v45
  %v171 = vunpack.c.h.b16 %v45
  %v172 = vunpack.c.l.b16 %v46
  %v173 = vunpack.c.h.b16 %v46
  %v174 = vunpack.c.l.b16 %v47
  %v175 = vunpack.c.h.b16 %v47
  %v176 = vunpack.c.l.b16 %v48
  %v177 = vunpack.c.h.b16 %v48
  %v178 = vunpack.c.l.b16 %v49
  %v179 = vunpack.c.h.b16 %v49
  %v180 = vunpack.c.l.b16 %v50
  %v181 = vunpack.c.h.b16 %v50
  %v182 = vunpack.c.l.b16 %v51
  %v183 = vunpack.c.h.b16 %v51
  %v184 = vunpack.c.l.b16 %v52
  %v185 = vunpack.c.h.b16 %v52
  %v186 = vunpack.c.l.b16 %v53
  %v187 = vunpack.c.h.b16 %v53
  %v188 = vunpack.c.l.b16 %v54
  %v189 = vunpack.c.h.b16 %v54
  %v190 = vpack.c.b16 %v118, %v114
  %v191 = vpack.c.b16 %v119, %v115
  %v192 = vpack.c.b16 %v120, %v116
  %v193 = vpack.c.b16 %v121, %v117
  %v194 = vpack.c.b16 %v126, %v122
  %v195 = vpack.c.b16 %v127, %v123
  %v196 = vpack.c.b16 %v128, %v124
  %v197 = vpack.c.b16 %v129, %v125
  %v198 = vpack.c.b16 %v134, %v130
  %v199 = vpack.c.b16 %v135, %v131
  %v200 = vpack.c.b16 %v136, %v132
  %v201 = vpack.c.b16 %v137, %v133
  %v202 = vpack.c.b16 %v142, %v138
  %v203 = vpack.c.b16 %v143, %v139
  %v204 = vpack.c.b16 %v144, %v140
  %v205 = vpack.c.b16 %v145, %v141
  %v206 = vpack.c.b16 %v150, %v146
  %v207 = vpack.c.b16 %v151, %v147
  %v208 = vpack.c.b16 %v152, %v148
  %v209 = vpack.c.b16 %v153, %v149
  %v210 = vpack.c.b16 %v158, %v154
  %v211 = vpack.c.b16 %v159, %v155
  %v212 = vpack.c.b16 %v160, %v156
  %v213 = vpack.c.b16 %v161, %v157
  %v214 = vpack.c.b16 %v166, %v162
  %v215 = vpack.c.b16 %v167, %v163
  %v216 = vpack.c.b16 %v168, %v164
  %v217 = vpack.c.b16 %v169, %v165
  %v218 = vpack.c.b16 %v174, %v170
  %v219 = vpack.c.b16 %v175, %v171
  %v220 = vpack.c.b16 %v176, %v172
  %v221 = vpack.c.b16 %v177, %v173
  %v222 = vpack.c.b16 %v182, %v178
  %v223 = vpack.c.b16 %v183, %v179
  %v224 = vpack.c.b16 %v184, %v180
  %v225 = vpack.c.b16 %v185, %v181
  %v226 = vpack.c.b16 %v186, %v186
  %v227 = vpack.c.b16 %v187, %v187
  %v228 = vpack.c.b16 %v188, %v188
  %v229 = vpack.c.b16 %v189, %v189
  %vm266 = vcmask 154624
  %v268 = vsel %vm266, %v74, 0
  %vm270 = vcmask 1040384
  %vm271 = vcmask 1041408
  %v272 = vsel %vm270, 4294967295, 65535
  %v273 = vsel %vm271, %v272, 0
  %v275 = vand.u32 %v226, %v273
  %v278 = vand.u32 %v227, %v273
  %v281 = vand.u32 %v228, %v273
  %v284 = vand.u32 %v229, %v273
  %286 = vmatprep.subr.bf16.mxu0 %v219
  %287 = vmatpush1.bf16.msra.mxu0 %v218
  %288 = vmatprep.subr.bf16.mxu0 %v215
  %289 = vmatpush1.bf16.msra.mxu0 %v214
  %290 = vmatprep.subr.bf16.mxu0 %v211
  %291 = vmatpush1.bf16.msra.mxu0 %v210
  %292 = vmatprep.subr.bf16.mxu0 %v207
  %293 = vmatpush1.bf16.msra.mxu0 %v206
  %294 = vmatprep.subr.bf16.mxu0 %v203
  %295 = vmatpush1.bf16.msra.mxu0 %v202
  %296 = vmatprep.subr.bf16.mxu0 %v199
  %297 = vmatpush1.bf16.msra.mxu0 %v198
  %298 = vmatprep.subr.bf16.mxu0 %v195
  %299 = vmatpush1.bf16.msra.mxu0 %v194
  %300 = vmatprep.subr.bf16.mxu0 %v191
  %301 = vmatpush1.bf16.msra.mxu0 %v190
  %302 = vmatprep.subr.bf16.mxu0 0
  %303 = vmatpush2.bf16.msra.mxu0 0
  %304 = vmatprep.subr.bf16.mxu0 0
  %305 = vmatpush2.bf16.msra.mxu0 0
  %306 = vmatprep.subr.bf16.mxu0 0
  %307 = vmatpush2.bf16.msra.mxu0 0
  %308 = vmatprep.subr.bf16.mxu0 0
  %309 = vmatpush2.bf16.msra.mxu0 0
  %310 = vmatprep.subr.bf16.mxu0 0
  %311 = vmatpush2.bf16.msra.mxu0 0
  %312 = vmatprep.subr.bf16.mxu0 0
  %313 = vmatpush2.bf16.msra.mxu0 0
  %314 = vmatprep.subr.bf16.mxu0 %v278
  %315 = vmatpush2.bf16.msra.mxu0 %v275
  %316 = vmatprep.subr.bf16.mxu0 %v223
  %317 = vmatpush2.bf16.msra.mxu0 %v222
  %318 = vmatprep.mubr.bf16.mxu0 %v268
  %319 = vmatmul.mubr.bf16.gmra.mxu0 %v73
  %v320 = vpop.f32.mrf.mxu0
  %v321 = vadd.f32 %v60, %v320
  %v322 = vpop.f32.mrf.mxu0
  %v323 = vadd.f32 %v60, %v322
  %v324 = vpop.f32.mrf.mxu0
  %v325 = vadd.f32 %v65, %v324
  %v326 = vpop.f32.mrf.mxu0
  %v327 = vadd.f32 %v65, %v326
  %328 = vdwg.mxu0
  %329 = vmatprep.subr.bf16.mxu0 %v221
  %330 = vmatpush1.bf16.msra.mxu0 %v220
  %331 = vmatprep.subr.bf16.mxu0 %v217
  %332 = vmatpush1.bf16.msra.mxu0 %v216
  %333 = vmatprep.subr.bf16.mxu0 %v213
  %334 = vmatpush1.bf16.msra.mxu0 %v212
  %335 = vmatprep.subr.bf16.mxu0 %v209
  %336 = vmatpush1.bf16.msra.mxu0 %v208
  %337 = vmatprep.subr.bf16.mxu0 %v205
  %338 = vmatpush1.bf16.msra.mxu0 %v204
  %339 = vmatprep.subr.bf16.mxu0 %v201
  %340 = vmatpush1.bf16.msra.mxu0 %v200
  %341 = vmatprep.subr.bf16.mxu0 %v197
  %342 = vmatpush1.bf16.msra.mxu0 %v196
  %343 = vmatprep.subr.bf16.mxu0 %v193
  %344 = vmatpush1.bf16.msra.mxu0 %v192
  %345 = vmatprep.subr.bf16.mxu0 0
  %346 = vmatpush2.bf16.msra.mxu0 0
  %347 = vmatprep.subr.bf16.mxu0 0
  %348 = vmatpush2.bf16.msra.mxu0 0
  %349 = vmatprep.subr.bf16.mxu0 0
  %350 = vmatpush2.bf16.msra.mxu0 0
  %351 = vmatprep.subr.bf16.mxu0 0
  %352 = vmatpush2.bf16.msra.mxu0 0
  %353 = vmatprep.subr.bf16.mxu0 0
  %354 = vmatpush2.bf16.msra.mxu0 0
  %355 = vmatprep.subr.bf16.mxu0 0
  %356 = vmatpush2.bf16.msra.mxu0 0
  %357 = vmatprep.subr.bf16.mxu0 %v284
  %358 = vmatpush2.bf16.msra.mxu0 %v281
  %359 = vmatprep.subr.bf16.mxu0 %v225
  %360 = vmatpush2.bf16.msra.mxu0 %v224
  %361 = vmatprep.mubr.bf16.mxu0 %v268
  %362 = vmatmul.mubr.bf16.gmra.mxu0 %v73
  %v363 = vpop.f32.mrf.mxu0
  %v364 = vadd.f32 %v60, %v363
  %v365 = vpop.f32.mrf.mxu0
  %v366 = vadd.f32 %v60, %v365
  %v367 = vpop.f32.mrf.mxu0
  %v368 = vadd.f32 %v65, %v367
  %v369 = vpop.f32.mrf.mxu0
  %v370 = vadd.f32 %v65, %v369
  %371 = vdwg.mxu0
  %v372 = vmax.f32 %v321, 0.0
  %v373 = vmax.f32 %v323, 0.0
  %v374 = vmax.f32 %v364, 0.0
  %v375 = vmax.f32 %v366, 0.0
  %v376 = vmax.f32 %v325, 0.0
  %v377 = vmax.f32 %v327, 0.0
  %v378 = vmax.f32 %v368, 0.0
  %v379 = vmax.f32 %v370, 0.0
  %380 = vst [vmem:[%s3] sm:$0xff] %v372
  %381 = vst [vmem:[%s3 + $0x8] sm:$0xff] %v373
  %382 = vst [vmem:[%s3 + $0x10] sm:$0xff] %v374
  %383 = vst [vmem:[%s3 + $0x18] sm:$0xff] %v375
  %384 = vst [vmem:[%s3 + $0x20] sm:$0xff] %v376
  %385 = vst [vmem:[%s3 + $0x28] sm:$0xff] %v377
  %386 = vst [vmem:[%s3 + $0x30] sm:$0xff] %v378
  %387 = vst [vmem:[%s3 + $0x38] sm:$0xff] %v379
  // Predicated region
  $region14: #{moc_backbone_forward.24} parent=0 // pred_check
    _
  $region15: #{moc_backbone_forward.24} parent=0 // pred_check_branch
    %389 = sbr.rel (0) target = $region17
  $region16: #{moc_backbone_forward.24} parent=0 // pred_region
    _
  $region17: #{moc_backbone_forward.24} parent=0 // pred_fallthru
    _
  // Predicated region
  $region18: #{moc_backbone_forward.24} parent=0 // pred_check
    _
  $region19: #{moc_backbone_forward.24} parent=0 // pred_check_branch
    %391 = sbr.rel (0) target = $region21
  $region20: #{moc_backbone_forward.24} parent=0 // pred_region
    _
  $region21: #{moc_backbone_forward.24} parent=0 // pred_fallthru
    _

// kernel: moc_backbone_forward.25
$region0: #{moc_backbone_forward.25}
  #allocation0 [shape = 'u32[]', space=smem, size = 0x4, offset = 0x4, fixed_abs, tag = 'smem constant byte address 0x4 - core index']
  #allocation1 [shape = 'u32[144,128]{1,0:T(1,128)}', space=vmem, size = 0x12000, scoped, tag = 'internal scratch']
  %s0 = inlined_call_operand.vmem [shape: bf16[16,144], index: 0, kind: input, shape index: {}]
  %s1 = inlined_call_operand.vmem [shape: bf16[144,128], index: 1, kind: input, shape index: {}]
  %s2 = inlined_call_operand.vmem [shape: f32[16,1], index: 2, kind: input, shape index: {}]
  %s3 = inlined_call_operand.vmem [shape: f32[16,128], index: 3, kind: output, shape index: {}]
  %s4 = sld [smem:[#allocation0]]
  $region22: #{moc_backbone_forward.25} parent=0
    _
  %s6 = ssub.s32 1, %s4
  %s7 = scalar_select 0, %s6, %s4
  // Predicated region
  $region2: #{moc_backbone_forward.25} parent=0 // pred_check
    _
  $region3: #{moc_backbone_forward.25} parent=0 // pred_check_branch
    %9 = sbr.rel (0) target = $region5
  $region4: #{moc_backbone_forward.25} parent=0 // pred_region
    _
  $region5: #{moc_backbone_forward.25} parent=0 // pred_fallthru
    _
  // Predicated region
  $region6: #{moc_backbone_forward.25} parent=0 // pred_check
    _
  $region7: #{moc_backbone_forward.25} parent=0 // pred_check_branch
    %11 = sbr.rel (0) target = $region9
  $region8: #{moc_backbone_forward.25} parent=0 // pred_region
    _
  $region9: #{moc_backbone_forward.25} parent=0 // pred_fallthru
    _
  // Predicated region
  $region10: #{moc_backbone_forward.25} parent=0 // pred_check
    _
  $region11: #{moc_backbone_forward.25} parent=0 // pred_check_branch
    %13 = sbr.rel (0) target = $region13
  $region12: #{moc_backbone_forward.25} parent=0 // pred_region
    _
  $region13: #{moc_backbone_forward.25} parent=0 // pred_fallthru
    _
  %v15 = vld [vmem:[%s0] sm:$0xff]
  %v16 = vld [vmem:[%s0 + $0x8] sm:$0xff]
  %v17 = vld [vmem:[%s1] sm:$0xf]
  %v18 = vld [vmem:[%s1 + $0x4] sm:$0xf]
  %v19 = vld [vmem:[%s1 + $0x8] sm:$0xf]
  %v20 = vld [vmem:[%s1 + $0xc] sm:$0xf]
  %v21 = vld [vmem:[%s1 + $0x10] sm:$0xf]
  %v22 = vld [vmem:[%s1 + $0x14] sm:$0xf]
  %v23 = vld [vmem:[%s1 + $0x18] sm:$0xf]
  %v24 = vld [vmem:[%s1 + $0x1c] sm:$0xf]
  %v25 = vld [vmem:[%s1 + $0x20] sm:$0xf]
  %v26 = vld [vmem:[%s1 + $0x24] sm:$0xf]
  %v27 = vld [vmem:[%s1 + $0x28] sm:$0xf]
  %v28 = vld [vmem:[%s1 + $0x2c] sm:$0xf]
  %v29 = vld [vmem:[%s1 + $0x30] sm:$0xf]
  %v30 = vld [vmem:[%s1 + $0x34] sm:$0xf]
  %v31 = vld [vmem:[%s1 + $0x38] sm:$0xf]
  %v32 = vld [vmem:[%s1 + $0x3c] sm:$0xf]
  %v33 = vld [vmem:[%s1 + $0x40] sm:$0xf]
  %v34 = vld [vmem:[%s1 + $0x44] sm:$0xf]
  %v35 = vld [vmem:[%s2] sm:$0xff]
  %v36 = vld [vmem:[%s2 + $0x8] sm:$0xff]
  %38 = vset.pattern.permute.xlu0 0
  %39 = vperm.xlu0 %38, %v35
  %v40 = vpop.permute.xlu0 %39
  %43 = vset.pattern.permute.xlu0 0
  %44 = vperm.xlu0 %43, %v36
  %v45 = vpop.permute.xlu0 %44
  %v49 = vunpack.c.l.b16 %v15
  %v50 = vunpack.c.h.b16 %v15
  %v51 = vunpack.c.l.b16 %v16
  %v52 = vunpack.c.h.b16 %v16
  %v53 = vpack.c.b16 %v51, %v49
  %v54 = vpack.c.b16 %v52, %v50
  %v74 = vunpack.c.l.b16 %v17
  %v75 = vunpack.c.l.b16 %v18
  %v76 = vunpack.c.l.b16 %v19
  %v77 = vunpack.c.l.b16 %v20
  %v78 = vunpack.c.l.b16 %v21
  %v79 = vunpack.c.l.b16 %v22
  %v80 = vunpack.c.l.b16 %v23
  %v81 = vunpack.c.l.b16 %v24
  %v82 = vunpack.c.l.b16 %v25
  %v83 = vunpack.c.l.b16 %v26
  %v84 = vunpack.c.l.b16 %v27
  %v85 = vunpack.c.l.b16 %v28
  %v86 = vunpack.c.l.b16 %v29
  %v87 = vunpack.c.l.b16 %v30
  %v88 = vunpack.c.l.b16 %v31
  %v89 = vunpack.c.l.b16 %v32
  %v90 = vunpack.c.l.b16 %v33
  %v91 = vunpack.c.l.b16 %v34
  %v92 = vpack.c.b16 %v75, %v74
  %v93 = vpack.c.b16 %v77, %v76
  %v94 = vpack.c.b16 %v79, %v78
  %v95 = vpack.c.b16 %v81, %v80
  %v96 = vpack.c.b16 %v83, %v82
  %v97 = vpack.c.b16 %v85, %v84
  %v98 = vpack.c.b16 %v87, %v86
  %v99 = vpack.c.b16 %v89, %v88
  %v100 = vpack.c.b16 %v91, %v90
  %vm110 = vcmask 130048
  %v112 = vsel %vm110, %v54, 0
  %114 = vmatprep.subr.bf16.mxu0 0
  %115 = vmatpush1.bf16.msra.mxu0 %v99
  %116 = vmatprep.subr.bf16.mxu0 0
  %117 = vmatpush1.bf16.msra.mxu0 %v98
  %118 = vmatprep.subr.bf16.mxu0 0
  %119 = vmatpush1.bf16.msra.mxu0 %v97
  %120 = vmatprep.subr.bf16.mxu0 0
  %121 = vmatpush1.bf16.msra.mxu0 %v96
  %122 = vmatprep.subr.bf16.mxu0 0
  %123 = vmatpush1.bf16.msra.mxu0 %v95
  %124 = vmatprep.subr.bf16.mxu0 0
  %125 = vmatpush1.bf16.msra.mxu0 %v94
  %126 = vmatprep.subr.bf16.mxu0 0
  %127 = vmatpush1.bf16.msra.mxu0 %v93
  %128 = vmatprep.subr.bf16.mxu0 0
  %129 = vmatpush1.bf16.msra.mxu0 %v92
  %130 = vmatprep.subr.bf16.mxu0 0
  %131 = vmatpush2.bf16.msra.mxu0 0
  %132 = vmatprep.subr.bf16.mxu0 0
  %133 = vmatpush2.bf16.msra.mxu0 0
  %134 = vmatprep.subr.bf16.mxu0 0
  %135 = vmatpush2.bf16.msra.mxu0 0
  %136 = vmatprep.subr.bf16.mxu0 0
  %137 = vmatpush2.bf16.msra.mxu0 0
  %138 = vmatprep.subr.bf16.mxu0 0
  %139 = vmatpush2.bf16.msra.mxu0 0
  %140 = vmatprep.subr.bf16.mxu0 0
  %141 = vmatpush2.bf16.msra.mxu0 0
  %142 = vmatprep.subr.bf16.mxu0 0
  %143 = vmatpush2.bf16.msra.mxu0 0
  %144 = vmatprep.subr.bf16.mxu0 0
  %145 = vmatpush2.bf16.msra.mxu0 %v100
  %146 = vmatprep.mubr.bf16.mxu0 %v112
  %147 = vmatmul.mubr.bf16.gmra.mxu0 %v53
  %v148 = vpop.f32.mrf.mxu0
  %v149 = vadd.f32 %v40, %v148
  %v150 = vpop.f32.mrf.mxu0
  %v151 = vpop.f32.mrf.mxu0
  %v152 = vadd.f32 %v45, %v151
  %v153 = vpop.f32.mrf.mxu0
  %154 = vdwg.mxu0
  %v155 = vmax.f32 %v149, 0.0
  %v156 = vmax.f32 %v152, 0.0
  %157 = vst [vmem:[%s3] sm:$0xff] %v155
  %158 = vst [vmem:[%s3 + $0x8] sm:$0xff] %v156
  // Predicated region
  $region14: #{moc_backbone_forward.25} parent=0 // pred_check
    _
  $region15: #{moc_backbone_forward.25} parent=0 // pred_check_branch
    %160 = sbr.rel (0) target = $region17
  $region16: #{moc_backbone_forward.25} parent=0 // pred_region
    _
  $region17: #{moc_backbone_forward.25} parent=0 // pred_fallthru
    _
  // Predicated region
  $region18: #{moc_backbone_forward.25} parent=0 // pred_check
    _
  $region19: #{moc_backbone_forward.25} parent=0 // pred_check_branch
    %162 = sbr.rel (0) target = $region21
  $region20: #{moc_backbone_forward.25} parent=0 // pred_region
    _
  $region21: #{moc_backbone_forward.25} parent=0 // pred_fallthru
    _

// kernel: moc_backbone_forward.26
$region0: #{moc_backbone_forward.26}
  #allocation0 [shape = 'u32[]', space=smem, size = 0x4, offset = 0x4, fixed_abs, tag = 'smem constant byte address 0x4 - core index']
  #allocation1 [shape = 'u32[144,128]{1,0:T(1,128)}', space=vmem, size = 0x12000, scoped, tag = 'internal scratch']
  %s0 = inlined_call_operand.vmem [shape: bf16[16,144], index: 0, kind: input, shape index: {}]
  %s1 = inlined_call_operand.vmem [shape: bf16[144,128], index: 1, kind: input, shape index: {}]
  %s2 = inlined_call_operand.vmem [shape: f32[16,1], index: 2, kind: input, shape index: {}]
  %s3 = inlined_call_operand.vmem [shape: f32[16,128], index: 3, kind: input, shape index: {}]
  %s4 = inlined_call_operand.vmem [shape: f32[16,128], index: 4, kind: output, shape index: {}]
  %s5 = sld [smem:[#allocation0]]
  $region26: #{moc_backbone_forward.26} parent=0
    _
  %s7 = ssub.s32 1, %s5
  %s8 = scalar_select 0, %s7, %s5
  // Predicated region
  $region2: #{moc_backbone_forward.26} parent=0 // pred_check
    _
  $region3: #{moc_backbone_forward.26} parent=0 // pred_check_branch
    %10 = sbr.rel (0) target = $region5
  $region4: #{moc_backbone_forward.26} parent=0 // pred_region
    _
  $region5: #{moc_backbone_forward.26} parent=0 // pred_fallthru
    _
  // Predicated region
  $region6: #{moc_backbone_forward.26} parent=0 // pred_check
    _
  $region7: #{moc_backbone_forward.26} parent=0 // pred_check_branch
    %12 = sbr.rel (0) target = $region9
  $region8: #{moc_backbone_forward.26} parent=0 // pred_region
    _
  $region9: #{moc_backbone_forward.26} parent=0 // pred_fallthru
    _
  // Predicated region
  $region10: #{moc_backbone_forward.26} parent=0 // pred_check
    _
  $region11: #{moc_backbone_forward.26} parent=0 // pred_check_branch
    %14 = sbr.rel (0) target = $region13
  $region12: #{moc_backbone_forward.26} parent=0 // pred_region
    _
  $region13: #{moc_backbone_forward.26} parent=0 // pred_fallthru
    _
  // Predicated region
  $region14: #{moc_backbone_forward.26} parent=0 // pred_check
    _
  $region15: #{moc_backbone_forward.26} parent=0 // pred_check_branch
    %16 = sbr.rel (0) target = $region17
  $region16: #{moc_backbone_forward.26} parent=0 // pred_region
    _
  $region17: #{moc_backbone_forward.26} parent=0 // pred_fallthru
    _
  %v18 = vld [vmem:[%s0] sm:$0xff]
  %v19 = vld [vmem:[%s0 + $0x8] sm:$0xff]
  %v20 = vld [vmem:[%s1] sm:$0xf]
  %v21 = vld [vmem:[%s1 + $0x4] sm:$0xf]
  %v22 = vld [vmem:[%s1 + $0x8] sm:$0xf]
  %v23 = vld [vmem:[%s1 + $0xc] sm:$0xf]
  %v24 = vld [vmem:[%s1 + $0x10] sm:$0xf]
  %v25 = vld [vmem:[%s1 + $0x14] sm:$0xf]
  %v26 = vld [vmem:[%s1 + $0x18] sm:$0xf]
  %v27 = vld [vmem:[%s1 + $0x1c] sm:$0xf]
  %v28 = vld [vmem:[%s1 + $0x20] sm:$0xf]
  %v29 = vld [vmem:[%s1 + $0x24] sm:$0xf]
  %v30 = vld [vmem:[%s1 + $0x28] sm:$0xf]
  %v31 = vld [vmem:[%s1 + $0x2c] sm:$0xf]
  %v32 = vld [vmem:[%s1 + $0x30] sm:$0xf]
  %v33 = vld [vmem:[%s1 + $0x34] sm:$0xf]
  %v34 = vld [vmem:[%s1 + $0x38] sm:$0xf]
  %v35 = vld [vmem:[%s1 + $0x3c] sm:$0xf]
  %v36 = vld [vmem:[%s1 + $0x40] sm:$0xf]
  %v37 = vld [vmem:[%s1 + $0x44] sm:$0xf]
  %v38 = vld [vmem:[%s2] sm:$0xff]
  %v39 = vld [vmem:[%s2 + $0x8] sm:$0xff]
  %41 = vset.pattern.permute.xlu0 0
  %42 = vperm.xlu0 %41, %v38
  %v43 = vpop.permute.xlu0 %42
  %46 = vset.pattern.permute.xlu0 0
  %47 = vperm.xlu0 %46, %v39
  %v48 = vpop.permute.xlu0 %47
  %v52 = vunpack.c.l.b16 %v18
  %v53 = vunpack.c.h.b16 %v18
  %v54 = vunpack.c.l.b16 %v19
  %v55 = vunpack.c.h.b16 %v19
  %v56 = vpack.c.b16 %v54, %v52
  %v57 = vpack.c.b16 %v55, %v53
  %v77 = vunpack.c.l.b16 %v20
  %v78 = vunpack.c.l.b16 %v21
  %v79 = vunpack.c.l.b16 %v22
  %v80 = vunpack.c.l.b16 %v23
  %v81 = vunpack.c.l.b16 %v24
  %v82 = vunpack.c.l.b16 %v25
  %v83 = vunpack.c.l.b16 %v26
  %v84 = vunpack.c.l.b16 %v27
  %v85 = vunpack.c.l.b16 %v28
  %v86 = vunpack.c.l.b16 %v29
  %v87 = vunpack.c.l.b16 %v30
  %v88 = vunpack.c.l.b16 %v31
  %v89 = vunpack.c.l.b16 %v32
  %v90 = vunpack.c.l.b16 %v33
  %v91 = vunpack.c.l.b16 %v34
  %v92 = vunpack.c.l.b16 %v35
  %v93 = vunpack.c.l.b16 %v36
  %v94 = vunpack.c.l.b16 %v37
  %v95 = vpack.c.b16 %v78, %v77
  %v96 = vpack.c.b16 %v80, %v79
  %v97 = vpack.c.b16 %v82, %v81
  %v98 = vpack.c.b16 %v84, %v83
  %v99 = vpack.c.b16 %v86, %v85
  %v100 = vpack.c.b16 %v88, %v87
  %v101 = vpack.c.b16 %v90, %v89
  %v102 = vpack.c.b16 %v92, %v91
  %v103 = vpack.c.b16 %v94, %v93
  %vm113 = vcmask 130048
  %v115 = vsel %vm113, %v57, 0
  %117 = vmatprep.subr.bf16.mxu0 0
  %118 = vmatpush1.bf16.msra.mxu0 %v102
  %119 = vmatprep.subr.bf16.mxu0 0
  %120 = vmatpush1.bf16.msra.mxu0 %v101
  %121 = vmatprep.subr.bf16.mxu0 0
  %122 = vmatpush1.bf16.msra.mxu0 %v100
  %123 = vmatprep.subr.bf16.mxu0 0
  %124 = vmatpush1.bf16.msra.mxu0 %v99
  %125 = vmatprep.subr.bf16.mxu0 0
  %126 = vmatpush1.bf16.msra.mxu0 %v98
  %127 = vmatprep.subr.bf16.mxu0 0
  %128 = vmatpush1.bf16.msra.mxu0 %v97
  %129 = vmatprep.subr.bf16.mxu0 0
  %130 = vmatpush1.bf16.msra.mxu0 %v96
  %131 = vmatprep.subr.bf16.mxu0 0
  %132 = vmatpush1.bf16.msra.mxu0 %v95
  %133 = vmatprep.subr.bf16.mxu0 0
  %134 = vmatpush2.bf16.msra.mxu0 0
  %135 = vmatprep.subr.bf16.mxu0 0
  %136 = vmatpush2.bf16.msra.mxu0 0
  %137 = vmatprep.subr.bf16.mxu0 0
  %138 = vmatpush2.bf16.msra.mxu0 0
  %139 = vmatprep.subr.bf16.mxu0 0
  %140 = vmatpush2.bf16.msra.mxu0 0
  %141 = vmatprep.subr.bf16.mxu0 0
  %142 = vmatpush2.bf16.msra.mxu0 0
  %143 = vmatprep.subr.bf16.mxu0 0
  %144 = vmatpush2.bf16.msra.mxu0 0
  %145 = vmatprep.subr.bf16.mxu0 0
  %146 = vmatpush2.bf16.msra.mxu0 0
  %147 = vmatprep.subr.bf16.mxu0 0
  %148 = vmatpush2.bf16.msra.mxu0 %v103
  %149 = vmatprep.mubr.bf16.mxu0 %v115
  %150 = vmatmul.mubr.bf16.gmra.mxu0 %v56
  %v151 = vpop.f32.mrf.mxu0
  %v152 = vadd.f32 %v43, %v151
  %v153 = vpop.f32.mrf.mxu0
  %v154 = vpop.f32.mrf.mxu0
  %v155 = vadd.f32 %v48, %v154
  %v156 = vpop.f32.mrf.mxu0
  %157 = vdwg.mxu0
  %v158 = vld [vmem:[%s3] sm:$0xff]
  %v159 = vld [vmem:[%s3 + $0x8] sm:$0xff]
  %v160 = vadd.f32 %v152, %v158
  %v161 = vadd.f32 %v155, %v159
  %v162 = vmax.f32 %v160, 0.0
  %v163 = vmax.f32 %v161, 0.0
  %164 = vst [vmem:[%s4] sm:$0xff] %v162
  %165 = vst [vmem:[%s4 + $0x8] sm:$0xff] %v163
  // Predicated region
  $region18: #{moc_backbone_forward.26} parent=0 // pred_check
    _
  $region19: #{moc_backbone_forward.26} parent=0 // pred_check_branch
    %167 = sbr.rel (0) target = $region21
  $region20: #{moc_backbone_forward.26} parent=0 // pred_region
    _
  $region21: #{moc_backbone_forward.26} parent=0 // pred_fallthru
    _
  // Predicated region
  $region22: #{moc_backbone_forward.26} parent=0 // pred_check
    _
  $region23: #{moc_backbone_forward.26} parent=0 // pred_check_branch
    %169 = sbr.rel (0) target = $region25
  $region24: #{moc_backbone_forward.26} parent=0 // pred_region
    _
  $region25: #{moc_backbone_forward.26} parent=0 // pred_fallthru
    _

// kernel: moc_backbone_forward.27
$region0: #{moc_backbone_forward.27}
  #allocation0 [shape = 'u32[]', space=smem, size = 0x4, offset = 0x4, fixed_abs, tag = 'smem constant byte address 0x4 - core index']
  #allocation1 [shape = 'u32[144,128]{1,0:T(1,128)}', space=vmem, size = 0x12000, scoped, tag = 'internal scratch']
  %s0 = inlined_call_operand.vmem [shape: bf16[32,144], index: 0, kind: input, shape index: {}]
  %s1 = inlined_call_operand.vmem [shape: bf16[144,128], index: 1, kind: input, shape index: {}]
  %s2 = inlined_call_operand.vmem [shape: f32[32,1], index: 2, kind: input, shape index: {}]
  %s3 = inlined_call_operand.vmem [shape: f32[32,128], index: 3, kind: output, shape index: {}]
  %s4 = sld [smem:[#allocation0]]
  $region22: #{moc_backbone_forward.27} parent=0
    _
  %s6 = ssub.s32 1, %s4
  %s7 = scalar_select 0, %s6, %s4
  // Predicated region
  $region2: #{moc_backbone_forward.27} parent=0 // pred_check
    _
  $region3: #{moc_backbone_forward.27} parent=0 // pred_check_branch
    %9 = sbr.rel (0) target = $region5
  $region4: #{moc_backbone_forward.27} parent=0 // pred_region
    _
  $region5: #{moc_backbone_forward.27} parent=0 // pred_fallthru
    _
  // Predicated region
  $region6: #{moc_backbone_forward.27} parent=0 // pred_check
    _
  $region7: #{moc_backbone_forward.27} parent=0 // pred_check_branch
    %11 = sbr.rel (0) target = $region9
  $region8: #{moc_backbone_forward.27} parent=0 // pred_region
    _
  $region9: #{moc_backbone_forward.27} parent=0 // pred_fallthru
    _
  // Predicated region
  $region10: #{moc_backbone_forward.27} parent=0 // pred_check
    _
  $region11: #{moc_backbone_forward.27} parent=0 // pred_check_branch
    %13 = sbr.rel (0) target = $region13
  $region12: #{moc_backbone_forward.27} parent=0 // pred_region
    _
  $region13: #{moc_backbone_forward.27} parent=0 // pred_fallthru
    _
  %v15 = vld [vmem:[%s0] sm:$0xff]
  %v16 = vld [vmem:[%s0 + $0x8] sm:$0xff]
  %v17 = vld [vmem:[%s0 + $0x10] sm:$0xff]
  %v18 = vld [vmem:[%s0 + $0x18] sm:$0xff]
  %v19 = vld [vmem:[%s1] sm:$0xf]
  %v20 = vld [vmem:[%s1 + $0x4] sm:$0xf]
  %v21 = vld [vmem:[%s1 + $0x8] sm:$0xf]
  %v22 = vld [vmem:[%s1 + $0xc] sm:$0xf]
  %v23 = vld [vmem:[%s1 + $0x10] sm:$0xf]
  %v24 = vld [vmem:[%s1 + $0x14] sm:$0xf]
  %v25 = vld [vmem:[%s1 + $0x18] sm:$0xf]
  %v26 = vld [vmem:[%s1 + $0x1c] sm:$0xf]
  %v27 = vld [vmem:[%s1 + $0x20] sm:$0xf]
  %v28 = vld [vmem:[%s1 + $0x24] sm:$0xf]
  %v29 = vld [vmem:[%s1 + $0x28] sm:$0xf]
  %v30 = vld [vmem:[%s1 + $0x2c] sm:$0xf]
  %v31 = vld [vmem:[%s1 + $0x30] sm:$0xf]
  %v32 = vld [vmem:[%s1 + $0x34] sm:$0xf]
  %v33 = vld [vmem:[%s1 + $0x38] sm:$0xf]
  %v34 = vld [vmem:[%s1 + $0x3c] sm:$0xf]
  %v35 = vld [vmem:[%s1 + $0x40] sm:$0xf]
  %v36 = vld [vmem:[%s1 + $0x44] sm:$0xf]
  %v37 = vld [vmem:[%s2] sm:$0xff]
  %v38 = vld [vmem:[%s2 + $0x8] sm:$0xff]
  %v39 = vld [vmem:[%s2 + $0x10] sm:$0xff]
  %v40 = vld [vmem:[%s2 + $0x18] sm:$0xff]
  %42 = vset.pattern.permute.xlu0 0
  %43 = vperm.xlu0 %42, %v37
  %v44 = vpop.permute.xlu0 %43
  %47 = vset.pattern.permute.xlu0 0
  %48 = vperm.xlu0 %47, %v38
  %v49 = vpop.permute.xlu0 %48
  %52 = vset.pattern.permute.xlu0 0
  %53 = vperm.xlu0 %52, %v39
  %v54 = vpop.permute.xlu0 %53
  %57 = vset.pattern.permute.xlu0 0
  %58 = vperm.xlu0 %57, %v40
  %v59 = vpop.permute.xlu0 %58
  %v65 = vunpack.c.l.b16 %v15
  %v66 = vunpack.c.h.b16 %v15
  %v67 = vunpack.c.l.b16 %v16
  %v68 = vunpack.c.h.b16 %v16
  %v69 = vunpack.c.l.b16 %v17
  %v70 = vunpack.c.h.b16 %v17
  %v71 = vunpack.c.l.b16 %v18
  %v72 = vunpack.c.h.b16 %v18
  %v73 = vpack.c.b16 %v67, %v65
  %v74 = vpack.c.b16 %v68, %v66
  %v75 = vpack.c.b16 %v71, %v69
  %v76 = vpack.c.b16 %v72, %v70
  %v97 = vunpack.c.l.b16 %v19
  %v98 = vunpack.c.l.b16 %v20
  %v99 = vunpack.c.l.b16 %v21
  %v100 = vunpack.c.l.b16 %v22
  %v101 = vunpack.c.l.b16 %v23
  %v102 = vunpack.c.l.b16 %v24
  %v103 = vunpack.c.l.b16 %v25
  %v104 = vunpack.c.l.b16 %v26
  %v105 = vunpack.c.l.b16 %v27
  %v106 = vunpack.c.l.b16 %v28
  %v107 = vunpack.c.l.b16 %v29
  %v108 = vunpack.c.l.b16 %v30
  %v109 = vunpack.c.l.b16 %v31
  %v110 = vunpack.c.l.b16 %v32
  %v111 = vunpack.c.l.b16 %v33
  %v112 = vunpack.c.l.b16 %v34
  %v113 = vunpack.c.l.b16 %v35
  %v114 = vunpack.c.l.b16 %v36
  %v115 = vpack.c.b16 %v98, %v97
  %v116 = vpack.c.b16 %v100, %v99
  %v117 = vpack.c.b16 %v102, %v101
  %v118 = vpack.c.b16 %v104, %v103
  %v119 = vpack.c.b16 %v106, %v105
  %v120 = vpack.c.b16 %v108, %v107
  %v121 = vpack.c.b16 %v110, %v109
  %v122 = vpack.c.b16 %v112, %v111
  %v123 = vpack.c.b16 %v114, %v113
  %vm133 = vcmask 130048
  %v135 = vsel %vm133, %v74, 0
  %v138 = vsel %vm133, %v76, 0
  %140 = vmatprep.subr.bf16.mxu0 0
  %141 = vmatpush1.bf16.msra.mxu0 %v122
  %142 = vmatprep.subr.bf16.mxu0 0
  %143 = vmatpush1.bf16.msra.mxu0 %v121
  %144 = vmatprep.subr.bf16.mxu0 0
  %145 = vmatpush1.bf16.msra.mxu0 %v120
  %146 = vmatprep.subr.bf16.mxu0 0
  %147 = vmatpush1.bf16.msra.mxu0 %v119
  %148 = vmatprep.subr.bf16.mxu0 0
  %149 = vmatpush1.bf16.msra.mxu0 %v118
  %150 = vmatprep.subr.bf16.mxu0 0
  %151 = vmatpush1.bf16.msra.mxu0 %v117
  %152 = vmatprep.subr.bf16.mxu0 0
  %153 = vmatpush1.bf16.msra.mxu0 %v116
  %154 = vmatprep.subr.bf16.mxu0 0
  %155 = vmatpush1.bf16.msra.mxu0 %v115
  %156 = vmatprep.subr.bf16.mxu0 0
  %157 = vmatpush2.bf16.msra.mxu0 0
  %158 = vmatprep.subr.bf16.mxu0 0
  %159 = vmatpush2.bf16.msra.mxu0 0
  %160 = vmatprep.subr.bf16.mxu0 0
  %161 = vmatpush2.bf16.msra.mxu0 0
  %162 = vmatprep.subr.bf16.mxu0 0
  %163 = vmatpush2.bf16.msra.mxu0 0
  %164 = vmatprep.subr.bf16.mxu0 0
  %165 = vmatpush2.bf16.msra.mxu0 0
  %166 = vmatprep.subr.bf16.mxu0 0
  %167 = vmatpush2.bf16.msra.mxu0 0
  %168 = vmatprep.subr.bf16.mxu0 0
  %169 = vmatpush2.bf16.msra.mxu0 0
  %170 = vmatprep.subr.bf16.mxu0 0
  %171 = vmatpush2.bf16.msra.mxu0 %v123
  %172 = vmatprep.mubr.bf16.mxu0 %v135
  %173 = vmatmul.mubr.bf16.gmra.mxu0 %v73
  %v174 = vpop.f32.mrf.mxu0
  %v175 = vadd.f32 %v44, %v174
  %v176 = vpop.f32.mrf.mxu0
  %v177 = vpop.f32.mrf.mxu0
  %v178 = vadd.f32 %v49, %v177
  %v179 = vpop.f32.mrf.mxu0
  %180 = vmatprep.mubr.bf16.mxu0 %v138
  %181 = vmatmul.mubr.bf16.gmra.mxu0 %v75
  %v182 = vpop.f32.mrf.mxu0
  %v183 = vadd.f32 %v54, %v182
  %v184 = vpop.f32.mrf.mxu0
  %v185 = vpop.f32.mrf.mxu0
  %v186 = vadd.f32 %v59, %v185
  %v187 = vpop.f32.mrf.mxu0
  %188 = vdwg.mxu0
  %v189 = vmax.f32 %v175, 0.0
  %v190 = vmax.f32 %v178, 0.0
  %v191 = vmax.f32 %v183, 0.0
  %v192 = vmax.f32 %v186, 0.0
  %193 = vst [vmem:[%s3] sm:$0xff] %v189
  %194 = vst [vmem:[%s3 + $0x8] sm:$0xff] %v190
  %195 = vst [vmem:[%s3 + $0x10] sm:$0xff] %v191
  %196 = vst [vmem:[%s3 + $0x18] sm:$0xff] %v192
  // Predicated region
  $region14: #{moc_backbone_forward.27} parent=0 // pred_check
    _
  $region15: #{moc_backbone_forward.27} parent=0 // pred_check_branch
    %198 = sbr.rel (0) target = $region17
  $region16: #{moc_backbone_forward.27} parent=0 // pred_region
    _
  $region17: #{moc_backbone_forward.27} parent=0 // pred_fallthru
    _
  // Predicated region
  $region18: #{moc_backbone_forward.27} parent=0 // pred_check
    _
  $region19: #{moc_backbone_forward.27} parent=0 // pred_check_branch
    %200 = sbr.rel (0) target = $region21
  $region20: #{moc_backbone_forward.27} parent=0 // pred_region
    _
  $region21: #{moc_backbone_forward.27} parent=0 // pred_fallthru
    _

// kernel: moc_backbone_forward.28
$region0: #{moc_backbone_forward.28}
  #allocation0 [shape = 'u32[]', space=smem, size = 0x4, offset = 0x4, fixed_abs, tag = 'smem constant byte address 0x4 - core index']
  #allocation1 [shape = 'u32[144,128]{1,0:T(1,128)}', space=vmem, size = 0x12000, scoped, tag = 'internal scratch']
  %s0 = inlined_call_operand.vmem [shape: bf16[32,16], index: 0, kind: input, shape index: {}]
  %s1 = inlined_call_operand.vmem [shape: bf16[16,128], index: 1, kind: input, shape index: {}]
  %s2 = inlined_call_operand.vmem [shape: f32[32,1], index: 2, kind: input, shape index: {}]
  %s3 = inlined_call_operand.vmem [shape: f32[32,128], index: 3, kind: output, shape index: {}]
  %s4 = sld [smem:[#allocation0]]
  $region22: #{moc_backbone_forward.28} parent=0
    _
  %s6 = ssub.s32 1, %s4
  %s7 = scalar_select 0, %s6, %s4
  // Predicated region
  $region2: #{moc_backbone_forward.28} parent=0 // pred_check
    _
  $region3: #{moc_backbone_forward.28} parent=0 // pred_check_branch
    %9 = sbr.rel (0) target = $region5
  $region4: #{moc_backbone_forward.28} parent=0 // pred_region
    _
  $region5: #{moc_backbone_forward.28} parent=0 // pred_fallthru
    _
  // Predicated region
  $region6: #{moc_backbone_forward.28} parent=0 // pred_check
    _
  $region7: #{moc_backbone_forward.28} parent=0 // pred_check_branch
    %11 = sbr.rel (0) target = $region9
  $region8: #{moc_backbone_forward.28} parent=0 // pred_region
    _
  $region9: #{moc_backbone_forward.28} parent=0 // pred_fallthru
    _
  // Predicated region
  $region10: #{moc_backbone_forward.28} parent=0 // pred_check
    _
  $region11: #{moc_backbone_forward.28} parent=0 // pred_check_branch
    %13 = sbr.rel (0) target = $region13
  $region12: #{moc_backbone_forward.28} parent=0 // pred_region
    _
  $region13: #{moc_backbone_forward.28} parent=0 // pred_fallthru
    _
  %v15 = vld [vmem:[%s0] sm:$0xf]
  %v16 = vld [vmem:[%s0 + $0x4] sm:$0xf]
  %v17 = vld [vmem:[%s0 + $0x8] sm:$0xf]
  %v18 = vld [vmem:[%s0 + $0xc] sm:$0xf]
  %v19 = vld [vmem:[%s1] sm:$0xf]
  %v20 = vld [vmem:[%s1 + $0x4] sm:$0xf]
  %v21 = vld [vmem:[%s2] sm:$0xff]
  %v22 = vld [vmem:[%s2 + $0x8] sm:$0xff]
  %v23 = vld [vmem:[%s2 + $0x10] sm:$0xff]
  %v24 = vld [vmem:[%s2 + $0x18] sm:$0xff]
  %26 = vset.pattern.permute.xlu0 0
  %27 = vperm.xlu0 %26, %v21
  %v28 = vpop.permute.xlu0 %27
  %31 = vset.pattern.permute.xlu0 0
  %32 = vperm.xlu0 %31, %v22
  %v33 = vpop.permute.xlu0 %32
  %36 = vset.pattern.permute.xlu0 0
  %37 = vperm.xlu0 %36, %v23
  %v38 = vpop.permute.xlu0 %37
  %41 = vset.pattern.permute.xlu0 0
  %42 = vperm.xlu0 %41, %v24
  %v43 = vpop.permute.xlu0 %42
  %v49 = vunpack.c.l.b16 %v15
  %v50 = vunpack.c.l.b16 %v16
  %v51 = vunpack.c.l.b16 %v17
  %v52 = vunpack.c.l.b16 %v18
  %v53 = vpack.c.b16 %v50, %v49
  %v54 = vpack.c.b16 %v52, %v51
  %v57 = vunpack.c.l.b16 %v19
  %v58 = vunpack.c.l.b16 %v20
  %v59 = vpack.c.b16 %v58, %v57
  %vm61 = vcmask 130048
  %v63 = vsel %vm61, %v53, 0
  %v66 = vsel %vm61, %v54, 0
  %68 = vmatprep.subr.bf16.mxu0 0
  %69 = vmatpush1.bf16.msra.mxu0 0
  %70 = vmatprep.subr.bf16.mxu0 0
  %71 = vmatpush1.bf16.msra.mxu0 0
  %72 = vmatprep.subr.bf16.mxu0 0
  %73 = vmatpush1.bf16.msra.mxu0 0
  %74 = vmatprep.subr.bf16.mxu0 0
  %75 = vmatpush1.bf16.msra.mxu0 0
  %76 = vmatprep.subr.bf16.mxu0 0
  %77 = vmatpush1.bf16.msra.mxu0 0
  %78 = vmatprep.subr.bf16.mxu0 0
  %79 = vmatpush1.bf16.msra.mxu0 0
  %80 = vmatprep.subr.bf16.mxu0 0
  %81 = vmatpush1.bf16.msra.mxu0 0
  %82 = vmatprep.subr.bf16.mxu0 0
  %83 = vmatpush1.bf16.msra.mxu0 %v59
  %84 = vmatprep.subr.bf16.mxu0 0
  %85 = vmatpush2.bf16.msra.mxu0 0
  %86 = vmatprep.subr.bf16.mxu0 0
  %87 = vmatpush2.bf16.msra.mxu0 0
  %88 = vmatprep.subr.bf16.mxu0 0
  %89 = vmatpush2.bf16.msra.mxu0 0
  %90 = vmatprep.subr.bf16.mxu0 0
  %91 = vmatpush2.bf16.msra.mxu0 0
  %92 = vmatprep.subr.bf16.mxu0 0
  %93 = vmatpush2.bf16.msra.mxu0 0
  %94 = vmatprep.subr.bf16.mxu0 0
  %95 = vmatpush2.bf16.msra.mxu0 0
  %96 = vmatprep.subr.bf16.mxu0 0
  %97 = vmatpush2.bf16.msra.mxu0 0
  %98 = vmatprep.subr.bf16.mxu0 0
  %99 = vmatpush2.bf16.msra.mxu0 0
  %100 = vmatprep.mubr.bf16.mxu0 0
  %101 = vmatmul.mubr.bf16.gmra.mxu0 %v63
  %v102 = vpop.f32.mrf.mxu0
  %v103 = vadd.f32 %v28, %v102
  %v104 = vpop.f32.mrf.mxu0
  %v105 = vpop.f32.mrf.mxu0
  %v106 = vadd.f32 %v33, %v105
  %v107 = vpop.f32.mrf.mxu0
  %108 = vmatprep.mubr.bf16.mxu0 0
  %109 = vmatmul.mubr.bf16.gmra.mxu0 %v66
  %v110 = vpop.f32.mrf.mxu0
  %v111 = vadd.f32 %v38, %v110
  %v112 = vpop.f32.mrf.mxu0
  %v113 = vpop.f32.mrf.mxu0
  %v114 = vadd.f32 %v43, %v113
  %v115 = vpop.f32.mrf.mxu0
  %116 = vdwg.mxu0
  %117 = vst [vmem:[%s3] sm:$0xff] %v103
  %118 = vst [vmem:[%s3 + $0x8] sm:$0xff] %v106
  %119 = vst [vmem:[%s3 + $0x10] sm:$0xff] %v111
  %120 = vst [vmem:[%s3 + $0x18] sm:$0xff] %v114
  // Predicated region
  $region14: #{moc_backbone_forward.28} parent=0 // pred_check
    _
  $region15: #{moc_backbone_forward.28} parent=0 // pred_check_branch
    %122 = sbr.rel (0) target = $region17
  $region16: #{moc_backbone_forward.28} parent=0 // pred_region
    _
  $region17: #{moc_backbone_forward.28} parent=0 // pred_fallthru
    _
  // Predicated region
  $region18: #{moc_backbone_forward.28} parent=0 // pred_check
    _
  $region19: #{moc_backbone_forward.28} parent=0 // pred_check_branch
    %124 = sbr.rel (0) target = $region21
  $region20: #{moc_backbone_forward.28} parent=0 // pred_region
    _
  $region21: #{moc_backbone_forward.28} parent=0 // pred_fallthru
    _

// kernel: moc_backbone_forward.29
$region0: #{moc_backbone_forward.29}
  #allocation0 [shape = 'u32[]', space=smem, size = 0x4, offset = 0x4, fixed_abs, tag = 'smem constant byte address 0x4 - core index']
  #allocation1 [shape = 'u32[144,128]{1,0:T(1,128)}', space=vmem, size = 0x12000, scoped, tag = 'internal scratch']
  %s0 = inlined_call_operand.vmem [shape: bf16[32,288], index: 0, kind: input, shape index: {}]
  %s1 = inlined_call_operand.vmem [shape: bf16[288,128], index: 1, kind: input, shape index: {}]
  %s2 = inlined_call_operand.vmem [shape: f32[32,1], index: 2, kind: input, shape index: {}]
  %s3 = inlined_call_operand.vmem [shape: f32[32,128], index: 3, kind: input, shape index: {}]
  %s4 = inlined_call_operand.vmem [shape: f32[32,128], index: 4, kind: output, shape index: {}]
  %s5 = sld [smem:[#allocation0]]
  $region26: #{moc_backbone_forward.29} parent=0
    _
  %s7 = ssub.s32 1, %s5
  %s8 = scalar_select 0, %s7, %s5
  // Predicated region
  $region2: #{moc_backbone_forward.29} parent=0 // pred_check
    _
  $region3: #{moc_backbone_forward.29} parent=0 // pred_check_branch
    %10 = sbr.rel (0) target = $region5
  $region4: #{moc_backbone_forward.29} parent=0 // pred_region
    _
  $region5: #{moc_backbone_forward.29} parent=0 // pred_fallthru
    _
  // Predicated region
  $region6: #{moc_backbone_forward.29} parent=0 // pred_check
    _
  $region7: #{moc_backbone_forward.29} parent=0 // pred_check_branch
    %12 = sbr.rel (0) target = $region9
  $region8: #{moc_backbone_forward.29} parent=0 // pred_region
    _
  $region9: #{moc_backbone_forward.29} parent=0 // pred_fallthru
    _
  // Predicated region
  $region10: #{moc_backbone_forward.29} parent=0 // pred_check
    _
  $region11: #{moc_backbone_forward.29} parent=0 // pred_check_branch
    %14 = sbr.rel (0) target = $region13
  $region12: #{moc_backbone_forward.29} parent=0 // pred_region
    _
  $region13: #{moc_backbone_forward.29} parent=0 // pred_fallthru
    _
  // Predicated region
  $region14: #{moc_backbone_forward.29} parent=0 // pred_check
    _
  $region15: #{moc_backbone_forward.29} parent=0 // pred_check_branch
    %16 = sbr.rel (0) target = $region17
  $region16: #{moc_backbone_forward.29} parent=0 // pred_region
    _
  $region17: #{moc_backbone_forward.29} parent=0 // pred_fallthru
    _
  %v18 = vld [vmem:[%s0] sm:$0xff]
  %v19 = vld [vmem:[%s0 + $0x8] sm:$0xf]
  %v20 = vld [vmem:[%s0 + $0xc] sm:$0xff]
  %v21 = vld [vmem:[%s0 + $0x14] sm:$0xf]
  %v22 = vld [vmem:[%s0 + $0x18] sm:$0xff]
  %v23 = vld [vmem:[%s0 + $0x20] sm:$0xf]
  %v24 = vld [vmem:[%s0 + $0x24] sm:$0xff]
  %v25 = vld [vmem:[%s0 + $0x2c] sm:$0xf]
  %v26 = vld [vmem:[%s1] sm:$0xf]
  %v27 = vld [vmem:[%s1 + $0x4] sm:$0xf]
  %v28 = vld [vmem:[%s1 + $0x8] sm:$0xf]
  %v29 = vld [vmem:[%s1 + $0xc] sm:$0xf]
  %v30 = vld [vmem:[%s1 + $0x10] sm:$0xf]
  %v31 = vld [vmem:[%s1 + $0x14] sm:$0xf]
  %v32 = vld [vmem:[%s1 + $0x18] sm:$0xf]
  %v33 = vld [vmem:[%s1 + $0x1c] sm:$0xf]
  %v34 = vld [vmem:[%s1 + $0x20] sm:$0xf]
  %v35 = vld [vmem:[%s1 + $0x24] sm:$0xf]
  %v36 = vld [vmem:[%s1 + $0x28] sm:$0xf]
  %v37 = vld [vmem:[%s1 + $0x2c] sm:$0xf]
  %v38 = vld [vmem:[%s1 + $0x30] sm:$0xf]
  %v39 = vld [vmem:[%s1 + $0x34] sm:$0xf]
  %v40 = vld [vmem:[%s1 + $0x38] sm:$0xf]
  %v41 = vld [vmem:[%s1 + $0x3c] sm:$0xf]
  %v42 = vld [vmem:[%s1 + $0x40] sm:$0xf]
  %v43 = vld [vmem:[%s1 + $0x44] sm:$0xf]
  %v44 = vld [vmem:[%s1 + $0x48] sm:$0xf]
  %v45 = vld [vmem:[%s1 + $0x4c] sm:$0xf]
  %v46 = vld [vmem:[%s1 + $0x50] sm:$0xf]
  %v47 = vld [vmem:[%s1 + $0x54] sm:$0xf]
  %v48 = vld [vmem:[%s1 + $0x58] sm:$0xf]
  %v49 = vld [vmem:[%s1 + $0x5c] sm:$0xf]
  %v50 = vld [vmem:[%s1 + $0x60] sm:$0xf]
  %v51 = vld [vmem:[%s1 + $0x64] sm:$0xf]
  %v52 = vld [vmem:[%s1 + $0x68] sm:$0xf]
  %v53 = vld [vmem:[%s1 + $0x6c] sm:$0xf]
  %v54 = vld [vmem:[%s1 + $0x70] sm:$0xf]
  %v55 = vld [vmem:[%s1 + $0x74] sm:$0xf]
  %v56 = vld [vmem:[%s1 + $0x78] sm:$0xf]
  %v57 = vld [vmem:[%s1 + $0x7c] sm:$0xf]
  %v58 = vld [vmem:[%s1 + $0x80] sm:$0xf]
  %v59 = vld [vmem:[%s1 + $0x84] sm:$0xf]
  %v60 = vld [vmem:[%s1 + $0x88] sm:$0xf]
  %v61 = vld [vmem:[%s1 + $0x8c] sm:$0xf]
  %v62 = vld [vmem:[%s2] sm:$0xff]
  %v63 = vld [vmem:[%s2 + $0x8] sm:$0xff]
  %v64 = vld [vmem:[%s2 + $0x10] sm:$0xff]
  %v65 = vld [vmem:[%s2 + $0x18] sm:$0xff]
  %67 = vset.pattern.permute.xlu0 0
  %68 = vperm.xlu0 %67, %v62
  %v69 = vpop.permute.xlu0 %68
  %72 = vset.pattern.permute.xlu0 0
  %73 = vperm.xlu0 %72, %v63
  %v74 = vpop.permute.xlu0 %73
  %77 = vset.pattern.permute.xlu0 0
  %78 = vperm.xlu0 %77, %v64
  %v79 = vpop.permute.xlu0 %78
  %82 = vset.pattern.permute.xlu0 0
  %83 = vperm.xlu0 %82, %v65
  %v84 = vpop.permute.xlu0 %83
  %v94 = vunpack.c.l.b16 %v18
  %v95 = vunpack.c.h.b16 %v18
  %v96 = vunpack.c.l.b16 %v19
  %v97 = vunpack.c.l.b16 %v20
  %v98 = vunpack.c.h.b16 %v20
  %v99 = vunpack.c.l.b16 %v21
  %v100 = vunpack.c.l.b16 %v22
  %v101 = vunpack.c.h.b16 %v22
  %v102 = vunpack.c.l.b16 %v23
  %v103 = vunpack.c.l.b16 %v24
  %v104 = vunpack.c.h.b16 %v24
  %v105 = vunpack.c.l.b16 %v25
  %v106 = vpack.c.b16 %v97, %v94
  %v107 = vpack.c.b16 %v98, %v95
  %v108 = vpack.c.b16 %v99, %v96
  %v109 = vpack.c.b16 %v103, %v100
  %v110 = vpack.c.b16 %v104, %v101
  %v111 = vpack.c.b16 %v105, %v102
  %v152 = vunpack.c.l.b16 %v26
  %v153 = vunpack.c.l.b16 %v27
  %v154 = vunpack.c.l.b16 %v28
  %v155 = vunpack.c.l.b16 %v29
  %v156 = vunpack.c.l.b16 %v30
  %v157 = vunpack.c.l.b16 %v31
  %v158 = vunpack.c.l.b16 %v32
  %v159 = vunpack.c.l.b16 %v33
  %v160 = vunpack.c.l.b16 %v34
  %v161 = vunpack.c.l.b16 %v35
  %v162 = vunpack.c.l.b16 %v36
  %v163 = vunpack.c.l.b16 %v37
  %v164 = vunpack.c.l.b16 %v38
  %v165 = vunpack.c.l.b16 %v39
  %v166 = vunpack.c.l.b16 %v40
  %v167 = vunpack.c.l.b16 %v41
  %v168 = vunpack.c.l.b16 %v42
  %v169 = vunpack.c.l.b16 %v43
  %v170 = vunpack.c.l.b16 %v44
  %v171 = vunpack.c.l.b16 %v45
  %v172 = vunpack.c.l.b16 %v46
  %v173 = vunpack.c.l.b16 %v47
  %v174 = vunpack.c.l.b16 %v48
  %v175 = vunpack.c.l.b16 %v49
  %v176 = vunpack.c.l.b16 %v50
  %v177 = vunpack.c.l.b16 %v51
  %v178 = vunpack.c.l.b16 %v52
  %v179 = vunpack.c.l.b16 %v53
  %v180 = vunpack.c.l.b16 %v54
  %v181 = vunpack.c.l.b16 %v55
  %v182 = vunpack.c.l.b16 %v56
  %v183 = vunpack.c.l.b16 %v57
  %v184 = vunpack.c.l.b16 %v58
  %v185 = vunpack.c.l.b16 %v59
  %v186 = vunpack.c.l.b16 %v60
  %v187 = vunpack.c.l.b16 %v61
  %v188 = vpack.c.b16 %v153, %v152
  %v189 = vpack.c.b16 %v155, %v154
  %v190 = vpack.c.b16 %v157, %v156
  %v191 = vpack.c.b16 %v159, %v158
  %v192 = vpack.c.b16 %v161, %v160
  %v193 = vpack.c.b16 %v163, %v162
  %v194 = vpack.c.b16 %v165, %v164
  %v195 = vpack.c.b16 %v167, %v166
  %v196 = vpack.c.b16 %v169, %v168
  %v197 = vpack.c.b16 %v171, %v170
  %v198 = vpack.c.b16 %v173, %v172
  %v199 = vpack.c.b16 %v175, %v174
  %v200 = vpack.c.b16 %v177, %v176
  %v201 = vpack.c.b16 %v179, %v178
  %v202 = vpack.c.b16 %v181, %v180
  %v203 = vpack.c.b16 %v183, %v182
  %v204 = vpack.c.b16 %v185, %v184
  %v205 = vpack.c.b16 %v187, %v186
  %vm224 = vcmask 261120
  %v226 = vsel %vm224, %v108, 0
  %v229 = vsel %vm224, %v111, 0
  %231 = vmatprep.subr.bf16.mxu0 0
  %232 = vmatpush1.bf16.msra.mxu0 %v195
  %233 = vmatprep.subr.bf16.mxu0 0
  %234 = vmatpush1.bf16.msra.mxu0 %v194
  %235 = vmatprep.subr.bf16.mxu0 0
  %236 = vmatpush1.bf16.msra.mxu0 %v193
  %237 = vmatprep.subr.bf16.mxu0 0
  %238 = vmatpush1.bf16.msra.mxu0 %v192
  %239 = vmatprep.subr.bf16.mxu0 0
  %240 = vmatpush1.bf16.msra.mxu0 %v191
  %241 = vmatprep.subr.bf16.mxu0 0
  %242 = vmatpush1.bf16.msra.mxu0 %v190
  %243 = vmatprep.subr.bf16.mxu0 0
  %244 = vmatpush1.bf16.msra.mxu0 %v189
  %245 = vmatprep.subr.bf16.mxu0 0
  %246 = vmatpush1.bf16.msra.mxu0 %v188
  %247 = vmatprep.subr.bf16.mxu0 0
  %248 = vmatpush2.bf16.msra.mxu0 %v203
  %249 = vmatprep.subr.bf16.mxu0 0
  %250 = vmatpush2.bf16.msra.mxu0 %v202
  %251 = vmatprep.subr.bf16.mxu0 0
  %252 = vmatpush2.bf16.msra.mxu0 %v201
  %253 = vmatprep.subr.bf16.mxu0 0
  %254 = vmatpush2.bf16.msra.mxu0 %v200
  %255 = vmatprep.subr.bf16.mxu0 0
  %256 = vmatpush2.bf16.msra.mxu0 %v199
  %257 = vmatprep.subr.bf16.mxu0 0
  %258 = vmatpush2.bf16.msra.mxu0 %v198
  %259 = vmatprep.subr.bf16.mxu0 0
  %260 = vmatpush2.bf16.msra.mxu0 %v197
  %261 = vmatprep.subr.bf16.mxu0 0
  %262 = vmatpush2.bf16.msra.mxu0 %v196
  %263 = vmatprep.mubr.bf16.mxu0 %v107
  %264 = vmatmul.mubr.bf16.gmra.mxu0 %v106
  %v265 = vpop.f32.mrf.mxu0
  %v266 = vadd.f32 %v69, %v265
  %v267 = vpop.f32.mrf.mxu0
  %v268 = vpop.f32.mrf.mxu0
  %v269 = vadd.f32 %v74, %v268
  %v270 = vpop.f32.mrf.mxu0
  %271 = vmatprep.mubr.bf16.mxu0 %v110
  %272 = vmatmul.mubr.bf16.gmra.mxu0 %v109
  %v273 = vpop.f32.mrf.mxu0
  %v274 = vadd.f32 %v79, %v273
  %v275 = vpop.f32.mrf.mxu0
  %v276 = vpop.f32.mrf.mxu0
  %v277 = vadd.f32 %v84, %v276
  %v278 = vpop.f32.mrf.mxu0
  %279 = vdwg.mxu0
  %280 = vmatprep.subr.bf16.mxu0 0
  %281 = vmatpush1.bf16.msra.mxu0 0
  %282 = vmatprep.subr.bf16.mxu0 0
  %283 = vmatpush1.bf16.msra.mxu0 0
  %284 = vmatprep.subr.bf16.mxu0 0
  %285 = vmatpush1.bf16.msra.mxu0 0
  %286 = vmatprep.subr.bf16.mxu0 0
  %287 = vmatpush1.bf16.msra.mxu0 0
  %288 = vmatprep.subr.bf16.mxu0 0
  %289 = vmatpush1.bf16.msra.mxu0 0
  %290 = vmatprep.subr.bf16.mxu0 0
  %291 = vmatpush1.bf16.msra.mxu0 0
  %292 = vmatprep.subr.bf16.mxu0 0
  %293 = vmatpush1.bf16.msra.mxu0 %v205
  %294 = vmatprep.subr.bf16.mxu0 0
  %295 = vmatpush1.bf16.msra.mxu0 %v204
  %296 = vmatprep.subr.bf16.mxu0 0
  %297 = vmatpush2.bf16.msra.mxu0 0
  %298 = vmatprep.subr.bf16.mxu0 0
  %299 = vmatpush2.bf16.msra.mxu0 0
  %300 = vmatprep.subr.bf16.mxu0 0
  %301 = vmatpush2.bf16.msra.mxu0 0
  %302 = vmatprep.subr.bf16.mxu0 0
  %303 = vmatpush2.bf16.msra.mxu0 0
  %304 = vmatprep.subr.bf16.mxu0 0
  %305 = vmatpush2.bf16.msra.mxu0 0
  %306 = vmatprep.subr.bf16.mxu0 0
  %307 = vmatpush2.bf16.msra.mxu0 0
  %308 = vmatprep.subr.bf16.mxu0 0
  %309 = vmatpush2.bf16.msra.mxu0 0
  %310 = vmatprep.subr.bf16.mxu0 0
  %311 = vmatpush2.bf16.msra.mxu0 0
  %312 = vmatprep.mubr.bf16.mxu0 0
  %313 = vmatmul.mubr.bf16.gmra.mxu0 %v226
  %v314 = vpop.f32.mrf.mxu0
  %v315 = vadd.f32 %v266, %v314
  %v316 = vpop.f32.mrf.mxu0
  %v317 = vpop.f32.mrf.mxu0
  %v318 = vadd.f32 %v269, %v317
  %v319 = vpop.f32.mrf.mxu0
  %320 = vmatprep.mubr.bf16.mxu0 0
  %321 = vmatmul.mubr.bf16.gmra.mxu0 %v229
  %v322 = vpop.f32.mrf.mxu0
  %v323 = vadd.f32 %v274, %v322
  %v324 = vpop.f32.mrf.mxu0
  %v325 = vpop.f32.mrf.mxu0
  %v326 = vadd.f32 %v277, %v325
  %v327 = vpop.f32.mrf.mxu0
  %328 = vdwg.mxu0
  %v329 = vld [vmem:[%s3] sm:$0xff]
  %v330 = vld [vmem:[%s3 + $0x8] sm:$0xff]
  %v331 = vld [vmem:[%s3 + $0x10] sm:$0xff]
  %v332 = vld [vmem:[%s3 + $0x18] sm:$0xff]
  %v333 = vadd.f32 %v315, %v329
  %v334 = vadd.f32 %v318, %v330
  %v335 = vadd.f32 %v323, %v331
  %v336 = vadd.f32 %v326, %v332
  %v337 = vmax.f32 %v333, 0.0
  %v338 = vmax.f32 %v334, 0.0
  %v339 = vmax.f32 %v335, 0.0
  %v340 = vmax.f32 %v336, 0.0
  %341 = vst [vmem:[%s4] sm:$0xff] %v337
  %342 = vst [vmem:[%s4 + $0x8] sm:$0xff] %v338
  %343 = vst [vmem:[%s4 + $0x10] sm:$0xff] %v339
  %344 = vst [vmem:[%s4 + $0x18] sm:$0xff] %v340
  // Predicated region
  $region18: #{moc_backbone_forward.29} parent=0 // pred_check
    _
  $region19: #{moc_backbone_forward.29} parent=0 // pred_check_branch
    %346 = sbr.rel (0) target = $region21
  $region20: #{moc_backbone_forward.29} parent=0 // pred_region
    _
  $region21: #{moc_backbone_forward.29} parent=0 // pred_fallthru
    _
  // Predicated region
  $region22: #{moc_backbone_forward.29} parent=0 // pred_check
    _
  $region23: #{moc_backbone_forward.29} parent=0 // pred_check_branch
    %348 = sbr.rel (0) target = $region25
  $region24: #{moc_backbone_forward.29} parent=0 // pred_region
    _
  $region25: #{moc_backbone_forward.29} parent=0 // pred_fallthru
    _

// kernel: moc_backbone_forward.30
$region0: #{moc_backbone_forward.30}
  #allocation0 [shape = 'u32[]', space=smem, size = 0x4, offset = 0x4, fixed_abs, tag = 'smem constant byte address 0x4 - core index']
  #allocation1 [shape = 'u32[144,128]{1,0:T(1,128)}', space=vmem, size = 0x12000, scoped, tag = 'internal scratch']
  %s0 = inlined_call_operand.vmem [shape: bf16[64,288], index: 0, kind: input, shape index: {}]
  %s1 = inlined_call_operand.vmem [shape: bf16[288,128], index: 1, kind: input, shape index: {}]
  %s2 = inlined_call_operand.vmem [shape: f32[64,1], index: 2, kind: input, shape index: {}]
  %s3 = inlined_call_operand.vmem [shape: f32[64,128], index: 3, kind: output, shape index: {}]
  %s4 = sld [smem:[#allocation0]]
  $region22: #{moc_backbone_forward.30} parent=0
    _
  %s6 = ssub.s32 1, %s4
  %s7 = scalar_select 0, %s6, %s4
  // Predicated region
  $region2: #{moc_backbone_forward.30} parent=0 // pred_check
    _
  $region3: #{moc_backbone_forward.30} parent=0 // pred_check_branch
    %9 = sbr.rel (0) target = $region5
  $region4: #{moc_backbone_forward.30} parent=0 // pred_region
    _
  $region5: #{moc_backbone_forward.30} parent=0 // pred_fallthru
    _
  // Predicated region
  $region6: #{moc_backbone_forward.30} parent=0 // pred_check
    _
  $region7: #{moc_backbone_forward.30} parent=0 // pred_check_branch
    %11 = sbr.rel (0) target = $region9
  $region8: #{moc_backbone_forward.30} parent=0 // pred_region
    _
  $region9: #{moc_backbone_forward.30} parent=0 // pred_fallthru
    _
  // Predicated region
  $region10: #{moc_backbone_forward.30} parent=0 // pred_check
    _
  $region11: #{moc_backbone_forward.30} parent=0 // pred_check_branch
    %13 = sbr.rel (0) target = $region13
  $region12: #{moc_backbone_forward.30} parent=0 // pred_region
    _
  $region13: #{moc_backbone_forward.30} parent=0 // pred_fallthru
    _
  %v15 = vld [vmem:[%s0] sm:$0xff]
  %v16 = vld [vmem:[%s0 + $0x8] sm:$0xf]
  %v17 = vld [vmem:[%s0 + $0xc] sm:$0xff]
  %v18 = vld [vmem:[%s0 + $0x14] sm:$0xf]
  %v19 = vld [vmem:[%s0 + $0x18] sm:$0xff]
  %v20 = vld [vmem:[%s0 + $0x20] sm:$0xf]
  %v21 = vld [vmem:[%s0 + $0x24] sm:$0xff]
  %v22 = vld [vmem:[%s0 + $0x2c] sm:$0xf]
  %v23 = vld [vmem:[%s0 + $0x30] sm:$0xff]
  %v24 = vld [vmem:[%s0 + $0x38] sm:$0xf]
  %v25 = vld [vmem:[%s0 + $0x3c] sm:$0xff]
  %v26 = vld [vmem:[%s0 + $0x44] sm:$0xf]
  %v27 = vld [vmem:[%s0 + $0x48] sm:$0xff]
  %v28 = vld [vmem:[%s0 + $0x50] sm:$0xf]
  %v29 = vld [vmem:[%s0 + $0x54] sm:$0xff]
  %v30 = vld [vmem:[%s0 + $0x5c] sm:$0xf]
  %v31 = vld [vmem:[%s1] sm:$0xf]
  %v32 = vld [vmem:[%s1 + $0x4] sm:$0xf]
  %v33 = vld [vmem:[%s1 + $0x8] sm:$0xf]
  %v34 = vld [vmem:[%s1 + $0xc] sm:$0xf]
  %v35 = vld [vmem:[%s1 + $0x10] sm:$0xf]
  %v36 = vld [vmem:[%s1 + $0x14] sm:$0xf]
  %v37 = vld [vmem:[%s1 + $0x18] sm:$0xf]
  %v38 = vld [vmem:[%s1 + $0x1c] sm:$0xf]
  %v39 = vld [vmem:[%s1 + $0x20] sm:$0xf]
  %v40 = vld [vmem:[%s1 + $0x24] sm:$0xf]
  %v41 = vld [vmem:[%s1 + $0x28] sm:$0xf]
  %v42 = vld [vmem:[%s1 + $0x2c] sm:$0xf]
  %v43 = vld [vmem:[%s1 + $0x30] sm:$0xf]
  %v44 = vld [vmem:[%s1 + $0x34] sm:$0xf]
  %v45 = vld [vmem:[%s1 + $0x38] sm:$0xf]
  %v46 = vld [vmem:[%s1 + $0x3c] sm:$0xf]
  %v47 = vld [vmem:[%s1 + $0x40] sm:$0xf]
  %v48 = vld [vmem:[%s1 + $0x44] sm:$0xf]
  %v49 = vld [vmem:[%s1 + $0x48] sm:$0xf]
  %v50 = vld [vmem:[%s1 + $0x4c] sm:$0xf]
  %v51 = vld [vmem:[%s1 + $0x50] sm:$0xf]
  %v52 = vld [vmem:[%s1 + $0x54] sm:$0xf]
  %v53 = vld [vmem:[%s1 + $0x58] sm:$0xf]
  %v54 = vld [vmem:[%s1 + $0x5c] sm:$0xf]
  %v55 = vld [vmem:[%s1 + $0x60] sm:$0xf]
  %v56 = vld [vmem:[%s1 + $0x64] sm:$0xf]
  %v57 = vld [vmem:[%s1 + $0x68] sm:$0xf]
  %v58 = vld [vmem:[%s1 + $0x6c] sm:$0xf]
  %v59 = vld [vmem:[%s1 + $0x70] sm:$0xf]
  %v60 = vld [vmem:[%s1 + $0x74] sm:$0xf]
  %v61 = vld [vmem:[%s1 + $0x78] sm:$0xf]
  %v62 = vld [vmem:[%s1 + $0x7c] sm:$0xf]
  %v63 = vld [vmem:[%s1 + $0x80] sm:$0xf]
  %v64 = vld [vmem:[%s1 + $0x84] sm:$0xf]
  %v65 = vld [vmem:[%s1 + $0x88] sm:$0xf]
  %v66 = vld [vmem:[%s1 + $0x8c] sm:$0xf]
  %v67 = vld [vmem:[%s2] sm:$0xff]
  %v68 = vld [vmem:[%s2 + $0x8] sm:$0xff]
  %v69 = vld [vmem:[%s2 + $0x10] sm:$0xff]
  %v70 = vld [vmem:[%s2 + $0x18] sm:$0xff]
  %v71 = vld [vmem:[%s2 + $0x20] sm:$0xff]
  %v72 = vld [vmem:[%s2 + $0x28] sm:$0xff]
  %v73 = vld [vmem:[%s2 + $0x30] sm:$0xff]
  %v74 = vld [vmem:[%s2 + $0x38] sm:$0xff]
  %76 = vset.pattern.permute.xlu0 0
  %77 = vperm.xlu0 %76, %v67
  %v78 = vpop.permute.xlu0 %77
  %81 = vset.pattern.permute.xlu0 0
  %82 = vperm.xlu0 %81, %v68
  %v83 = vpop.permute.xlu0 %82
  %86 = vset.pattern.permute.xlu0 0
  %87 = vperm.xlu0 %86, %v69
  %v88 = vpop.permute.xlu0 %87
  %91 = vset.pattern.permute.xlu0 0
  %92 = vperm.xlu0 %91, %v70
  %v93 = vpop.permute.xlu0 %92
  %96 = vset.pattern.permute.xlu0 0
  %97 = vperm.xlu0 %96, %v71
  %v98 = vpop.permute.xlu0 %97
  %101 = vset.pattern.permute.xlu0 0
  %102 = vperm.xlu0 %101, %v72
  %v103 = vpop.permute.xlu0 %102
  %106 = vset.pattern.permute.xlu0 0
  %107 = vperm.xlu0 %106, %v73
  %v108 = vpop.permute.xlu0 %107
  %111 = vset.pattern.permute.xlu0 0
  %112 = vperm.xlu0 %111, %v74
  %v113 = vpop.permute.xlu0 %112
  %v131 = vunpack.c.l.b16 %v15
  %v132 = vunpack.c.h.b16 %v15
  %v133 = vunpack.c.l.b16 %v16
  %v134 = vunpack.c.l.b16 %v17
  %v135 = vunpack.c.h.b16 %v17
  %v136 = vunpack.c.l.b16 %v18
  %v137 = vunpack.c.l.b16 %v19
  %v138 = vunpack.c.h.b16 %v19
  %v139 = vunpack.c.l.b16 %v20
  %v140 = vunpack.c.l.b16 %v21
  %v141 = vunpack.c.h.b16 %v21
  %v142 = vunpack.c.l.b16 %v22
  %v143 = vunpack.c.l.b16 %v23
  %v144 = vunpack.c.h.b16 %v23
  %v145 = vunpack.c.l.b16 %v24
  %v146 = vunpack.c.l.b16 %v25
  %v147 = vunpack.c.h.b16 %v25
  %v148 = vunpack.c.l.b16 %v26
  %v149 = vunpack.c.l.b16 %v27
  %v150 = vunpack.c.h.b16 %v27
  %v151 = vunpack.c.l.b16 %v28
  %v152 = vunpack.c.l.b16 %v29
  %v153 = vunpack.c.h.b16 %v29
  %v154 = vunpack.c.l.b16 %v30
  %v155 = vpack.c.b16 %v134, %v131
  %v156 = vpack.c.b16 %v135, %v132
  %v157 = vpack.c.b16 %v136, %v133
  %v158 = vpack.c.b16 %v140, %v137
  %v159 = vpack.c.b16 %v141, %v138
  %v160 = vpack.c.b16 %v142, %v139
  %v161 = vpack.c.b16 %v146, %v143
  %v162 = vpack.c.b16 %v147, %v144
  %v163 = vpack.c.b16 %v148, %v145
  %v164 = vpack.c.b16 %v152, %v149
  %v165 = vpack.c.b16 %v153, %v150
  %v166 = vpack.c.b16 %v154, %v151
  %v211 = vunpack.c.l.b16 %v31
  %v212 = vunpack.c.l.b16 %v32
  %v213 = vunpack.c.l.b16 %v33
  %v214 = vunpack.c.l.b16 %v34
  %v215 = vunpack.c.l.b16 %v35
  %v216 = vunpack.c.l.b16 %v36
  %v217 = vunpack.c.l.b16 %v37
  %v218 = vunpack.c.l.b16 %v38
  %v219 = vunpack.c.l.b16 %v39
  %v220 = vunpack.c.l.b16 %v40
  %v221 = vunpack.c.l.b16 %v41
  %v222 = vunpack.c.l.b16 %v42
  %v223 = vunpack.c.l.b16 %v43
  %v224 = vunpack.c.l.b16 %v44
  %v225 = vunpack.c.l.b16 %v45
  %v226 = vunpack.c.l.b16 %v46
  %v227 = vunpack.c.l.b16 %v47
  %v228 = vunpack.c.l.b16 %v48
  %v229 = vunpack.c.l.b16 %v49
  %v230 = vunpack.c.l.b16 %v50
  %v231 = vunpack.c.l.b16 %v51
  %v232 = vunpack.c.l.b16 %v52
  %v233 = vunpack.c.l.b16 %v53
  %v234 = vunpack.c.l.b16 %v54
  %v235 = vunpack.c.l.b16 %v55
  %v236 = vunpack.c.l.b16 %v56
  %v237 = vunpack.c.l.b16 %v57
  %v238 = vunpack.c.l.b16 %v58
  %v239 = vunpack.c.l.b16 %v59
  %v240 = vunpack.c.l.b16 %v60
  %v241 = vunpack.c.l.b16 %v61
  %v242 = vunpack.c.l.b16 %v62
  %v243 = vunpack.c.l.b16 %v63
  %v244 = vunpack.c.l.b16 %v64
  %v245 = vunpack.c.l.b16 %v65
  %v246 = vunpack.c.l.b16 %v66
  %v247 = vpack.c.b16 %v212, %v211
  %v248 = vpack.c.b16 %v214, %v213
  %v249 = vpack.c.b16 %v216, %v215
  %v250 = vpack.c.b16 %v218, %v217
  %v251 = vpack.c.b16 %v220, %v219
  %v252 = vpack.c.b16 %v222, %v221
  %v253 = vpack.c.b16 %v224, %v223
  %v254 = vpack.c.b16 %v226, %v225
  %v255 = vpack.c.b16 %v228, %v227
  %v256 = vpack.c.b16 %v230, %v229
  %v257 = vpack.c.b16 %v232, %v231
  %v258 = vpack.c.b16 %v234, %v233
  %v259 = vpack.c.b16 %v236, %v235
  %v260 = vpack.c.b16 %v238, %v237
  %v261 = vpack.c.b16 %v240, %v239
  %v262 = vpack.c.b16 %v242, %v241
  %v263 = vpack.c.b16 %v244, %v243
  %v264 = vpack.c.b16 %v246, %v245
  %vm283 = vcmask 261120
  %v285 = vsel %vm283, %v157, 0
  %v288 = vsel %vm283, %v160, 0
  %v291 = vsel %vm283, %v163, 0
  %v294 = vsel %vm283, %v166, 0
  %296 = vmatprep.subr.bf16.mxu0 0
  %297 = vmatpush1.bf16.msra.mxu0 %v254
  %298 = vmatprep.subr.bf16.mxu0 0
  %299 = vmatpush1.bf16.msra.mxu0 %v253
  %300 = vmatprep.subr.bf16.mxu0 0
  %301 = vmatpush1.bf16.msra.mxu0 %v252
  %302 = vmatprep.subr.bf16.mxu0 0
  %303 = vmatpush1.bf16.msra.mxu0 %v251
  %304 = vmatprep.subr.bf16.mxu0 0
  %305 = vmatpush1.bf16.msra.mxu0 %v250
  %306 = vmatprep.subr.bf16.mxu0 0
  %307 = vmatpush1.bf16.msra.mxu0 %v249
  %308 = vmatprep.subr.bf16.mxu0 0
  %309 = vmatpush1.bf16.msra.mxu0 %v248
  %310 = vmatprep.subr.bf16.mxu0 0
  %311 = vmatpush1.bf16.msra.mxu0 %v247
  %312 = vmatprep.subr.bf16.mxu0 0
  %313 = vmatpush2.bf16.msra.mxu0 %v262
  %314 = vmatprep.subr.bf16.mxu0 0
  %315 = vmatpush2.bf16.msra.mxu0 %v261
  %316 = vmatprep.subr.bf16.mxu0 0
  %317 = vmatpush2.bf16.msra.mxu0 %v260
  %318 = vmatprep.subr.bf16.mxu0 0
  %319 = vmatpush2.bf16.msra.mxu0 %v259
  %320 = vmatprep.subr.bf16.mxu0 0
  %321 = vmatpush2.bf16.msra.mxu0 %v258
  %322 = vmatprep.subr.bf16.mxu0 0
  %323 = vmatpush2.bf16.msra.mxu0 %v257
  %324 = vmatprep.subr.bf16.mxu0 0
  %325 = vmatpush2.bf16.msra.mxu0 %v256
  %326 = vmatprep.subr.bf16.mxu0 0
  %327 = vmatpush2.bf16.msra.mxu0 %v255
  %328 = vmatprep.mubr.bf16.mxu0 %v156
  %329 = vmatmul.mubr.bf16.gmra.mxu0 %v155
  %v330 = vpop.f32.mrf.mxu0
  %v331 = vadd.f32 %v78, %v330
  %v332 = vpop.f32.mrf.mxu0
  %v333 = vpop.f32.mrf.mxu0
  %v334 = vadd.f32 %v83, %v333
  %v335 = vpop.f32.mrf.mxu0
  %336 = vmatprep.mubr.bf16.mxu0 %v159
  %337 = vmatmul.mubr.bf16.gmra.mxu0 %v158
  %v338 = vpop.f32.mrf.mxu0
  %v339 = vadd.f32 %v88, %v338
  %v340 = vpop.f32.mrf.mxu0
  %v341 = vpop.f32.mrf.mxu0
  %v342 = vadd.f32 %v93, %v341
  %v343 = vpop.f32.mrf.mxu0
  %344 = vmatprep.mubr.bf16.mxu0 %v162
  %345 = vmatmul.mubr.bf16.gmra.mxu0 %v161
  %v346 = vpop.f32.mrf.mxu0
  %v347 = vadd.f32 %v98, %v346
  %v348 = vpop.f32.mrf.mxu0
  %v349 = vpop.f32.mrf.mxu0
  %v350 = vadd.f32 %v103, %v349
  %v351 = vpop.f32.mrf.mxu0
  %352 = vmatprep.mubr.bf16.mxu0 %v165
  %353 = vmatmul.mubr.bf16.gmra.mxu0 %v164
  %v354 = vpop.f32.mrf.mxu0
  %v355 = vadd.f32 %v108, %v354
  %v356 = vpop.f32.mrf.mxu0
  %v357 = vpop.f32.mrf.mxu0
  %v358 = vadd.f32 %v113, %v357
  %v359 = vpop.f32.mrf.mxu0
  %360 = vdwg.mxu0
  %361 = vmatprep.subr.bf16.mxu0 0
  %362 = vmatpush1.bf16.msra.mxu0 0
  %363 = vmatprep.subr.bf16.mxu0 0
  %364 = vmatpush1.bf16.msra.mxu0 0
  %365 = vmatprep.subr.bf16.mxu0 0
  %366 = vmatpush1.bf16.msra.mxu0 0
  %367 = vmatprep.subr.bf16.mxu0 0
  %368 = vmatpush1.bf16.msra.mxu0 0
  %369 = vmatprep.subr.bf16.mxu0 0
  %370 = vmatpush1.bf16.msra.mxu0 0
  %371 = vmatprep.subr.bf16.mxu0 0
  %372 = vmatpush1.bf16.msra.mxu0 0
  %373 = vmatprep.subr.bf16.mxu0 0
  %374 = vmatpush1.bf16.msra.mxu0 %v264
  %375 = vmatprep.subr.bf16.mxu0 0
  %376 = vmatpush1.bf16.msra.mxu0 %v263
  %377 = vmatprep.subr.bf16.mxu0 0
  %378 = vmatpush2.bf16.msra.mxu0 0
  %379 = vmatprep.subr.bf16.mxu0 0
  %380 = vmatpush2.bf16.msra.mxu0 0
  %381 = vmatprep.subr.bf16.mxu0 0
  %382 = vmatpush2.bf16.msra.mxu0 0
  %383 = vmatprep.subr.bf16.mxu0 0
  %384 = vmatpush2.bf16.msra.mxu0 0
  %385 = vmatprep.subr.bf16.mxu0 0
  %386 = vmatpush2.bf16.msra.mxu0 0
  %387 = vmatprep.subr.bf16.mxu0 0
  %388 = vmatpush2.bf16.msra.mxu0 0
  %389 = vmatprep.subr.bf16.mxu0 0
  %390 = vmatpush2.bf16.msra.mxu0 0
  %391 = vmatprep.subr.bf16.mxu0 0
  %392 = vmatpush2.bf16.msra.mxu0 0
  %393 = vmatprep.mubr.bf16.mxu0 0
  %394 = vmatmul.mubr.bf16.gmra.mxu0 %v285
  %v395 = vpop.f32.mrf.mxu0
  %v396 = vadd.f32 %v331, %v395
  %v397 = vpop.f32.mrf.mxu0
  %v398 = vpop.f32.mrf.mxu0
  %v399 = vadd.f32 %v334, %v398
  %v400 = vpop.f32.mrf.mxu0
  %401 = vmatprep.mubr.bf16.mxu0 0
  %402 = vmatmul.mubr.bf16.gmra.mxu0 %v288
  %v403 = vpop.f32.mrf.mxu0
  %v404 = vadd.f32 %v339, %v403
  %v405 = vpop.f32.mrf.mxu0
  %v406 = vpop.f32.mrf.mxu0
  %v407 = vadd.f32 %v342, %v406
  %v408 = vpop.f32.mrf.mxu0
  %409 = vmatprep.mubr.bf16.mxu0 0
  %410 = vmatmul.mubr.bf16.gmra.mxu0 %v291
  %v411 = vpop.f32.mrf.mxu0
  %v412 = vadd.f32 %v347, %v411
  %v413 = vpop.f32.mrf.mxu0
  %v414 = vpop.f32.mrf.mxu0
  %v415 = vadd.f32 %v350, %v414
  %v416 = vpop.f32.mrf.mxu0
  %417 = vmatprep.mubr.bf16.mxu0 0
  %418 = vmatmul.mubr.bf16.gmra.mxu0 %v294
  %v419 = vpop.f32.mrf.mxu0
  %v420 = vadd.f32 %v355, %v419
  %v421 = vpop.f32.mrf.mxu0
  %v422 = vpop.f32.mrf.mxu0
  %v423 = vadd.f32 %v358, %v422
  %v424 = vpop.f32.mrf.mxu0
  %425 = vdwg.mxu0
  %v426 = vmax.f32 %v396, 0.0
  %v427 = vmax.f32 %v399, 0.0
  %v428 = vmax.f32 %v404, 0.0
  %v429 = vmax.f32 %v407, 0.0
  %v430 = vmax.f32 %v412, 0.0
  %v431 = vmax.f32 %v415, 0.0
  %v432 = vmax.f32 %v420, 0.0
  %v433 = vmax.f32 %v423, 0.0
  %434 = vst [vmem:[%s3] sm:$0xff] %v426
  %435 = vst [vmem:[%s3 + $0x8] sm:$0xff] %v427
  %436 = vst [vmem:[%s3 + $0x10] sm:$0xff] %v428
  %437 = vst [vmem:[%s3 + $0x18] sm:$0xff] %v429
  %438 = vst [vmem:[%s3 + $0x20] sm:$0xff] %v430
  %439 = vst [vmem:[%s3 + $0x28] sm:$0xff] %v431
  %440 = vst [vmem:[%s3 + $0x30] sm:$0xff] %v432
  %441 = vst [vmem:[%s3 + $0x38] sm:$0xff] %v433
  // Predicated region
  $region14: #{moc_backbone_forward.30} parent=0 // pred_check
    _
  $region15: #{moc_backbone_forward.30} parent=0 // pred_check_branch
    %443 = sbr.rel (0) target = $region17
  $region16: #{moc_backbone_forward.30} parent=0 // pred_region
    _
  $region17: #{moc_backbone_forward.30} parent=0 // pred_fallthru
    _
  // Predicated region
  $region18: #{moc_backbone_forward.30} parent=0 // pred_check
    _
  $region19: #{moc_backbone_forward.30} parent=0 // pred_check_branch
    %445 = sbr.rel (0) target = $region21
  $region20: #{moc_backbone_forward.30} parent=0 // pred_region
    _
  $region21: #{moc_backbone_forward.30} parent=0 // pred_fallthru
    _

// kernel: moc_backbone_forward.31
$region0: #{moc_backbone_forward.31}
  #allocation0 [shape = 'u32[]', space=smem, size = 0x4, offset = 0x4, fixed_abs, tag = 'smem constant byte address 0x4 - core index']
  #allocation1 [shape = 'u32[144,128]{1,0:T(1,128)}', space=vmem, size = 0x12000, scoped, tag = 'internal scratch']
  %s0 = inlined_call_operand.vmem [shape: bf16[64,32], index: 0, kind: input, shape index: {}]
  %s1 = inlined_call_operand.vmem [shape: bf16[32,128], index: 1, kind: input, shape index: {}]
  %s2 = inlined_call_operand.vmem [shape: f32[64,1], index: 2, kind: input, shape index: {}]
  %s3 = inlined_call_operand.vmem [shape: f32[64,128], index: 3, kind: output, shape index: {}]
  %s4 = sld [smem:[#allocation0]]
  $region22: #{moc_backbone_forward.31} parent=0
    _
  %s6 = ssub.s32 1, %s4
  %s7 = scalar_select 0, %s6, %s4
  // Predicated region
  $region2: #{moc_backbone_forward.31} parent=0 // pred_check
    _
  $region3: #{moc_backbone_forward.31} parent=0 // pred_check_branch
    %9 = sbr.rel (0) target = $region5
  $region4: #{moc_backbone_forward.31} parent=0 // pred_region
    _
  $region5: #{moc_backbone_forward.31} parent=0 // pred_fallthru
    _
  // Predicated region
  $region6: #{moc_backbone_forward.31} parent=0 // pred_check
    _
  $region7: #{moc_backbone_forward.31} parent=0 // pred_check_branch
    %11 = sbr.rel (0) target = $region9
  $region8: #{moc_backbone_forward.31} parent=0 // pred_region
    _
  $region9: #{moc_backbone_forward.31} parent=0 // pred_fallthru
    _
  // Predicated region
  $region10: #{moc_backbone_forward.31} parent=0 // pred_check
    _
  $region11: #{moc_backbone_forward.31} parent=0 // pred_check_branch
    %13 = sbr.rel (0) target = $region13
  $region12: #{moc_backbone_forward.31} parent=0 // pred_region
    _
  $region13: #{moc_backbone_forward.31} parent=0 // pred_fallthru
    _
  %v15 = vld [vmem:[%s0] sm:$0xf]
  %v16 = vld [vmem:[%s0 + $0x4] sm:$0xf]
  %v17 = vld [vmem:[%s0 + $0x8] sm:$0xf]
  %v18 = vld [vmem:[%s0 + $0xc] sm:$0xf]
  %v19 = vld [vmem:[%s0 + $0x10] sm:$0xf]
  %v20 = vld [vmem:[%s0 + $0x14] sm:$0xf]
  %v21 = vld [vmem:[%s0 + $0x18] sm:$0xf]
  %v22 = vld [vmem:[%s0 + $0x1c] sm:$0xf]
  %v23 = vld [vmem:[%s1] sm:$0xf]
  %v24 = vld [vmem:[%s1 + $0x4] sm:$0xf]
  %v25 = vld [vmem:[%s1 + $0x8] sm:$0xf]
  %v26 = vld [vmem:[%s1 + $0xc] sm:$0xf]
  %v27 = vld [vmem:[%s2] sm:$0xff]
  %v28 = vld [vmem:[%s2 + $0x8] sm:$0xff]
  %v29 = vld [vmem:[%s2 + $0x10] sm:$0xff]
  %v30 = vld [vmem:[%s2 + $0x18] sm:$0xff]
  %v31 = vld [vmem:[%s2 + $0x20] sm:$0xff]
  %v32 = vld [vmem:[%s2 + $0x28] sm:$0xff]
  %v33 = vld [vmem:[%s2 + $0x30] sm:$0xff]
  %v34 = vld [vmem:[%s2 + $0x38] sm:$0xff]
  %36 = vset.pattern.permute.xlu0 0
  %37 = vperm.xlu0 %36, %v27
  %v38 = vpop.permute.xlu0 %37
  %41 = vset.pattern.permute.xlu0 0
  %42 = vperm.xlu0 %41, %v28
  %v43 = vpop.permute.xlu0 %42
  %46 = vset.pattern.permute.xlu0 0
  %47 = vperm.xlu0 %46, %v29
  %v48 = vpop.permute.xlu0 %47
  %51 = vset.pattern.permute.xlu0 0
  %52 = vperm.xlu0 %51, %v30
  %v53 = vpop.permute.xlu0 %52
  %56 = vset.pattern.permute.xlu0 0
  %57 = vperm.xlu0 %56, %v31
  %v58 = vpop.permute.xlu0 %57
  %61 = vset.pattern.permute.xlu0 0
  %62 = vperm.xlu0 %61, %v32
  %v63 = vpop.permute.xlu0 %62
  %66 = vset.pattern.permute.xlu0 0
  %67 = vperm.xlu0 %66, %v33
  %v68 = vpop.permute.xlu0 %67
  %71 = vset.pattern.permute.xlu0 0
  %72 = vperm.xlu0 %71, %v34
  %v73 = vpop.permute.xlu0 %72
  %v83 = vunpack.c.l.b16 %v15
  %v84 = vunpack.c.l.b16 %v16
  %v85 = vunpack.c.l.b16 %v17
  %v86 = vunpack.c.l.b16 %v18
  %v87 = vunpack.c.l.b16 %v19
  %v88 = vunpack.c.l.b16 %v20
  %v89 = vunpack.c.l.b16 %v21
  %v90 = vunpack.c.l.b16 %v22
  %v91 = vpack.c.b16 %v84, %v83
  %v92 = vpack.c.b16 %v86, %v85
  %v93 = vpack.c.b16 %v88, %v87
  %v94 = vpack.c.b16 %v90, %v89
  %v99 = vunpack.c.l.b16 %v23
  %v100 = vunpack.c.l.b16 %v24
  %v101 = vunpack.c.l.b16 %v25
  %v102 = vunpack.c.l.b16 %v26
  %v103 = vpack.c.b16 %v100, %v99
  %v104 = vpack.c.b16 %v102, %v101
  %vm107 = vcmask 261120
  %v109 = vsel %vm107, %v91, 0
  %v112 = vsel %vm107, %v92, 0
  %v115 = vsel %vm107, %v93, 0
  %v118 = vsel %vm107, %v94, 0
  %120 = vmatprep.subr.bf16.mxu0 0
  %121 = vmatpush1.bf16.msra.mxu0 0
  %122 = vmatprep.subr.bf16.mxu0 0
  %123 = vmatpush1.bf16.msra.mxu0 0
  %124 = vmatprep.subr.bf16.mxu0 0
  %125 = vmatpush1.bf16.msra.mxu0 0
  %126 = vmatprep.subr.bf16.mxu0 0
  %127 = vmatpush1.bf16.msra.mxu0 0
  %128 = vmatprep.subr.bf16.mxu0 0
  %129 = vmatpush1.bf16.msra.mxu0 0
  %130 = vmatprep.subr.bf16.mxu0 0
  %131 = vmatpush1.bf16.msra.mxu0 0
  %132 = vmatprep.subr.bf16.mxu0 0
  %133 = vmatpush1.bf16.msra.mxu0 %v104
  %134 = vmatprep.subr.bf16.mxu0 0
  %135 = vmatpush1.bf16.msra.mxu0 %v103
  %136 = vmatprep.subr.bf16.mxu0 0
  %137 = vmatpush2.bf16.msra.mxu0 0
  %138 = vmatprep.subr.bf16.mxu0 0
  %139 = vmatpush2.bf16.msra.mxu0 0
  %140 = vmatprep.subr.bf16.mxu0 0
  %141 = vmatpush2.bf16.msra.mxu0 0
  %142 = vmatprep.subr.bf16.mxu0 0
  %143 = vmatpush2.bf16.msra.mxu0 0
  %144 = vmatprep.subr.bf16.mxu0 0
  %145 = vmatpush2.bf16.msra.mxu0 0
  %146 = vmatprep.subr.bf16.mxu0 0
  %147 = vmatpush2.bf16.msra.mxu0 0
  %148 = vmatprep.subr.bf16.mxu0 0
  %149 = vmatpush2.bf16.msra.mxu0 0
  %150 = vmatprep.subr.bf16.mxu0 0
  %151 = vmatpush2.bf16.msra.mxu0 0
  %152 = vmatprep.mubr.bf16.mxu0 0
  %153 = vmatmul.mubr.bf16.gmra.mxu0 %v109
  %v154 = vpop.f32.mrf.mxu0
  %v155 = vadd.f32 %v38, %v154
  %v156 = vpop.f32.mrf.mxu0
  %v157 = vpop.f32.mrf.mxu0
  %v158 = vadd.f32 %v43, %v157
  %v159 = vpop.f32.mrf.mxu0
  %160 = vmatprep.mubr.bf16.mxu0 0
  %161 = vmatmul.mubr.bf16.gmra.mxu0 %v112
  %v162 = vpop.f32.mrf.mxu0
  %v163 = vadd.f32 %v48, %v162
  %v164 = vpop.f32.mrf.mxu0
  %v165 = vpop.f32.mrf.mxu0
  %v166 = vadd.f32 %v53, %v165
  %v167 = vpop.f32.mrf.mxu0
  %168 = vmatprep.mubr.bf16.mxu0 0
  %169 = vmatmul.mubr.bf16.gmra.mxu0 %v115
  %v170 = vpop.f32.mrf.mxu0
  %v171 = vadd.f32 %v58, %v170
  %v172 = vpop.f32.mrf.mxu0
  %v173 = vpop.f32.mrf.mxu0
  %v174 = vadd.f32 %v63, %v173
  %v175 = vpop.f32.mrf.mxu0
  %176 = vmatprep.mubr.bf16.mxu0 0
  %177 = vmatmul.mubr.bf16.gmra.mxu0 %v118
  %v178 = vpop.f32.mrf.mxu0
  %v179 = vadd.f32 %v68, %v178
  %v180 = vpop.f32.mrf.mxu0
  %v181 = vpop.f32.mrf.mxu0
  %v182 = vadd.f32 %v73, %v181
  %v183 = vpop.f32.mrf.mxu0
  %184 = vdwg.mxu0
  %185 = vst [vmem:[%s3] sm:$0xff] %v155
  %186 = vst [vmem:[%s3 + $0x8] sm:$0xff] %v158
  %187 = vst [vmem:[%s3 + $0x10] sm:$0xff] %v163
  %188 = vst [vmem:[%s3 + $0x18] sm:$0xff] %v166
  %189 = vst [vmem:[%s3 + $0x20] sm:$0xff] %v171
  %190 = vst [vmem:[%s3 + $0x28] sm:$0xff] %v174
  %191 = vst [vmem:[%s3 + $0x30] sm:$0xff] %v179
  %192 = vst [vmem:[%s3 + $0x38] sm:$0xff] %v182
  // Predicated region
  $region14: #{moc_backbone_forward.31} parent=0 // pred_check
    _
  $region15: #{moc_backbone_forward.31} parent=0 // pred_check_branch
    %194 = sbr.rel (0) target = $region17
  $region16: #{moc_backbone_forward.31} parent=0 // pred_region
    _
  $region17: #{moc_backbone_forward.31} parent=0 // pred_fallthru
    _
  // Predicated region
  $region18: #{moc_backbone_forward.31} parent=0 // pred_check
    _
  $region19: #{moc_backbone_forward.31} parent=0 // pred_check_branch
    %196 = sbr.rel (0) target = $region21
  $region20: #{moc_backbone_forward.31} parent=0 // pred_region
    _
  $region21: #{moc_backbone_forward.31} parent=0 // pred_fallthru
    _

// kernel: moc_backbone_forward.32
$region0: #{moc_backbone_forward.32}
  #allocation0 [shape = 'u32[]', space=smem, size = 0x4, offset = 0x4, fixed_abs, tag = 'smem constant byte address 0x4 - core index']
  #allocation1 [shape = 'u32[144,128]{1,0:T(1,128)}', space=vmem, size = 0x12000, scoped, tag = 'internal scratch']
  %s0 = inlined_call_operand.vmem [shape: bf16[64,576], index: 0, kind: input, shape index: {}]
  %s1 = inlined_call_operand.vmem [shape: bf16[576,128], index: 1, kind: input, shape index: {}]
  %s2 = inlined_call_operand.vmem [shape: f32[64,1], index: 2, kind: input, shape index: {}]
  %s3 = inlined_call_operand.vmem [shape: f32[64,128], index: 3, kind: input, shape index: {}]
  %s4 = inlined_call_operand.vmem [shape: f32[64,128], index: 4, kind: output, shape index: {}]
  %s5 = sld [smem:[#allocation0]]
  $region26: #{moc_backbone_forward.32} parent=0
    _
  %s7 = ssub.s32 1, %s5
  %s8 = scalar_select 0, %s7, %s5
  // Predicated region
  $region2: #{moc_backbone_forward.32} parent=0 // pred_check
    _
  $region3: #{moc_backbone_forward.32} parent=0 // pred_check_branch
    %10 = sbr.rel (0) target = $region5
  $region4: #{moc_backbone_forward.32} parent=0 // pred_region
    _
  $region5: #{moc_backbone_forward.32} parent=0 // pred_fallthru
    _
  // Predicated region
  $region6: #{moc_backbone_forward.32} parent=0 // pred_check
    _
  $region7: #{moc_backbone_forward.32} parent=0 // pred_check_branch
    %12 = sbr.rel (0) target = $region9
  $region8: #{moc_backbone_forward.32} parent=0 // pred_region
    _
  $region9: #{moc_backbone_forward.32} parent=0 // pred_fallthru
    _
  // Predicated region
  $region10: #{moc_backbone_forward.32} parent=0 // pred_check
    _
  $region11: #{moc_backbone_forward.32} parent=0 // pred_check_branch
    %14 = sbr.rel (0) target = $region13
  $region12: #{moc_backbone_forward.32} parent=0 // pred_region
    _
  $region13: #{moc_backbone_forward.32} parent=0 // pred_fallthru
    _
  // Predicated region
  $region14: #{moc_backbone_forward.32} parent=0 // pred_check
    _
  $region15: #{moc_backbone_forward.32} parent=0 // pred_check_branch
    %16 = sbr.rel (0) target = $region17
  $region16: #{moc_backbone_forward.32} parent=0 // pred_region
    _
  $region17: #{moc_backbone_forward.32} parent=0 // pred_fallthru
    _
  %v18 = vld [vmem:[%s0] sm:$0xff]
  %v19 = vld [vmem:[%s0 + $0x8] sm:$0xff]
  %v20 = vld [vmem:[%s0 + $0x10] sm:$0xf]
  %v21 = vld [vmem:[%s0 + $0x14] sm:$0xff]
  %v22 = vld [vmem:[%s0 + $0x1c] sm:$0xff]
  %v23 = vld [vmem:[%s0 + $0x24] sm:$0xf]
  %v24 = vld [vmem:[%s0 + $0x28] sm:$0xff]
  %v25 = vld [vmem:[%s0 + $0x30] sm:$0xff]
  %v26 = vld [vmem:[%s0 + $0x38] sm:$0xf]
  %v27 = vld [vmem:[%s0 + $0x3c] sm:$0xff]
  %v28 = vld [vmem:[%s0 + $0x44] sm:$0xff]
  %v29 = vld [vmem:[%s0 + $0x4c] sm:$0xf]
  %v30 = vld [vmem:[%s0 + $0x50] sm:$0xff]
  %v31 = vld [vmem:[%s0 + $0x58] sm:$0xff]
  %v32 = vld [vmem:[%s0 + $0x60] sm:$0xf]
  %v33 = vld [vmem:[%s0 + $0x64] sm:$0xff]
  %v34 = vld [vmem:[%s0 + $0x6c] sm:$0xff]
  %v35 = vld [vmem:[%s0 + $0x74] sm:$0xf]
  %v36 = vld [vmem:[%s0 + $0x78] sm:$0xff]
  %v37 = vld [vmem:[%s0 + $0x80] sm:$0xff]
  %v38 = vld [vmem:[%s0 + $0x88] sm:$0xf]
  %v39 = vld [vmem:[%s0 + $0x8c] sm:$0xff]
  %v40 = vld [vmem:[%s0 + $0x94] sm:$0xff]
  %v41 = vld [vmem:[%s0 + $0x9c] sm:$0xf]
  %v42 = vld [vmem:[%s1] sm:$0xf]
  %v43 = vld [vmem:[%s1 + $0x4] sm:$0xf]
  %v44 = vld [vmem:[%s1 + $0x8] sm:$0xf]
  %v45 = vld [vmem:[%s1 + $0xc] sm:$0xf]
  %v46 = vld [vmem:[%s1 + $0x10] sm:$0xf]
  %v47 = vld [vmem:[%s1 + $0x14] sm:$0xf]
  %v48 = vld [vmem:[%s1 + $0x18] sm:$0xf]
  %v49 = vld [vmem:[%s1 + $0x1c] sm:$0xf]
  %v50 = vld [vmem:[%s1 + $0x20] sm:$0xf]
  %v51 = vld [vmem:[%s1 + $0x24] sm:$0xf]
  %v52 = vld [vmem:[%s1 + $0x28] sm:$0xf]
  %v53 = vld [vmem:[%s1 + $0x2c] sm:$0xf]
  %v54 = vld [vmem:[%s1 + $0x30] sm:$0xf]
  %v55 = vld [vmem:[%s1 + $0x34] sm:$0xf]
  %v56 = vld [vmem:[%s1 + $0x38] sm:$0xf]
  %v57 = vld [vmem:[%s1 + $0x3c] sm:$0xf]
  %v58 = vld [vmem:[%s1 + $0x40] sm:$0xf]
  %v59 = vld [vmem:[%s1 + $0x44] sm:$0xf]
  %v60 = vld [vmem:[%s1 + $0x48] sm:$0xf]
  %v61 = vld [vmem:[%s1 + $0x4c] sm:$0xf]
  %v62 = vld [vmem:[%s1 + $0x50] sm:$0xf]
  %v63 = vld [vmem:[%s1 + $0x54] sm:$0xf]
  %v64 = vld [vmem:[%s1 + $0x58] sm:$0xf]
  %v65 = vld [vmem:[%s1 + $0x5c] sm:$0xf]
  %v66 = vld [vmem:[%s1 + $0x60] sm:$0xf]
  %v67 = vld [vmem:[%s1 + $0x64] sm:$0xf]
  %v68 = vld [vmem:[%s1 + $0x68] sm:$0xf]
  %v69 = vld [vmem:[%s1 + $0x6c] sm:$0xf]
  %v70 = vld [vmem:[%s1 + $0x70] sm:$0xf]
  %v71 = vld [vmem:[%s1 + $0x74] sm:$0xf]
  %v72 = vld [vmem:[%s1 + $0x78] sm:$0xf]
  %v73 = vld [vmem:[%s1 + $0x7c] sm:$0xf]
  %v74 = vld [vmem:[%s1 + $0x80] sm:$0xf]
  %v75 = vld [vmem:[%s1 + $0x84] sm:$0xf]
  %v76 = vld [vmem:[%s1 + $0x88] sm:$0xf]
  %v77 = vld [vmem:[%s1 + $0x8c] sm:$0xf]
  %v78 = vld [vmem:[%s1 + $0x90] sm:$0xf]
  %v79 = vld [vmem:[%s1 + $0x94] sm:$0xf]
  %v80 = vld [vmem:[%s1 + $0x98] sm:$0xf]
  %v81 = vld [vmem:[%s1 + $0x9c] sm:$0xf]
  %v82 = vld [vmem:[%s1 + $0xa0] sm:$0xf]
  %v83 = vld [vmem:[%s1 + $0xa4] sm:$0xf]
  %v84 = vld [vmem:[%s1 + $0xa8] sm:$0xf]
  %v85 = vld [vmem:[%s1 + $0xac] sm:$0xf]
  %v86 = vld [vmem:[%s1 + $0xb0] sm:$0xf]
  %v87 = vld [vmem:[%s1 + $0xb4] sm:$0xf]
  %v88 = vld [vmem:[%s1 + $0xb8] sm:$0xf]
  %v89 = vld [vmem:[%s1 + $0xbc] sm:$0xf]
  %v90 = vld [vmem:[%s1 + $0xc0] sm:$0xf]
  %v91 = vld [vmem:[%s1 + $0xc4] sm:$0xf]
  %v92 = vld [vmem:[%s1 + $0xc8] sm:$0xf]
  %v93 = vld [vmem:[%s1 + $0xcc] sm:$0xf]
  %v94 = vld [vmem:[%s1 + $0xd0] sm:$0xf]
  %v95 = vld [vmem:[%s1 + $0xd4] sm:$0xf]
  %v96 = vld [vmem:[%s1 + $0xd8] sm:$0xf]
  %v97 = vld [vmem:[%s1 + $0xdc] sm:$0xf]
  %v98 = vld [vmem:[%s1 + $0xe0] sm:$0xf]
  %v99 = vld [vmem:[%s1 + $0xe4] sm:$0xf]
  %v100 = vld [vmem:[%s1 + $0xe8] sm:$0xf]
  %v101 = vld [vmem:[%s1 + $0xec] sm:$0xf]
  %v102 = vld [vmem:[%s1 + $0xf0] sm:$0xf]
  %v103 = vld [vmem:[%s1 + $0xf4] sm:$0xf]
  %v104 = vld [vmem:[%s1 + $0xf8] sm:$0xf]
  %v105 = vld [vmem:[%s1 + $0xfc] sm:$0xf]
  %v106 = vld [vmem:[%s1 + $0x100] sm:$0xf]
  %v107 = vld [vmem:[%s1 + $0x104] sm:$0xf]
  %v108 = vld [vmem:[%s1 + $0x108] sm:$0xf]
  %v109 = vld [vmem:[%s1 + $0x10c] sm:$0xf]
  %v110 = vld [vmem:[%s1 + $0x110] sm:$0xf]
  %v111 = vld [vmem:[%s1 + $0x114] sm:$0xf]
  %v112 = vld [vmem:[%s1 + $0x118] sm:$0xf]
  %v113 = vld [vmem:[%s1 + $0x11c] sm:$0xf]
  %v114 = vld [vmem:[%s2] sm:$0xff]
  %v115 = vld [vmem:[%s2 + $0x8] sm:$0xff]
  %v116 = vld [vmem:[%s2 + $0x10] sm:$0xff]
  %v117 = vld [vmem:[%s2 + $0x18] sm:$0xff]
  %v118 = vld [vmem:[%s2 + $0x20] sm:$0xff]
  %v119 = vld [vmem:[%s2 + $0x28] sm:$0xff]
  %v120 = vld [vmem:[%s2 + $0x30] sm:$0xff]
  %v121 = vld [vmem:[%s2 + $0x38] sm:$0xff]
  %123 = vset.pattern.permute.xlu0 0
  %124 = vperm.xlu0 %123, %v114
  %v125 = vpop.permute.xlu0 %124
  %128 = vset.pattern.permute.xlu0 0
  %129 = vperm.xlu0 %128, %v115
  %v130 = vpop.permute.xlu0 %129
  %133 = vset.pattern.permute.xlu0 0
  %134 = vperm.xlu0 %133, %v116
  %v135 = vpop.permute.xlu0 %134
  %138 = vset.pattern.permute.xlu0 0
  %139 = vperm.xlu0 %138, %v117
  %v140 = vpop.permute.xlu0 %139
  %143 = vset.pattern.permute.xlu0 0
  %144 = vperm.xlu0 %143, %v118
  %v145 = vpop.permute.xlu0 %144
  %148 = vset.pattern.permute.xlu0 0
  %149 = vperm.xlu0 %148, %v119
  %v150 = vpop.permute.xlu0 %149
  %153 = vset.pattern.permute.xlu0 0
  %154 = vperm.xlu0 %153, %v120
  %v155 = vpop.permute.xlu0 %154
  %158 = vset.pattern.permute.xlu0 0
  %159 = vperm.xlu0 %158, %v121
  %v160 = vpop.permute.xlu0 %159
  %v186 = vunpack.c.l.b16 %v18
  %v187 = vunpack.c.h.b16 %v18
  %v188 = vunpack.c.l.b16 %v19
  %v189 = vunpack.c.h.b16 %v19
  %v190 = vunpack.c.l.b16 %v20
  %v191 = vunpack.c.l.b16 %v21
  %v192 = vunpack.c.h.b16 %v21
  %v193 = vunpack.c.l.b16 %v22
  %v194 = vunpack.c.h.b16 %v22
  %v195 = vunpack.c.l.b16 %v23
  %v196 = vunpack.c.l.b16 %v24
  %v197 = vunpack.c.h.b16 %v24
  %v198 = vunpack.c.l.b16 %v25
  %v199 = vunpack.c.h.b16 %v25
  %v200 = vunpack.c.l.b16 %v26
  %v201 = vunpack.c.l.b16 %v27
  %v202 = vunpack.c.h.b16 %v27
  %v203 = vunpack.c.l.b16 %v28
  %v204 = vunpack.c.h.b16 %v28
  %v205 = vunpack.c.l.b16 %v29
  %v206 = vunpack.c.l.b16 %v30
  %v207 = vunpack.c.h.b16 %v30
  %v208 = vunpack.c.l.b16 %v31
  %v209 = vunpack.c.h.b16 %v31
  %v210 = vunpack.c.l.b16 %v32
  %v211 = vunpack.c.l.b16 %v33
  %v212 = vunpack.c.h.b16 %v33
  %v213 = vunpack.c.l.b16 %v34
  %v214 = vunpack.c.h.b16 %v34
  %v215 = vunpack.c.l.b16 %v35
  %v216 = vunpack.c.l.b16 %v36
  %v217 = vunpack.c.h.b16 %v36
  %v218 = vunpack.c.l.b16 %v37
  %v219 = vunpack.c.h.b16 %v37
  %v220 = vunpack.c.l.b16 %v38
  %v221 = vunpack.c.l.b16 %v39
  %v222 = vunpack.c.h.b16 %v39
  %v223 = vunpack.c.l.b16 %v40
  %v224 = vunpack.c.h.b16 %v40
  %v225 = vunpack.c.l.b16 %v41
  %v226 = vpack.c.b16 %v191, %v186
  %v227 = vpack.c.b16 %v192, %v187
  %v228 = vpack.c.b16 %v193, %v188
  %v229 = vpack.c.b16 %v194, %v189
  %v230 = vpack.c.b16 %v195, %v190
  %v231 = vpack.c.b16 %v201, %v196
  %v232 = vpack.c.b16 %v202, %v197
  %v233 = vpack.c.b16 %v203, %v198
  %v234 = vpack.c.b16 %v204, %v199
  %v235 = vpack.c.b16 %v205, %v200
  %v236 = vpack.c.b16 %v211, %v206
  %v237 = vpack.c.b16 %v212, %v207
  %v238 = vpack.c.b16 %v213, %v208
  %v239 = vpack.c.b16 %v214, %v209
  %v240 = vpack.c.b16 %v215, %v210
  %v241 = vpack.c.b16 %v221, %v216
  %v242 = vpack.c.b16 %v222, %v217
  %v243 = vpack.c.b16 %v223, %v218
  %v244 = vpack.c.b16 %v224, %v219
  %v245 = vpack.c.b16 %v225, %v220
  %v334 = vunpack.c.l.b16 %v42
  %v335 = vunpack.c.l.b16 %v43
  %v336 = vunpack.c.l.b16 %v44
  %v337 = vunpack.c.l.b16 %v45
  %v338 = vunpack.c.l.b16 %v46
  %v339 = vunpack.c.l.b16 %v47
  %v340 = vunpack.c.l.b16 %v48
  %v341 = vunpack.c.l.b16 %v49
  %v342 = vunpack.c.l.b16 %v50
  %v343 = vunpack.c.l.b16 %v51
  %v344 = vunpack.c.l.b16 %v52
  %v345 = vunpack.c.l.b16 %v53
  %v346 = vunpack.c.l.b16 %v54
  %v347 = vunpack.c.l.b16 %v55
  %v348 = vunpack.c.l.b16 %v56
  %v349 = vunpack.c.l.b16 %v57
  %v350 = vunpack.c.l.b16 %v58
  %v351 = vunpack.c.l.b16 %v59
  %v352 = vunpack.c.l.b16 %v60
  %v353 = vunpack.c.l.b16 %v61
  %v354 = vunpack.c.l.b16 %v62
  %v355 = vunpack.c.l.b16 %v63
  %v356 = vunpack.c.l.b16 %v64
  %v357 = vunpack.c.l.b16 %v65
  %v358 = vunpack.c.l.b16 %v66
  %v359 = vunpack.c.l.b16 %v67
  %v360 = vunpack.c.l.b16 %v68
  %v361 = vunpack.c.l.b16 %v69
  %v362 = vunpack.c.l.b16 %v70
  %v363 = vunpack.c.l.b16 %v71
  %v364 = vunpack.c.l.b16 %v72
  %v365 = vunpack.c.l.b16 %v73
  %v366 = vunpack.c.l.b16 %v74
  %v367 = vunpack.c.l.b16 %v75
  %v368 = vunpack.c.l.b16 %v76
  %v369 = vunpack.c.l.b16 %v77
  %v370 = vunpack.c.l.b16 %v78
  %v371 = vunpack.c.l.b16 %v79
  %v372 = vunpack.c.l.b16 %v80
  %v373 = vunpack.c.l.b16 %v81
  %v374 = vunpack.c.l.b16 %v82
  %v375 = vunpack.c.l.b16 %v83
  %v376 = vunpack.c.l.b16 %v84
  %v377 = vunpack.c.l.b16 %v85
  %v378 = vunpack.c.l.b16 %v86
  %v379 = vunpack.c.l.b16 %v87
  %v380 = vunpack.c.l.b16 %v88
  %v381 = vunpack.c.l.b16 %v89
  %v382 = vunpack.c.l.b16 %v90
  %v383 = vunpack.c.l.b16 %v91
  %v384 = vunpack.c.l.b16 %v92
  %v385 = vunpack.c.l.b16 %v93
  %v386 = vunpack.c.l.b16 %v94
  %v387 = vunpack.c.l.b16 %v95
  %v388 = vunpack.c.l.b16 %v96
  %v389 = vunpack.c.l.b16 %v97
  %v390 = vunpack.c.l.b16 %v98
  %v391 = vunpack.c.l.b16 %v99
  %v392 = vunpack.c.l.b16 %v100
  %v393 = vunpack.c.l.b16 %v101
  %v394 = vunpack.c.l.b16 %v102
  %v395 = vunpack.c.l.b16 %v103
  %v396 = vunpack.c.l.b16 %v104
  %v397 = vunpack.c.l.b16 %v105
  %v398 = vunpack.c.l.b16 %v106
  %v399 = vunpack.c.l.b16 %v107
  %v400 = vunpack.c.l.b16 %v108
  %v401 = vunpack.c.l.b16 %v109
  %v402 = vunpack.c.l.b16 %v110
  %v403 = vunpack.c.l.b16 %v111
  %v404 = vunpack.c.l.b16 %v112
  %v405 = vunpack.c.l.b16 %v113
  %v406 = vpack.c.b16 %v335, %v334
  %v407 = vpack.c.b16 %v337, %v336
  %v408 = vpack.c.b16 %v339, %v338
  %v409 = vpack.c.b16 %v341, %v340
  %v410 = vpack.c.b16 %v343, %v342
  %v411 = vpack.c.b16 %v345, %v344
  %v412 = vpack.c.b16 %v347, %v346
  %v413 = vpack.c.b16 %v349, %v348
  %v414 = vpack.c.b16 %v351, %v350
  %v415 = vpack.c.b16 %v353, %v352
  %v416 = vpack.c.b16 %v355, %v354
  %v417 = vpack.c.b16 %v357, %v356
  %v418 = vpack.c.b16 %v359, %v358
  %v419 = vpack.c.b16 %v361, %v360
  %v420 = vpack.c.b16 %v363, %v362
  %v421 = vpack.c.b16 %v365, %v364
  %v422 = vpack.c.b16 %v367, %v366
  %v423 = vpack.c.b16 %v369, %v368
  %v424 = vpack.c.b16 %v371, %v370
  %v425 = vpack.c.b16 %v373, %v372
  %v426 = vpack.c.b16 %v375, %v374
  %v427 = vpack.c.b16 %v377, %v376
  %v428 = vpack.c.b16 %v379, %v378
  %v429 = vpack.c.b16 %v381, %v380
  %v430 = vpack.c.b16 %v383, %v382
  %v431 = vpack.c.b16 %v385, %v384
  %v432 = vpack.c.b16 %v387, %v386
  %v433 = vpack.c.b16 %v389, %v388
  %v434 = vpack.c.b16 %v391, %v390
  %v435 = vpack.c.b16 %v393, %v392
  %v436 = vpack.c.b16 %v395, %v394
  %v437 = vpack.c.b16 %v397, %v396
  %v438 = vpack.c.b16 %v399, %v398
  %v439 = vpack.c.b16 %v401, %v400
  %v440 = vpack.c.b16 %v403, %v402
  %v441 = vpack.c.b16 %v405, %v404
  %vm478 = vcmask 523264
  %v480 = vsel %vm478, %v230, 0
  %v483 = vsel %vm478, %v235, 0
  %v486 = vsel %vm478, %v240, 0
  %v489 = vsel %vm478, %v245, 0
  %491 = vmatprep.subr.bf16.mxu0 0
  %492 = vmatpush1.bf16.msra.mxu0 %v413
  %493 = vmatprep.subr.bf16.mxu0 0
  %494 = vmatpush1.bf16.msra.mxu0 %v412
  %495 = vmatprep.subr.bf16.mxu0 0
  %496 = vmatpush1.bf16.msra.mxu0 %v411
  %497 = vmatprep.subr.bf16.mxu0 0
  %498 = vmatpush1.bf16.msra.mxu0 %v410
  %499 = vmatprep.subr.bf16.mxu0 0
  %500 = vmatpush1.bf16.msra.mxu0 %v409
  %501 = vmatprep.subr.bf16.mxu0 0
  %502 = vmatpush1.bf16.msra.mxu0 %v408
  %503 = vmatprep.subr.bf16.mxu0 0
  %504 = vmatpush1.bf16.msra.mxu0 %v407
  %505 = vmatprep.subr.bf16.mxu0 0
  %506 = vmatpush1.bf16.msra.mxu0 %v406
  %507 = vmatprep.subr.bf16.mxu0 0
  %508 = vmatpush2.bf16.msra.mxu0 %v421
  %509 = vmatprep.subr.bf16.mxu0 0
  %510 = vmatpush2.bf16.msra.mxu0 %v420
  %511 = vmatprep.subr.bf16.mxu0 0
  %512 = vmatpush2.bf16.msra.mxu0 %v419
  %513 = vmatprep.subr.bf16.mxu0 0
  %514 = vmatpush2.bf16.msra.mxu0 %v418
  %515 = vmatprep.subr.bf16.mxu0 0
  %516 = vmatpush2.bf16.msra.mxu0 %v417
  %517 = vmatprep.subr.bf16.mxu0 0
  %518 = vmatpush2.bf16.msra.mxu0 %v416
  %519 = vmatprep.subr.bf16.mxu0 0
  %520 = vmatpush2.bf16.msra.mxu0 %v415
  %521 = vmatprep.subr.bf16.mxu0 0
  %522 = vmatpush2.bf16.msra.mxu0 %v414
  %523 = vmatprep.mubr.bf16.mxu0 %v227
  %524 = vmatmul.mubr.bf16.gmra.mxu0 %v226
  %v525 = vpop.f32.mrf.mxu0
  %v526 = vadd.f32 %v125, %v525
  %v527 = vpop.f32.mrf.mxu0
  %v528 = vpop.f32.mrf.mxu0
  %v529 = vadd.f32 %v130, %v528
  %v530 = vpop.f32.mrf.mxu0
  %531 = vmatprep.mubr.bf16.mxu0 %v232
  %532 = vmatmul.mubr.bf16.gmra.mxu0 %v231
  %v533 = vpop.f32.mrf.mxu0
  %v534 = vadd.f32 %v135, %v533
  %v535 = vpop.f32.mrf.mxu0
  %v536 = vpop.f32.mrf.mxu0
  %v537 = vadd.f32 %v140, %v536
  %v538 = vpop.f32.mrf.mxu0
  %539 = vmatprep.mubr.bf16.mxu0 %v237
  %540 = vmatmul.mubr.bf16.gmra.mxu0 %v236
  %v541 = vpop.f32.mrf.mxu0
  %v542 = vadd.f32 %v145, %v541
  %v543 = vpop.f32.mrf.mxu0
  %v544 = vpop.f32.mrf.mxu0
  %v545 = vadd.f32 %v150, %v544
  %v546 = vpop.f32.mrf.mxu0
  %547 = vmatprep.mubr.bf16.mxu0 %v242
  %548 = vmatmul.mubr.bf16.gmra.mxu0 %v241
  %v549 = vpop.f32.mrf.mxu0
  %v550 = vadd.f32 %v155, %v549
  %v551 = vpop.f32.mrf.mxu0
  %v552 = vpop.f32.mrf.mxu0
  %v553 = vadd.f32 %v160, %v552
  %v554 = vpop.f32.mrf.mxu0
  %555 = vdwg.mxu0
  %556 = vmatprep.subr.bf16.mxu0 0
  %557 = vmatpush1.bf16.msra.mxu0 %v429
  %558 = vmatprep.subr.bf16.mxu0 0
  %559 = vmatpush1.bf16.msra.mxu0 %v428
  %560 = vmatprep.subr.bf16.mxu0 0
  %561 = vmatpush1.bf16.msra.mxu0 %v427
  %562 = vmatprep.subr.bf16.mxu0 0
  %563 = vmatpush1.bf16.msra.mxu0 %v426
  %564 = vmatprep.subr.bf16.mxu0 0
  %565 = vmatpush1.bf16.msra.mxu0 %v425
  %566 = vmatprep.subr.bf16.mxu0 0
  %567 = vmatpush1.bf16.msra.mxu0 %v424
  %568 = vmatprep.subr.bf16.mxu0 0
  %569 = vmatpush1.bf16.msra.mxu0 %v423
  %570 = vmatprep.subr.bf16.mxu0 0
  %571 = vmatpush1.bf16.msra.mxu0 %v422
  %572 = vmatprep.subr.bf16.mxu0 0
  %573 = vmatpush2.bf16.msra.mxu0 %v437
  %574 = vmatprep.subr.bf16.mxu0 0
  %575 = vmatpush2.bf16.msra.mxu0 %v436
  %576 = vmatprep.subr.bf16.mxu0 0
  %577 = vmatpush2.bf16.msra.mxu0 %v435
  %578 = vmatprep.subr.bf16.mxu0 0
  %579 = vmatpush2.bf16.msra.mxu0 %v434
  %580 = vmatprep.subr.bf16.mxu0 0
  %581 = vmatpush2.bf16.msra.mxu0 %v433
  %582 = vmatprep.subr.bf16.mxu0 0
  %583 = vmatpush2.bf16.msra.mxu0 %v432
  %584 = vmatprep.subr.bf16.mxu0 0
  %585 = vmatpush2.bf16.msra.mxu0 %v431
  %586 = vmatprep.subr.bf16.mxu0 0
  %587 = vmatpush2.bf16.msra.mxu0 %v430
  %588 = vmatprep.mubr.bf16.mxu0 %v229
  %589 = vmatmul.mubr.bf16.gmra.mxu0 %v228
  %v590 = vpop.f32.mrf.mxu0
  %v591 = vadd.f32 %v526, %v590
  %v592 = vpop.f32.mrf.mxu0
  %v593 = vpop.f32.mrf.mxu0
  %v594 = vadd.f32 %v529, %v593
  %v595 = vpop.f32.mrf.mxu0
  %596 = vmatprep.mubr.bf16.mxu0 %v234
  %597 = vmatmul.mubr.bf16.gmra.mxu0 %v233
  %v598 = vpop.f32.mrf.mxu0
  %v599 = vadd.f32 %v534, %v598
  %v600 = vpop.f32.mrf.mxu0
  %v601 = vpop.f32.mrf.mxu0
  %v602 = vadd.f32 %v537, %v601
  %v603 = vpop.f32.mrf.mxu0
  %604 = vmatprep.mubr.bf16.mxu0 %v239
  %605 = vmatmul.mubr.bf16.gmra.mxu0 %v238
  %v606 = vpop.f32.mrf.mxu0
  %v607 = vadd.f32 %v542, %v606
  %v608 = vpop.f32.mrf.mxu0
  %v609 = vpop.f32.mrf.mxu0
  %v610 = vadd.f32 %v545, %v609
  %v611 = vpop.f32.mrf.mxu0
  %612 = vmatprep.mubr.bf16.mxu0 %v244
  %613 = vmatmul.mubr.bf16.gmra.mxu0 %v243
  %v614 = vpop.f32.mrf.mxu0
  %v615 = vadd.f32 %v550, %v614
  %v616 = vpop.f32.mrf.mxu0
  %v617 = vpop.f32.mrf.mxu0
  %v618 = vadd.f32 %v553, %v617
  %v619 = vpop.f32.mrf.mxu0
  %620 = vdwg.mxu0
  %621 = vmatprep.subr.bf16.mxu0 0
  %622 = vmatpush1.bf16.msra.mxu0 0
  %623 = vmatprep.subr.bf16.mxu0 0
  %624 = vmatpush1.bf16.msra.mxu0 0
  %625 = vmatprep.subr.bf16.mxu0 0
  %626 = vmatpush1.bf16.msra.mxu0 0
  %627 = vmatprep.subr.bf16.mxu0 0
  %628 = vmatpush1.bf16.msra.mxu0 0
  %629 = vmatprep.subr.bf16.mxu0 0
  %630 = vmatpush1.bf16.msra.mxu0 %v441
  %631 = vmatprep.subr.bf16.mxu0 0
  %632 = vmatpush1.bf16.msra.mxu0 %v440
  %633 = vmatprep.subr.bf16.mxu0 0
  %634 = vmatpush1.bf16.msra.mxu0 %v439
  %635 = vmatprep.subr.bf16.mxu0 0
  %636 = vmatpush1.bf16.msra.mxu0 %v438
  %637 = vmatprep.subr.bf16.mxu0 0
  %638 = vmatpush2.bf16.msra.mxu0 0
  %639 = vmatprep.subr.bf16.mxu0 0
  %640 = vmatpush2.bf16.msra.mxu0 0
  %641 = vmatprep.subr.bf16.mxu0 0
  %642 = vmatpush2.bf16.msra.mxu0 0
  %643 = vmatprep.subr.bf16.mxu0 0
  %644 = vmatpush2.bf16.msra.mxu0 0
  %645 = vmatprep.subr.bf16.mxu0 0
  %646 = vmatpush2.bf16.msra.mxu0 0
  %647 = vmatprep.subr.bf16.mxu0 0
  %648 = vmatpush2.bf16.msra.mxu0 0
  %649 = vmatprep.subr.bf16.mxu0 0
  %650 = vmatpush2.bf16.msra.mxu0 0
  %651 = vmatprep.subr.bf16.mxu0 0
  %652 = vmatpush2.bf16.msra.mxu0 0
  %653 = vmatprep.mubr.bf16.mxu0 0
  %654 = vmatmul.mubr.bf16.gmra.mxu0 %v480
  %v655 = vpop.f32.mrf.mxu0
  %v656 = vadd.f32 %v591, %v655
  %v657 = vpop.f32.mrf.mxu0
  %v658 = vpop.f32.mrf.mxu0
  %v659 = vadd.f32 %v594, %v658
  %v660 = vpop.f32.mrf.mxu0
  %661 = vmatprep.mubr.bf16.mxu0 0
  %662 = vmatmul.mubr.bf16.gmra.mxu0 %v483
  %v663 = vpop.f32.mrf.mxu0
  %v664 = vadd.f32 %v599, %v663
  %v665 = vpop.f32.mrf.mxu0
  %v666 = vpop.f32.mrf.mxu0
  %v667 = vadd.f32 %v602, %v666
  %v668 = vpop.f32.mrf.mxu0
  %669 = vmatprep.mubr.bf16.mxu0 0
  %670 = vmatmul.mubr.bf16.gmra.mxu0 %v486
  %v671 = vpop.f32.mrf.mxu0
  %v672 = vadd.f32 %v607, %v671
  %v673 = vpop.f32.mrf.mxu0
  %v674 = vpop.f32.mrf.mxu0
  %v675 = vadd.f32 %v610, %v674
  %v676 = vpop.f32.mrf.mxu0
  %677 = vmatprep.mubr.bf16.mxu0 0
  %678 = vmatmul.mubr.bf16.gmra.mxu0 %v489
  %v679 = vpop.f32.mrf.mxu0
  %v680 = vadd.f32 %v615, %v679
  %v681 = vpop.f32.mrf.mxu0
  %v682 = vpop.f32.mrf.mxu0
  %v683 = vadd.f32 %v618, %v682
  %v684 = vpop.f32.mrf.mxu0
  %685 = vdwg.mxu0
  %v686 = vld [vmem:[%s3] sm:$0xff]
  %v687 = vld [vmem:[%s3 + $0x8] sm:$0xff]
  %v688 = vld [vmem:[%s3 + $0x10] sm:$0xff]
  %v689 = vld [vmem:[%s3 + $0x18] sm:$0xff]
  %v690 = vld [vmem:[%s3 + $0x20] sm:$0xff]
  %v691 = vld [vmem:[%s3 + $0x28] sm:$0xff]
  %v692 = vld [vmem:[%s3 + $0x30] sm:$0xff]
  %v693 = vld [vmem:[%s3 + $0x38] sm:$0xff]
  %v694 = vadd.f32 %v656, %v686
  %v695 = vadd.f32 %v659, %v687
  %v696 = vadd.f32 %v664, %v688
  %v697 = vadd.f32 %v667, %v689
  %v698 = vadd.f32 %v672, %v690
  %v699 = vadd.f32 %v675, %v691
  %v700 = vadd.f32 %v680, %v692
  %v701 = vadd.f32 %v683, %v693
  %v702 = vmax.f32 %v694, 0.0
  %v703 = vmax.f32 %v695, 0.0
  %v704 = vmax.f32 %v696, 0.0
  %v705 = vmax.f32 %v697, 0.0
  %v706 = vmax.f32 %v698, 0.0
  %v707 = vmax.f32 %v699, 0.0
  %v708 = vmax.f32 %v700, 0.0
  %v709 = vmax.f32 %v701, 0.0
  %710 = vst [vmem:[%s4] sm:$0xff] %v702
  %711 = vst [vmem:[%s4 + $0x8] sm:$0xff] %v703
  %712 = vst [vmem:[%s4 + $0x10] sm:$0xff] %v704
  %713 = vst [vmem:[%s4 + $0x18] sm:$0xff] %v705
  %714 = vst [vmem:[%s4 + $0x20] sm:$0xff] %v706
  %715 = vst [vmem:[%s4 + $0x28] sm:$0xff] %v707
  %716 = vst [vmem:[%s4 + $0x30] sm:$0xff] %v708
  %717 = vst [vmem:[%s4 + $0x38] sm:$0xff] %v709
  // Predicated region
  $region18: #{moc_backbone_forward.32} parent=0 // pred_check
    _
  $region19: #{moc_backbone_forward.32} parent=0 // pred_check_branch
    %719 = sbr.rel (0) target = $region21
  $region20: #{moc_backbone_forward.32} parent=0 // pred_region
    _
  $region21: #{moc_backbone_forward.32} parent=0 // pred_fallthru
    _
  // Predicated region
  $region22: #{moc_backbone_forward.32} parent=0 // pred_check
    _
  $region23: #{moc_backbone_forward.32} parent=0 // pred_check_branch
    %721 = sbr.rel (0) target = $region25
  $region24: #{moc_backbone_forward.32} parent=0 // pred_region
    _
  $region25: #{moc_backbone_forward.32} parent=0 // pred_fallthru
    _

// kernel: moc_backbone_forward.34
$region0: #{moc_backbone_forward.34}
  #allocation0 [shape = 'u32[]', space=smem, size = 0x4, offset = 0x4, fixed_abs, tag = 'smem constant byte address 0x4 - core index']
  #allocation1 [shape = 'u32[144,128]{1,0:T(1,128)}', space=vmem, size = 0x12000, scoped, tag = 'internal scratch']
  %s0 = inlined_call_operand.vmem [shape: bf16[64,64], index: 0, kind: input, shape index: {}]
  %s1 = inlined_call_operand.vmem [shape: bf16[64,128], index: 1, kind: input, shape index: {}]
  %s2 = inlined_call_operand.vmem [shape: f32[64,1], index: 2, kind: input, shape index: {}]
  %s3 = inlined_call_operand.vmem [shape: f32[64,128], index: 3, kind: output, shape index: {}]
  %s4 = sld [smem:[#allocation0]]
  $region22: #{moc_backbone_forward.34} parent=0
    _
  %s6 = ssub.s32 1, %s4
  %s7 = scalar_select 0, %s6, %s4
  // Predicated region
  $region2: #{moc_backbone_forward.34} parent=0 // pred_check
    _
  $region3: #{moc_backbone_forward.34} parent=0 // pred_check_branch
    %9 = sbr.rel (0) target = $region5
  $region4: #{moc_backbone_forward.34} parent=0 // pred_region
    _
  $region5: #{moc_backbone_forward.34} parent=0 // pred_fallthru
    _
  // Predicated region
  $region6: #{moc_backbone_forward.34} parent=0 // pred_check
    _
  $region7: #{moc_backbone_forward.34} parent=0 // pred_check_branch
    %11 = sbr.rel (0) target = $region9
  $region8: #{moc_backbone_forward.34} parent=0 // pred_region
    _
  $region9: #{moc_backbone_forward.34} parent=0 // pred_fallthru
    _
  // Predicated region
  $region10: #{moc_backbone_forward.34} parent=0 // pred_check
    _
  $region11: #{moc_backbone_forward.34} parent=0 // pred_check_branch
    %13 = sbr.rel (0) target = $region13
  $region12: #{moc_backbone_forward.34} parent=0 // pred_region
    _
  $region13: #{moc_backbone_forward.34} parent=0 // pred_fallthru
    _
  %v15 = vld [vmem:[%s0] sm:$0xf]
  %v16 = vld [vmem:[%s0 + $0x4] sm:$0xf]
  %v17 = vld [vmem:[%s0 + $0x8] sm:$0xf]
  %v18 = vld [vmem:[%s0 + $0xc] sm:$0xf]
  %v19 = vld [vmem:[%s0 + $0x10] sm:$0xf]
  %v20 = vld [vmem:[%s0 + $0x14] sm:$0xf]
  %v21 = vld [vmem:[%s0 + $0x18] sm:$0xf]
  %v22 = vld [vmem:[%s0 + $0x1c] sm:$0xf]
  %v23 = vld [vmem:[%s1] sm:$0xf]
  %v24 = vld [vmem:[%s1 + $0x4] sm:$0xf]
  %v25 = vld [vmem:[%s1 + $0x8] sm:$0xf]
  %v26 = vld [vmem:[%s1 + $0xc] sm:$0xf]
  %v27 = vld [vmem:[%s1 + $0x10] sm:$0xf]
  %v28 = vld [vmem:[%s1 + $0x14] sm:$0xf]
  %v29 = vld [vmem:[%s1 + $0x18] sm:$0xf]
  %v30 = vld [vmem:[%s1 + $0x1c] sm:$0xf]
  %v31 = vld [vmem:[%s2] sm:$0xff]
  %v32 = vld [vmem:[%s2 + $0x8] sm:$0xff]
  %v33 = vld [vmem:[%s2 + $0x10] sm:$0xff]
  %v34 = vld [vmem:[%s2 + $0x18] sm:$0xff]
  %v35 = vld [vmem:[%s2 + $0x20] sm:$0xff]
  %v36 = vld [vmem:[%s2 + $0x28] sm:$0xff]
  %v37 = vld [vmem:[%s2 + $0x30] sm:$0xff]
  %v38 = vld [vmem:[%s2 + $0x38] sm:$0xff]
  %40 = vset.pattern.permute.xlu0 0
  %41 = vperm.xlu0 %40, %v31
  %v42 = vpop.permute.xlu0 %41
  %45 = vset.pattern.permute.xlu0 0
  %46 = vperm.xlu0 %45, %v32
  %v47 = vpop.permute.xlu0 %46
  %50 = vset.pattern.permute.xlu0 0
  %51 = vperm.xlu0 %50, %v33
  %v52 = vpop.permute.xlu0 %51
  %55 = vset.pattern.permute.xlu0 0
  %56 = vperm.xlu0 %55, %v34
  %v57 = vpop.permute.xlu0 %56
  %60 = vset.pattern.permute.xlu0 0
  %61 = vperm.xlu0 %60, %v35
  %v62 = vpop.permute.xlu0 %61
  %65 = vset.pattern.permute.xlu0 0
  %66 = vperm.xlu0 %65, %v36
  %v67 = vpop.permute.xlu0 %66
  %70 = vset.pattern.permute.xlu0 0
  %71 = vperm.xlu0 %70, %v37
  %v72 = vpop.permute.xlu0 %71
  %75 = vset.pattern.permute.xlu0 0
  %76 = vperm.xlu0 %75, %v38
  %v77 = vpop.permute.xlu0 %76
  %v87 = vunpack.c.l.b16 %v15
  %v88 = vunpack.c.l.b16 %v16
  %v89 = vunpack.c.l.b16 %v17
  %v90 = vunpack.c.l.b16 %v18
  %v91 = vunpack.c.l.b16 %v19
  %v92 = vunpack.c.l.b16 %v20
  %v93 = vunpack.c.l.b16 %v21
  %v94 = vunpack.c.l.b16 %v22
  %v95 = vpack.c.b16 %v88, %v87
  %v96 = vpack.c.b16 %v90, %v89
  %v97 = vpack.c.b16 %v92, %v91
  %v98 = vpack.c.b16 %v94, %v93
  %v107 = vunpack.c.l.b16 %v23
  %v108 = vunpack.c.l.b16 %v24
  %v109 = vunpack.c.l.b16 %v25
  %v110 = vunpack.c.l.b16 %v26
  %v111 = vunpack.c.l.b16 %v27
  %v112 = vunpack.c.l.b16 %v28
  %v113 = vunpack.c.l.b16 %v29
  %v114 = vunpack.c.l.b16 %v30
  %v115 = vpack.c.b16 %v108, %v107
  %v116 = vpack.c.b16 %v110, %v109
  %v117 = vpack.c.b16 %v112, %v111
  %v118 = vpack.c.b16 %v114, %v113
  %vm123 = vcmask 523264
  %v125 = vsel %vm123, %v95, 0
  %v128 = vsel %vm123, %v96, 0
  %v131 = vsel %vm123, %v97, 0
  %v134 = vsel %vm123, %v98, 0
  %136 = vmatprep.subr.bf16.mxu0 0
  %137 = vmatpush1.bf16.msra.mxu0 0
  %138 = vmatprep.subr.bf16.mxu0 0
  %139 = vmatpush1.bf16.msra.mxu0 0
  %140 = vmatprep.subr.bf16.mxu0 0
  %141 = vmatpush1.bf16.msra.mxu0 0
  %142 = vmatprep.subr.bf16.mxu0 0
  %143 = vmatpush1.bf16.msra.mxu0 0
  %144 = vmatprep.subr.bf16.mxu0 0
  %145 = vmatpush1.bf16.msra.mxu0 %v118
  %146 = vmatprep.subr.bf16.mxu0 0
  %147 = vmatpush1.bf16.msra.mxu0 %v117
  %148 = vmatprep.subr.bf16.mxu0 0
  %149 = vmatpush1.bf16.msra.mxu0 %v116
  %150 = vmatprep.subr.bf16.mxu0 0
  %151 = vmatpush1.bf16.msra.mxu0 %v115
  %152 = vmatprep.subr.bf16.mxu0 0
  %153 = vmatpush2.bf16.msra.mxu0 0
  %154 = vmatprep.subr.bf16.mxu0 0
  %155 = vmatpush2.bf16.msra.mxu0 0
  %156 = vmatprep.subr.bf16.mxu0 0
  %157 = vmatpush2.bf16.msra.mxu0 0
  %158 = vmatprep.subr.bf16.mxu0 0
  %159 = vmatpush2.bf16.msra.mxu0 0
  %160 = vmatprep.subr.bf16.mxu0 0
  %161 = vmatpush2.bf16.msra.mxu0 0
  %162 = vmatprep.subr.bf16.mxu0 0
  %163 = vmatpush2.bf16.msra.mxu0 0
  %164 = vmatprep.subr.bf16.mxu0 0
  %165 = vmatpush2.bf16.msra.mxu0 0
  %166 = vmatprep.subr.bf16.mxu0 0
  %167 = vmatpush2.bf16.msra.mxu0 0
  %168 = vmatprep.mubr.bf16.mxu0 0
  %169 = vmatmul.mubr.bf16.gmra.mxu0 %v125
  %v170 = vpop.f32.mrf.mxu0
  %v171 = vadd.f32 %v42, %v170
  %v172 = vpop.f32.mrf.mxu0
  %v173 = vpop.f32.mrf.mxu0
  %v174 = vadd.f32 %v47, %v173
  %v175 = vpop.f32.mrf.mxu0
  %176 = vmatprep.mubr.bf16.mxu0 0
  %177 = vmatmul.mubr.bf16.gmra.mxu0 %v128
  %v178 = vpop.f32.mrf.mxu0
  %v179 = vadd.f32 %v52, %v178
  %v180 = vpop.f32.mrf.mxu0
  %v181 = vpop.f32.mrf.mxu0
  %v182 = vadd.f32 %v57, %v181
  %v183 = vpop.f32.mrf.mxu0
  %184 = vmatprep.mubr.bf16.mxu0 0
  %185 = vmatmul.mubr.bf16.gmra.mxu0 %v131
  %v186 = vpop.f32.mrf.mxu0
  %v187 = vadd.f32 %v62, %v186
  %v188 = vpop.f32.mrf.mxu0
  %v189 = vpop.f32.mrf.mxu0
  %v190 = vadd.f32 %v67, %v189
  %v191 = vpop.f32.mrf.mxu0
  %192 = vmatprep.mubr.bf16.mxu0 0
  %193 = vmatmul.mubr.bf16.gmra.mxu0 %v134
  %v194 = vpop.f32.mrf.mxu0
  %v195 = vadd.f32 %v72, %v194
  %v196 = vpop.f32.mrf.mxu0
  %v197 = vpop.f32.mrf.mxu0
  %v198 = vadd.f32 %v77, %v197
  %v199 = vpop.f32.mrf.mxu0
  %200 = vdwg.mxu0
  %201 = vst [vmem:[%s3] sm:$0xff] %v171
  %202 = vst [vmem:[%s3 + $0x8] sm:$0xff] %v174
  %203 = vst [vmem:[%s3 + $0x10] sm:$0xff] %v179
  %204 = vst [vmem:[%s3 + $0x18] sm:$0xff] %v182
  %205 = vst [vmem:[%s3 + $0x20] sm:$0xff] %v187
  %206 = vst [vmem:[%s3 + $0x28] sm:$0xff] %v190
  %207 = vst [vmem:[%s3 + $0x30] sm:$0xff] %v195
  %208 = vst [vmem:[%s3 + $0x38] sm:$0xff] %v198
  // Predicated region
  $region14: #{moc_backbone_forward.34} parent=0 // pred_check
    _
  $region15: #{moc_backbone_forward.34} parent=0 // pred_check_branch
    %210 = sbr.rel (0) target = $region17
  $region16: #{moc_backbone_forward.34} parent=0 // pred_region
    _
  $region17: #{moc_backbone_forward.34} parent=0 // pred_fallthru
    _
  // Predicated region
  $region18: #{moc_backbone_forward.34} parent=0 // pred_check
    _
  $region19: #{moc_backbone_forward.34} parent=0 // pred_check_branch
    %212 = sbr.rel (0) target = $region21
  $region20: #{moc_backbone_forward.34} parent=0 // pred_region
    _
  $region21: #{moc_backbone_forward.34} parent=0 // pred_fallthru
    _

// kernel: moc_backbone_forward.33
$region0: #{moc_backbone_forward.33}
  #allocation0 [shape = 'u32[]', space=smem, size = 0x4, offset = 0x4, fixed_abs, tag = 'smem constant byte address 0x4 - core index']
  #allocation1 [shape = 'u32[144,128]{1,0:T(1,128)}', space=vmem, size = 0x12000, scoped, tag = 'internal scratch']
  %s0 = inlined_call_operand.vmem [shape: bf16[64,576], index: 0, kind: input, shape index: {}]
  %s1 = inlined_call_operand.vmem [shape: bf16[576,128], index: 1, kind: input, shape index: {}]
  %s2 = inlined_call_operand.vmem [shape: f32[64,1], index: 2, kind: input, shape index: {}]
  %s3 = inlined_call_operand.vmem [shape: f32[64,128], index: 3, kind: output, shape index: {}]
  %s4 = sld [smem:[#allocation0]]
  $region22: #{moc_backbone_forward.33} parent=0
    _
  %s6 = ssub.s32 1, %s4
  %s7 = scalar_select 0, %s6, %s4
  // Predicated region
  $region2: #{moc_backbone_forward.33} parent=0 // pred_check
    _
  $region3: #{moc_backbone_forward.33} parent=0 // pred_check_branch
    %9 = sbr.rel (0) target = $region5
  $region4: #{moc_backbone_forward.33} parent=0 // pred_region
    _
  $region5: #{moc_backbone_forward.33} parent=0 // pred_fallthru
    _
  // Predicated region
  $region6: #{moc_backbone_forward.33} parent=0 // pred_check
    _
  $region7: #{moc_backbone_forward.33} parent=0 // pred_check_branch
    %11 = sbr.rel (0) target = $region9
  $region8: #{moc_backbone_forward.33} parent=0 // pred_region
    _
  $region9: #{moc_backbone_forward.33} parent=0 // pred_fallthru
    _
  // Predicated region
  $region10: #{moc_backbone_forward.33} parent=0 // pred_check
    _
  $region11: #{moc_backbone_forward.33} parent=0 // pred_check_branch
    %13 = sbr.rel (0) target = $region13
  $region12: #{moc_backbone_forward.33} parent=0 // pred_region
    _
  $region13: #{moc_backbone_forward.33} parent=0 // pred_fallthru
    _
  %v15 = vld [vmem:[%s0] sm:$0xff]
  %v16 = vld [vmem:[%s0 + $0x8] sm:$0xff]
  %v17 = vld [vmem:[%s0 + $0x10] sm:$0xf]
  %v18 = vld [vmem:[%s0 + $0x14] sm:$0xff]
  %v19 = vld [vmem:[%s0 + $0x1c] sm:$0xff]
  %v20 = vld [vmem:[%s0 + $0x24] sm:$0xf]
  %v21 = vld [vmem:[%s0 + $0x28] sm:$0xff]
  %v22 = vld [vmem:[%s0 + $0x30] sm:$0xff]
  %v23 = vld [vmem:[%s0 + $0x38] sm:$0xf]
  %v24 = vld [vmem:[%s0 + $0x3c] sm:$0xff]
  %v25 = vld [vmem:[%s0 + $0x44] sm:$0xff]
  %v26 = vld [vmem:[%s0 + $0x4c] sm:$0xf]
  %v27 = vld [vmem:[%s0 + $0x50] sm:$0xff]
  %v28 = vld [vmem:[%s0 + $0x58] sm:$0xff]
  %v29 = vld [vmem:[%s0 + $0x60] sm:$0xf]
  %v30 = vld [vmem:[%s0 + $0x64] sm:$0xff]
  %v31 = vld [vmem:[%s0 + $0x6c] sm:$0xff]
  %v32 = vld [vmem:[%s0 + $0x74] sm:$0xf]
  %v33 = vld [vmem:[%s0 + $0x78] sm:$0xff]
  %v34 = vld [vmem:[%s0 + $0x80] sm:$0xff]
  %v35 = vld [vmem:[%s0 + $0x88] sm:$0xf]
  %v36 = vld [vmem:[%s0 + $0x8c] sm:$0xff]
  %v37 = vld [vmem:[%s0 + $0x94] sm:$0xff]
  %v38 = vld [vmem:[%s0 + $0x9c] sm:$0xf]
  %v39 = vld [vmem:[%s1] sm:$0xf]
  %v40 = vld [vmem:[%s1 + $0x4] sm:$0xf]
  %v41 = vld [vmem:[%s1 + $0x8] sm:$0xf]
  %v42 = vld [vmem:[%s1 + $0xc] sm:$0xf]
  %v43 = vld [vmem:[%s1 + $0x10] sm:$0xf]
  %v44 = vld [vmem:[%s1 + $0x14] sm:$0xf]
  %v45 = vld [vmem:[%s1 + $0x18] sm:$0xf]
  %v46 = vld [vmem:[%s1 + $0x1c] sm:$0xf]
  %v47 = vld [vmem:[%s1 + $0x20] sm:$0xf]
  %v48 = vld [vmem:[%s1 + $0x24] sm:$0xf]
  %v49 = vld [vmem:[%s1 + $0x28] sm:$0xf]
  %v50 = vld [vmem:[%s1 + $0x2c] sm:$0xf]
  %v51 = vld [vmem:[%s1 + $0x30] sm:$0xf]
  %v52 = vld [vmem:[%s1 + $0x34] sm:$0xf]
  %v53 = vld [vmem:[%s1 + $0x38] sm:$0xf]
  %v54 = vld [vmem:[%s1 + $0x3c] sm:$0xf]
  %v55 = vld [vmem:[%s1 + $0x40] sm:$0xf]
  %v56 = vld [vmem:[%s1 + $0x44] sm:$0xf]
  %v57 = vld [vmem:[%s1 + $0x48] sm:$0xf]
  %v58 = vld [vmem:[%s1 + $0x4c] sm:$0xf]
  %v59 = vld [vmem:[%s1 + $0x50] sm:$0xf]
  %v60 = vld [vmem:[%s1 + $0x54] sm:$0xf]
  %v61 = vld [vmem:[%s1 + $0x58] sm:$0xf]
  %v62 = vld [vmem:[%s1 + $0x5c] sm:$0xf]
  %v63 = vld [vmem:[%s1 + $0x60] sm:$0xf]
  %v64 = vld [vmem:[%s1 + $0x64] sm:$0xf]
  %v65 = vld [vmem:[%s1 + $0x68] sm:$0xf]
  %v66 = vld [vmem:[%s1 + $0x6c] sm:$0xf]
  %v67 = vld [vmem:[%s1 + $0x70] sm:$0xf]
  %v68 = vld [vmem:[%s1 + $0x74] sm:$0xf]
  %v69 = vld [vmem:[%s1 + $0x78] sm:$0xf]
  %v70 = vld [vmem:[%s1 + $0x7c] sm:$0xf]
  %v71 = vld [vmem:[%s1 + $0x80] sm:$0xf]
  %v72 = vld [vmem:[%s1 + $0x84] sm:$0xf]
  %v73 = vld [vmem:[%s1 + $0x88] sm:$0xf]
  %v74 = vld [vmem:[%s1 + $0x8c] sm:$0xf]
  %v75 = vld [vmem:[%s1 + $0x90] sm:$0xf]
  %v76 = vld [vmem:[%s1 + $0x94] sm:$0xf]
  %v77 = vld [vmem:[%s1 + $0x98] sm:$0xf]
  %v78 = vld [vmem:[%s1 + $0x9c] sm:$0xf]
  %v79 = vld [vmem:[%s1 + $0xa0] sm:$0xf]
  %v80 = vld [vmem:[%s1 + $0xa4] sm:$0xf]
  %v81 = vld [vmem:[%s1 + $0xa8] sm:$0xf]
  %v82 = vld [vmem:[%s1 + $0xac] sm:$0xf]
  %v83 = vld [vmem:[%s1 + $0xb0] sm:$0xf]
  %v84 = vld [vmem:[%s1 + $0xb4] sm:$0xf]
  %v85 = vld [vmem:[%s1 + $0xb8] sm:$0xf]
  %v86 = vld [vmem:[%s1 + $0xbc] sm:$0xf]
  %v87 = vld [vmem:[%s1 + $0xc0] sm:$0xf]
  %v88 = vld [vmem:[%s1 + $0xc4] sm:$0xf]
  %v89 = vld [vmem:[%s1 + $0xc8] sm:$0xf]
  %v90 = vld [vmem:[%s1 + $0xcc] sm:$0xf]
  %v91 = vld [vmem:[%s1 + $0xd0] sm:$0xf]
  %v92 = vld [vmem:[%s1 + $0xd4] sm:$0xf]
  %v93 = vld [vmem:[%s1 + $0xd8] sm:$0xf]
  %v94 = vld [vmem:[%s1 + $0xdc] sm:$0xf]
  %v95 = vld [vmem:[%s1 + $0xe0] sm:$0xf]
  %v96 = vld [vmem:[%s1 + $0xe4] sm:$0xf]
  %v97 = vld [vmem:[%s1 + $0xe8] sm:$0xf]
  %v98 = vld [vmem:[%s1 + $0xec] sm:$0xf]
  %v99 = vld [vmem:[%s1 + $0xf0] sm:$0xf]
  %v100 = vld [vmem:[%s1 + $0xf4] sm:$0xf]
  %v101 = vld [vmem:[%s1 + $0xf8] sm:$0xf]
  %v102 = vld [vmem:[%s1 + $0xfc] sm:$0xf]
  %v103 = vld [vmem:[%s1 + $0x100] sm:$0xf]
  %v104 = vld [vmem:[%s1 + $0x104] sm:$0xf]
  %v105 = vld [vmem:[%s1 + $0x108] sm:$0xf]
  %v106 = vld [vmem:[%s1 + $0x10c] sm:$0xf]
  %v107 = vld [vmem:[%s1 + $0x110] sm:$0xf]
  %v108 = vld [vmem:[%s1 + $0x114] sm:$0xf]
  %v109 = vld [vmem:[%s1 + $0x118] sm:$0xf]
  %v110 = vld [vmem:[%s1 + $0x11c] sm:$0xf]
  %v111 = vld [vmem:[%s2] sm:$0xff]
  %v112 = vld [vmem:[%s2 + $0x8] sm:$0xff]
  %v113 = vld [vmem:[%s2 + $0x10] sm:$0xff]
  %v114 = vld [vmem:[%s2 + $0x18] sm:$0xff]
  %v115 = vld [vmem:[%s2 + $0x20] sm:$0xff]
  %v116 = vld [vmem:[%s2 + $0x28] sm:$0xff]
  %v117 = vld [vmem:[%s2 + $0x30] sm:$0xff]
  %v118 = vld [vmem:[%s2 + $0x38] sm:$0xff]
  %120 = vset.pattern.permute.xlu0 0
  %121 = vperm.xlu0 %120, %v111
  %v122 = vpop.permute.xlu0 %121
  %125 = vset.pattern.permute.xlu0 0
  %126 = vperm.xlu0 %125, %v112
  %v127 = vpop.permute.xlu0 %126
  %130 = vset.pattern.permute.xlu0 0
  %131 = vperm.xlu0 %130, %v113
  %v132 = vpop.permute.xlu0 %131
  %135 = vset.pattern.permute.xlu0 0
  %136 = vperm.xlu0 %135, %v114
  %v137 = vpop.permute.xlu0 %136
  %140 = vset.pattern.permute.xlu0 0
  %141 = vperm.xlu0 %140, %v115
  %v142 = vpop.permute.xlu0 %141
  %145 = vset.pattern.permute.xlu0 0
  %146 = vperm.xlu0 %145, %v116
  %v147 = vpop.permute.xlu0 %146
  %150 = vset.pattern.permute.xlu0 0
  %151 = vperm.xlu0 %150, %v117
  %v152 = vpop.permute.xlu0 %151
  %155 = vset.pattern.permute.xlu0 0
  %156 = vperm.xlu0 %155, %v118
  %v157 = vpop.permute.xlu0 %156
  %v183 = vunpack.c.l.b16 %v15
  %v184 = vunpack.c.h.b16 %v15
  %v185 = vunpack.c.l.b16 %v16
  %v186 = vunpack.c.h.b16 %v16
  %v187 = vunpack.c.l.b16 %v17
  %v188 = vunpack.c.l.b16 %v18
  %v189 = vunpack.c.h.b16 %v18
  %v190 = vunpack.c.l.b16 %v19
  %v191 = vunpack.c.h.b16 %v19
  %v192 = vunpack.c.l.b16 %v20
  %v193 = vunpack.c.l.b16 %v21
  %v194 = vunpack.c.h.b16 %v21
  %v195 = vunpack.c.l.b16 %v22
  %v196 = vunpack.c.h.b16 %v22
  %v197 = vunpack.c.l.b16 %v23
  %v198 = vunpack.c.l.b16 %v24
  %v199 = vunpack.c.h.b16 %v24
  %v200 = vunpack.c.l.b16 %v25
  %v201 = vunpack.c.h.b16 %v25
  %v202 = vunpack.c.l.b16 %v26
  %v203 = vunpack.c.l.b16 %v27
  %v204 = vunpack.c.h.b16 %v27
  %v205 = vunpack.c.l.b16 %v28
  %v206 = vunpack.c.h.b16 %v28
  %v207 = vunpack.c.l.b16 %v29
  %v208 = vunpack.c.l.b16 %v30
  %v209 = vunpack.c.h.b16 %v30
  %v210 = vunpack.c.l.b16 %v31
  %v211 = vunpack.c.h.b16 %v31
  %v212 = vunpack.c.l.b16 %v32
  %v213 = vunpack.c.l.b16 %v33
  %v214 = vunpack.c.h.b16 %v33
  %v215 = vunpack.c.l.b16 %v34
  %v216 = vunpack.c.h.b16 %v34
  %v217 = vunpack.c.l.b16 %v35
  %v218 = vunpack.c.l.b16 %v36
  %v219 = vunpack.c.h.b16 %v36
  %v220 = vunpack.c.l.b16 %v37
  %v221 = vunpack.c.h.b16 %v37
  %v222 = vunpack.c.l.b16 %v38
  %v223 = vpack.c.b16 %v188, %v183
  %v224 = vpack.c.b16 %v189, %v184
  %v225 = vpack.c.b16 %v190, %v185
  %v226 = vpack.c.b16 %v191, %v186
  %v227 = vpack.c.b16 %v192, %v187
  %v228 = vpack.c.b16 %v198, %v193
  %v229 = vpack.c.b16 %v199, %v194
  %v230 = vpack.c.b16 %v200, %v195
  %v231 = vpack.c.b16 %v201, %v196
  %v232 = vpack.c.b16 %v202, %v197
  %v233 = vpack.c.b16 %v208, %v203
  %v234 = vpack.c.b16 %v209, %v204
  %v235 = vpack.c.b16 %v210, %v205
  %v236 = vpack.c.b16 %v211, %v206
  %v237 = vpack.c.b16 %v212, %v207
  %v238 = vpack.c.b16 %v218, %v213
  %v239 = vpack.c.b16 %v219, %v214
  %v240 = vpack.c.b16 %v220, %v215
  %v241 = vpack.c.b16 %v221, %v216
  %v242 = vpack.c.b16 %v222, %v217
  %v331 = vunpack.c.l.b16 %v39
  %v332 = vunpack.c.l.b16 %v40
  %v333 = vunpack.c.l.b16 %v41
  %v334 = vunpack.c.l.b16 %v42
  %v335 = vunpack.c.l.b16 %v43
  %v336 = vunpack.c.l.b16 %v44
  %v337 = vunpack.c.l.b16 %v45
  %v338 = vunpack.c.l.b16 %v46
  %v339 = vunpack.c.l.b16 %v47
  %v340 = vunpack.c.l.b16 %v48
  %v341 = vunpack.c.l.b16 %v49
  %v342 = vunpack.c.l.b16 %v50
  %v343 = vunpack.c.l.b16 %v51
  %v344 = vunpack.c.l.b16 %v52
  %v345 = vunpack.c.l.b16 %v53
  %v346 = vunpack.c.l.b16 %v54
  %v347 = vunpack.c.l.b16 %v55
  %v348 = vunpack.c.l.b16 %v56
  %v349 = vunpack.c.l.b16 %v57
  %v350 = vunpack.c.l.b16 %v58
  %v351 = vunpack.c.l.b16 %v59
  %v352 = vunpack.c.l.b16 %v60
  %v353 = vunpack.c.l.b16 %v61
  %v354 = vunpack.c.l.b16 %v62
  %v355 = vunpack.c.l.b16 %v63
  %v356 = vunpack.c.l.b16 %v64
  %v357 = vunpack.c.l.b16 %v65
  %v358 = vunpack.c.l.b16 %v66
  %v359 = vunpack.c.l.b16 %v67
  %v360 = vunpack.c.l.b16 %v68
  %v361 = vunpack.c.l.b16 %v69
  %v362 = vunpack.c.l.b16 %v70
  %v363 = vunpack.c.l.b16 %v71
  %v364 = vunpack.c.l.b16 %v72
  %v365 = vunpack.c.l.b16 %v73
  %v366 = vunpack.c.l.b16 %v74
  %v367 = vunpack.c.l.b16 %v75
  %v368 = vunpack.c.l.b16 %v76
  %v369 = vunpack.c.l.b16 %v77
  %v370 = vunpack.c.l.b16 %v78
  %v371 = vunpack.c.l.b16 %v79
  %v372 = vunpack.c.l.b16 %v80
  %v373 = vunpack.c.l.b16 %v81
  %v374 = vunpack.c.l.b16 %v82
  %v375 = vunpack.c.l.b16 %v83
  %v376 = vunpack.c.l.b16 %v84
  %v377 = vunpack.c.l.b16 %v85
  %v378 = vunpack.c.l.b16 %v86
  %v379 = vunpack.c.l.b16 %v87
  %v380 = vunpack.c.l.b16 %v88
  %v381 = vunpack.c.l.b16 %v89
  %v382 = vunpack.c.l.b16 %v90
  %v383 = vunpack.c.l.b16 %v91
  %v384 = vunpack.c.l.b16 %v92
  %v385 = vunpack.c.l.b16 %v93
  %v386 = vunpack.c.l.b16 %v94
  %v387 = vunpack.c.l.b16 %v95
  %v388 = vunpack.c.l.b16 %v96
  %v389 = vunpack.c.l.b16 %v97
  %v390 = vunpack.c.l.b16 %v98
  %v391 = vunpack.c.l.b16 %v99
  %v392 = vunpack.c.l.b16 %v100
  %v393 = vunpack.c.l.b16 %v101
  %v394 = vunpack.c.l.b16 %v102
  %v395 = vunpack.c.l.b16 %v103
  %v396 = vunpack.c.l.b16 %v104
  %v397 = vunpack.c.l.b16 %v105
  %v398 = vunpack.c.l.b16 %v106
  %v399 = vunpack.c.l.b16 %v107
  %v400 = vunpack.c.l.b16 %v108
  %v401 = vunpack.c.l.b16 %v109
  %v402 = vunpack.c.l.b16 %v110
  %v403 = vpack.c.b16 %v332, %v331
  %v404 = vpack.c.b16 %v334, %v333
  %v405 = vpack.c.b16 %v336, %v335
  %v406 = vpack.c.b16 %v338, %v337
  %v407 = vpack.c.b16 %v340, %v339
  %v408 = vpack.c.b16 %v342, %v341
  %v409 = vpack.c.b16 %v344, %v343
  %v410 = vpack.c.b16 %v346, %v345
  %v411 = vpack.c.b16 %v348, %v347
  %v412 = vpack.c.b16 %v350, %v349
  %v413 = vpack.c.b16 %v352, %v351
  %v414 = vpack.c.b16 %v354, %v353
  %v415 = vpack.c.b16 %v356, %v355
  %v416 = vpack.c.b16 %v358, %v357
  %v417 = vpack.c.b16 %v360, %v359
  %v418 = vpack.c.b16 %v362, %v361
  %v419 = vpack.c.b16 %v364, %v363
  %v420 = vpack.c.b16 %v366, %v365
  %v421 = vpack.c.b16 %v368, %v367
  %v422 = vpack.c.b16 %v370, %v369
  %v423 = vpack.c.b16 %v372, %v371
  %v424 = vpack.c.b16 %v374, %v373
  %v425 = vpack.c.b16 %v376, %v375
  %v426 = vpack.c.b16 %v378, %v377
  %v427 = vpack.c.b16 %v380, %v379
  %v428 = vpack.c.b16 %v382, %v381
  %v429 = vpack.c.b16 %v384, %v383
  %v430 = vpack.c.b16 %v386, %v385
  %v431 = vpack.c.b16 %v388, %v387
  %v432 = vpack.c.b16 %v390, %v389
  %v433 = vpack.c.b16 %v392, %v391
  %v434 = vpack.c.b16 %v394, %v393
  %v435 = vpack.c.b16 %v396, %v395
  %v436 = vpack.c.b16 %v398, %v397
  %v437 = vpack.c.b16 %v400, %v399
  %v438 = vpack.c.b16 %v402, %v401
  %vm475 = vcmask 523264
  %v477 = vsel %vm475, %v227, 0
  %v480 = vsel %vm475, %v232, 0
  %v483 = vsel %vm475, %v237, 0
  %v486 = vsel %vm475, %v242, 0
  %488 = vmatprep.subr.bf16.mxu0 0
  %489 = vmatpush1.bf16.msra.mxu0 %v410
  %490 = vmatprep.subr.bf16.mxu0 0
  %491 = vmatpush1.bf16.msra.mxu0 %v409
  %492 = vmatprep.subr.bf16.mxu0 0
  %493 = vmatpush1.bf16.msra.mxu0 %v408
  %494 = vmatprep.subr.bf16.mxu0 0
  %495 = vmatpush1.bf16.msra.mxu0 %v407
  %496 = vmatprep.subr.bf16.mxu0 0
  %497 = vmatpush1.bf16.msra.mxu0 %v406
  %498 = vmatprep.subr.bf16.mxu0 0
  %499 = vmatpush1.bf16.msra.mxu0 %v405
  %500 = vmatprep.subr.bf16.mxu0 0
  %501 = vmatpush1.bf16.msra.mxu0 %v404
  %502 = vmatprep.subr.bf16.mxu0 0
  %503 = vmatpush1.bf16.msra.mxu0 %v403
  %504 = vmatprep.subr.bf16.mxu0 0
  %505 = vmatpush2.bf16.msra.mxu0 %v418
  %506 = vmatprep.subr.bf16.mxu0 0
  %507 = vmatpush2.bf16.msra.mxu0 %v417
  %508 = vmatprep.subr.bf16.mxu0 0
  %509 = vmatpush2.bf16.msra.mxu0 %v416
  %510 = vmatprep.subr.bf16.mxu0 0
  %511 = vmatpush2.bf16.msra.mxu0 %v415
  %512 = vmatprep.subr.bf16.mxu0 0
  %513 = vmatpush2.bf16.msra.mxu0 %v414
  %514 = vmatprep.subr.bf16.mxu0 0
  %515 = vmatpush2.bf16.msra.mxu0 %v413
  %516 = vmatprep.subr.bf16.mxu0 0
  %517 = vmatpush2.bf16.msra.mxu0 %v412
  %518 = vmatprep.subr.bf16.mxu0 0
  %519 = vmatpush2.bf16.msra.mxu0 %v411
  %520 = vmatprep.mubr.bf16.mxu0 %v224
  %521 = vmatmul.mubr.bf16.gmra.mxu0 %v223
  %v522 = vpop.f32.mrf.mxu0
  %v523 = vadd.f32 %v122, %v522
  %v524 = vpop.f32.mrf.mxu0
  %v525 = vpop.f32.mrf.mxu0
  %v526 = vadd.f32 %v127, %v525
  %v527 = vpop.f32.mrf.mxu0
  %528 = vmatprep.mubr.bf16.mxu0 %v229
  %529 = vmatmul.mubr.bf16.gmra.mxu0 %v228
  %v530 = vpop.f32.mrf.mxu0
  %v531 = vadd.f32 %v132, %v530
  %v532 = vpop.f32.mrf.mxu0
  %v533 = vpop.f32.mrf.mxu0
  %v534 = vadd.f32 %v137, %v533
  %v535 = vpop.f32.mrf.mxu0
  %536 = vmatprep.mubr.bf16.mxu0 %v234
  %537 = vmatmul.mubr.bf16.gmra.mxu0 %v233
  %v538 = vpop.f32.mrf.mxu0
  %v539 = vadd.f32 %v142, %v538
  %v540 = vpop.f32.mrf.mxu0
  %v541 = vpop.f32.mrf.mxu0
  %v542 = vadd.f32 %v147, %v541
  %v543 = vpop.f32.mrf.mxu0
  %544 = vmatprep.mubr.bf16.mxu0 %v239
  %545 = vmatmul.mubr.bf16.gmra.mxu0 %v238
  %v546 = vpop.f32.mrf.mxu0
  %v547 = vadd.f32 %v152, %v546
  %v548 = vpop.f32.mrf.mxu0
  %v549 = vpop.f32.mrf.mxu0
  %v550 = vadd.f32 %v157, %v549
  %v551 = vpop.f32.mrf.mxu0
  %552 = vdwg.mxu0
  %553 = vmatprep.subr.bf16.mxu0 0
  %554 = vmatpush1.bf16.msra.mxu0 %v426
  %555 = vmatprep.subr.bf16.mxu0 0
  %556 = vmatpush1.bf16.msra.mxu0 %v425
  %557 = vmatprep.subr.bf16.mxu0 0
  %558 = vmatpush1.bf16.msra.mxu0 %v424
  %559 = vmatprep.subr.bf16.mxu0 0
  %560 = vmatpush1.bf16.msra.mxu0 %v423
  %561 = vmatprep.subr.bf16.mxu0 0
  %562 = vmatpush1.bf16.msra.mxu0 %v422
  %563 = vmatprep.subr.bf16.mxu0 0
  %564 = vmatpush1.bf16.msra.mxu0 %v421
  %565 = vmatprep.subr.bf16.mxu0 0
  %566 = vmatpush1.bf16.msra.mxu0 %v420
  %567 = vmatprep.subr.bf16.mxu0 0
  %568 = vmatpush1.bf16.msra.mxu0 %v419
  %569 = vmatprep.subr.bf16.mxu0 0
  %570 = vmatpush2.bf16.msra.mxu0 %v434
  %571 = vmatprep.subr.bf16.mxu0 0
  %572 = vmatpush2.bf16.msra.mxu0 %v433
  %573 = vmatprep.subr.bf16.mxu0 0
  %574 = vmatpush2.bf16.msra.mxu0 %v432
  %575 = vmatprep.subr.bf16.mxu0 0
  %576 = vmatpush2.bf16.msra.mxu0 %v431
  %577 = vmatprep.subr.bf16.mxu0 0
  %578 = vmatpush2.bf16.msra.mxu0 %v430
  %579 = vmatprep.subr.bf16.mxu0 0
  %580 = vmatpush2.bf16.msra.mxu0 %v429
  %581 = vmatprep.subr.bf16.mxu0 0
  %582 = vmatpush2.bf16.msra.mxu0 %v428
  %583 = vmatprep.subr.bf16.mxu0 0
  %584 = vmatpush2.bf16.msra.mxu0 %v427
  %585 = vmatprep.mubr.bf16.mxu0 %v226
  %586 = vmatmul.mubr.bf16.gmra.mxu0 %v225
  %v587 = vpop.f32.mrf.mxu0
  %v588 = vadd.f32 %v523, %v587
  %v589 = vpop.f32.mrf.mxu0
  %v590 = vpop.f32.mrf.mxu0
  %v591 = vadd.f32 %v526, %v590
  %v592 = vpop.f32.mrf.mxu0
  %593 = vmatprep.mubr.bf16.mxu0 %v231
  %594 = vmatmul.mubr.bf16.gmra.mxu0 %v230
  %v595 = vpop.f32.mrf.mxu0
  %v596 = vadd.f32 %v531, %v595
  %v597 = vpop.f32.mrf.mxu0
  %v598 = vpop.f32.mrf.mxu0
  %v599 = vadd.f32 %v534, %v598
  %v600 = vpop.f32.mrf.mxu0
  %601 = vmatprep.mubr.bf16.mxu0 %v236
  %602 = vmatmul.mubr.bf16.gmra.mxu0 %v235
  %v603 = vpop.f32.mrf.mxu0
  %v604 = vadd.f32 %v539, %v603
  %v605 = vpop.f32.mrf.mxu0
  %v606 = vpop.f32.mrf.mxu0
  %v607 = vadd.f32 %v542, %v606
  %v608 = vpop.f32.mrf.mxu0
  %609 = vmatprep.mubr.bf16.mxu0 %v241
  %610 = vmatmul.mubr.bf16.gmra.mxu0 %v240
  %v611 = vpop.f32.mrf.mxu0
  %v612 = vadd.f32 %v547, %v611
  %v613 = vpop.f32.mrf.mxu0
  %v614 = vpop.f32.mrf.mxu0
  %v615 = vadd.f32 %v550, %v614
  %v616 = vpop.f32.mrf.mxu0
  %617 = vdwg.mxu0
  %618 = vmatprep.subr.bf16.mxu0 0
  %619 = vmatpush1.bf16.msra.mxu0 0
  %620 = vmatprep.subr.bf16.mxu0 0
  %621 = vmatpush1.bf16.msra.mxu0 0
  %622 = vmatprep.subr.bf16.mxu0 0
  %623 = vmatpush1.bf16.msra.mxu0 0
  %624 = vmatprep.subr.bf16.mxu0 0
  %625 = vmatpush1.bf16.msra.mxu0 0
  %626 = vmatprep.subr.bf16.mxu0 0
  %627 = vmatpush1.bf16.msra.mxu0 %v438
  %628 = vmatprep.subr.bf16.mxu0 0
  %629 = vmatpush1.bf16.msra.mxu0 %v437
  %630 = vmatprep.subr.bf16.mxu0 0
  %631 = vmatpush1.bf16.msra.mxu0 %v436
  %632 = vmatprep.subr.bf16.mxu0 0
  %633 = vmatpush1.bf16.msra.mxu0 %v435
  %634 = vmatprep.subr.bf16.mxu0 0
  %635 = vmatpush2.bf16.msra.mxu0 0
  %636 = vmatprep.subr.bf16.mxu0 0
  %637 = vmatpush2.bf16.msra.mxu0 0
  %638 = vmatprep.subr.bf16.mxu0 0
  %639 = vmatpush2.bf16.msra.mxu0 0
  %640 = vmatprep.subr.bf16.mxu0 0
  %641 = vmatpush2.bf16.msra.mxu0 0
  %642 = vmatprep.subr.bf16.mxu0 0
  %643 = vmatpush2.bf16.msra.mxu0 0
  %644 = vmatprep.subr.bf16.mxu0 0
  %645 = vmatpush2.bf16.msra.mxu0 0
  %646 = vmatprep.subr.bf16.mxu0 0
  %647 = vmatpush2.bf16.msra.mxu0 0
  %648 = vmatprep.subr.bf16.mxu0 0
  %649 = vmatpush2.bf16.msra.mxu0 0
  %650 = vmatprep.mubr.bf16.mxu0 0
  %651 = vmatmul.mubr.bf16.gmra.mxu0 %v477
  %v652 = vpop.f32.mrf.mxu0
  %v653 = vadd.f32 %v588, %v652
  %v654 = vpop.f32.mrf.mxu0
  %v655 = vpop.f32.mrf.mxu0
  %v656 = vadd.f32 %v591, %v655
  %v657 = vpop.f32.mrf.mxu0
  %658 = vmatprep.mubr.bf16.mxu0 0
  %659 = vmatmul.mubr.bf16.gmra.mxu0 %v480
  %v660 = vpop.f32.mrf.mxu0
  %v661 = vadd.f32 %v596, %v660
  %v662 = vpop.f32.mrf.mxu0
  %v663 = vpop.f32.mrf.mxu0
  %v664 = vadd.f32 %v599, %v663
  %v665 = vpop.f32.mrf.mxu0
  %666 = vmatprep.mubr.bf16.mxu0 0
  %667 = vmatmul.mubr.bf16.gmra.mxu0 %v483
  %v668 = vpop.f32.mrf.mxu0
  %v669 = vadd.f32 %v604, %v668
  %v670 = vpop.f32.mrf.mxu0
  %v671 = vpop.f32.mrf.mxu0
  %v672 = vadd.f32 %v607, %v671
  %v673 = vpop.f32.mrf.mxu0
  %674 = vmatprep.mubr.bf16.mxu0 0
  %675 = vmatmul.mubr.bf16.gmra.mxu0 %v486
  %v676 = vpop.f32.mrf.mxu0
  %v677 = vadd.f32 %v612, %v676
  %v678 = vpop.f32.mrf.mxu0
  %v679 = vpop.f32.mrf.mxu0
  %v680 = vadd.f32 %v615, %v679
  %v681 = vpop.f32.mrf.mxu0
  %682 = vdwg.mxu0
  %v683 = vmax.f32 %v653, 0.0
  %v684 = vmax.f32 %v656, 0.0
  %v685 = vmax.f32 %v661, 0.0
  %v686 = vmax.f32 %v664, 0.0
  %v687 = vmax.f32 %v669, 0.0
  %v688 = vmax.f32 %v672, 0.0
  %v689 = vmax.f32 %v677, 0.0
  %v690 = vmax.f32 %v680, 0.0
  %691 = vst [vmem:[%s3] sm:$0xff] %v683
  %692 = vst [vmem:[%s3 + $0x8] sm:$0xff] %v684
  %693 = vst [vmem:[%s3 + $0x10] sm:$0xff] %v685
  %694 = vst [vmem:[%s3 + $0x18] sm:$0xff] %v686
  %695 = vst [vmem:[%s3 + $0x20] sm:$0xff] %v687
  %696 = vst [vmem:[%s3 + $0x28] sm:$0xff] %v688
  %697 = vst [vmem:[%s3 + $0x30] sm:$0xff] %v689
  %698 = vst [vmem:[%s3 + $0x38] sm:$0xff] %v690
  // Predicated region
  $region14: #{moc_backbone_forward.33} parent=0 // pred_check
    _
  $region15: #{moc_backbone_forward.33} parent=0 // pred_check_branch
    %700 = sbr.rel (0) target = $region17
  $region16: #{moc_backbone_forward.33} parent=0 // pred_region
    _
  $region17: #{moc_backbone_forward.33} parent=0 // pred_fallthru
    _
  // Predicated region
  $region18: #{moc_backbone_forward.33} parent=0 // pred_check
    _
  $region19: #{moc_backbone_forward.33} parent=0 // pred_check_branch
    %702 = sbr.rel (0) target = $region21
  $region20: #{moc_backbone_forward.33} parent=0 // pred_region
    _
  $region21: #{moc_backbone_forward.33} parent=0 // pred_fallthru
    _

// kernel: moc_backbone_forward.36
$region0: #{moc_backbone_forward.36}
  #allocation0 [shape = 'u32[]', space=smem, size = 0x4, offset = 0x4, fixed_abs, tag = 'smem constant byte address 0x4 - core index']
  #allocation1 [shape = 'u32[144,128]{1,0:T(1,128)}', space=vmem, size = 0x12000, scoped, tag = 'internal scratch']
  %s0 = inlined_call_operand.vmem [shape: bf16[64,256], index: 0, kind: input, shape index: {}]
  %s1 = inlined_call_operand.vmem [shape: bf16[256,128], index: 1, kind: input, shape index: {}]
  %s2 = inlined_call_operand.vmem [shape: f32[64,1], index: 2, kind: input, shape index: {}]
  %s3 = inlined_call_operand.vmem [shape: f32[64,128], index: 3, kind: output, shape index: {}]
  %s4 = sld [smem:[#allocation0]]
  $region22: #{moc_backbone_forward.36} parent=0
    _
  %s6 = ssub.s32 1, %s4
  %s7 = scalar_select 0, %s6, %s4
  // Predicated region
  $region2: #{moc_backbone_forward.36} parent=0 // pred_check
    _
  $region3: #{moc_backbone_forward.36} parent=0 // pred_check_branch
    %9 = sbr.rel (0) target = $region5
  $region4: #{moc_backbone_forward.36} parent=0 // pred_region
    _
  $region5: #{moc_backbone_forward.36} parent=0 // pred_fallthru
    _
  // Predicated region
  $region6: #{moc_backbone_forward.36} parent=0 // pred_check
    _
  $region7: #{moc_backbone_forward.36} parent=0 // pred_check_branch
    %11 = sbr.rel (0) target = $region9
  $region8: #{moc_backbone_forward.36} parent=0 // pred_region
    _
  $region9: #{moc_backbone_forward.36} parent=0 // pred_fallthru
    _
  // Predicated region
  $region10: #{moc_backbone_forward.36} parent=0 // pred_check
    _
  $region11: #{moc_backbone_forward.36} parent=0 // pred_check_branch
    %13 = sbr.rel (0) target = $region13
  $region12: #{moc_backbone_forward.36} parent=0 // pred_region
    _
  $region13: #{moc_backbone_forward.36} parent=0 // pred_fallthru
    _
  %v15 = vld [vmem:[%s0] sm:$0xff]
  %v16 = vld [vmem:[%s0 + $0x8] sm:$0xff]
  %v17 = vld [vmem:[%s0 + $0x10] sm:$0xff]
  %v18 = vld [vmem:[%s0 + $0x18] sm:$0xff]
  %v19 = vld [vmem:[%s0 + $0x20] sm:$0xff]
  %v20 = vld [vmem:[%s0 + $0x28] sm:$0xff]
  %v21 = vld [vmem:[%s0 + $0x30] sm:$0xff]
  %v22 = vld [vmem:[%s0 + $0x38] sm:$0xff]
  %v23 = vld [vmem:[%s1] sm:$0xf]
  %v24 = vld [vmem:[%s1 + $0x4] sm:$0xf]
  %v25 = vld [vmem:[%s1 + $0x8] sm:$0xf]
  %v26 = vld [vmem:[%s1 + $0xc] sm:$0xf]
  %v27 = vld [vmem:[%s1 + $0x10] sm:$0xf]
  %v28 = vld [vmem:[%s1 + $0x14] sm:$0xf]
  %v29 = vld [vmem:[%s1 + $0x18] sm:$0xf]
  %v30 = vld [vmem:[%s1 + $0x1c] sm:$0xf]
  %v31 = vld [vmem:[%s1 + $0x20] sm:$0xf]
  %v32 = vld [vmem:[%s1 + $0x24] sm:$0xf]
  %v33 = vld [vmem:[%s1 + $0x28] sm:$0xf]
  %v34 = vld [vmem:[%s1 + $0x2c] sm:$0xf]
  %v35 = vld [vmem:[%s1 + $0x30] sm:$0xf]
  %v36 = vld [vmem:[%s1 + $0x34] sm:$0xf]
  %v37 = vld [vmem:[%s1 + $0x38] sm:$0xf]
  %v38 = vld [vmem:[%s1 + $0x3c] sm:$0xf]
  %v39 = vld [vmem:[%s1 + $0x40] sm:$0xf]
  %v40 = vld [vmem:[%s1 + $0x44] sm:$0xf]
  %v41 = vld [vmem:[%s1 + $0x48] sm:$0xf]
  %v42 = vld [vmem:[%s1 + $0x4c] sm:$0xf]
  %v43 = vld [vmem:[%s1 + $0x50] sm:$0xf]
  %v44 = vld [vmem:[%s1 + $0x54] sm:$0xf]
  %v45 = vld [vmem:[%s1 + $0x58] sm:$0xf]
  %v46 = vld [vmem:[%s1 + $0x5c] sm:$0xf]
  %v47 = vld [vmem:[%s1 + $0x60] sm:$0xf]
  %v48 = vld [vmem:[%s1 + $0x64] sm:$0xf]
  %v49 = vld [vmem:[%s1 + $0x68] sm:$0xf]
  %v50 = vld [vmem:[%s1 + $0x6c] sm:$0xf]
  %v51 = vld [vmem:[%s1 + $0x70] sm:$0xf]
  %v52 = vld [vmem:[%s1 + $0x74] sm:$0xf]
  %v53 = vld [vmem:[%s1 + $0x78] sm:$0xf]
  %v54 = vld [vmem:[%s1 + $0x7c] sm:$0xf]
  %v55 = vld [vmem:[%s2] sm:$0xff]
  %v56 = vld [vmem:[%s2 + $0x8] sm:$0xff]
  %v57 = vld [vmem:[%s2 + $0x10] sm:$0xff]
  %v58 = vld [vmem:[%s2 + $0x18] sm:$0xff]
  %v59 = vld [vmem:[%s2 + $0x20] sm:$0xff]
  %v60 = vld [vmem:[%s2 + $0x28] sm:$0xff]
  %v61 = vld [vmem:[%s2 + $0x30] sm:$0xff]
  %v62 = vld [vmem:[%s2 + $0x38] sm:$0xff]
  %64 = vset.pattern.permute.xlu0 0
  %65 = vperm.xlu0 %64, %v55
  %v66 = vpop.permute.xlu0 %65
  %69 = vset.pattern.permute.xlu0 0
  %70 = vperm.xlu0 %69, %v56
  %v71 = vpop.permute.xlu0 %70
  %74 = vset.pattern.permute.xlu0 0
  %75 = vperm.xlu0 %74, %v57
  %v76 = vpop.permute.xlu0 %75
  %79 = vset.pattern.permute.xlu0 0
  %80 = vperm.xlu0 %79, %v58
  %v81 = vpop.permute.xlu0 %80
  %84 = vset.pattern.permute.xlu0 0
  %85 = vperm.xlu0 %84, %v59
  %v86 = vpop.permute.xlu0 %85
  %89 = vset.pattern.permute.xlu0 0
  %90 = vperm.xlu0 %89, %v60
  %v91 = vpop.permute.xlu0 %90
  %94 = vset.pattern.permute.xlu0 0
  %95 = vperm.xlu0 %94, %v61
  %v96 = vpop.permute.xlu0 %95
  %99 = vset.pattern.permute.xlu0 0
  %100 = vperm.xlu0 %99, %v62
  %v101 = vpop.permute.xlu0 %100
  %v111 = vunpack.c.l.b16 %v15
  %v112 = vunpack.c.h.b16 %v15
  %v113 = vunpack.c.l.b16 %v16
  %v114 = vunpack.c.h.b16 %v16
  %v115 = vunpack.c.l.b16 %v17
  %v116 = vunpack.c.h.b16 %v17
  %v117 = vunpack.c.l.b16 %v18
  %v118 = vunpack.c.h.b16 %v18
  %v119 = vunpack.c.l.b16 %v19
  %v120 = vunpack.c.h.b16 %v19
  %v121 = vunpack.c.l.b16 %v20
  %v122 = vunpack.c.h.b16 %v20
  %v123 = vunpack.c.l.b16 %v21
  %v124 = vunpack.c.h.b16 %v21
  %v125 = vunpack.c.l.b16 %v22
  %v126 = vunpack.c.h.b16 %v22
  %v127 = vpack.c.b16 %v113, %v111
  %v128 = vpack.c.b16 %v114, %v112
  %v129 = vpack.c.b16 %v117, %v115
  %v130 = vpack.c.b16 %v118, %v116
  %v131 = vpack.c.b16 %v121, %v119
  %v132 = vpack.c.b16 %v122, %v120
  %v133 = vpack.c.b16 %v125, %v123
  %v134 = vpack.c.b16 %v126, %v124
  %v175 = vunpack.c.l.b16 %v23
  %v176 = vunpack.c.l.b16 %v24
  %v177 = vunpack.c.l.b16 %v25
  %v178 = vunpack.c.l.b16 %v26
  %v179 = vunpack.c.l.b16 %v27
  %v180 = vunpack.c.l.b16 %v28
  %v181 = vunpack.c.l.b16 %v29
  %v182 = vunpack.c.l.b16 %v30
  %v183 = vunpack.c.l.b16 %v31
  %v184 = vunpack.c.l.b16 %v32
  %v185 = vunpack.c.l.b16 %v33
  %v186 = vunpack.c.l.b16 %v34
  %v187 = vunpack.c.l.b16 %v35
  %v188 = vunpack.c.l.b16 %v36
  %v189 = vunpack.c.l.b16 %v37
  %v190 = vunpack.c.l.b16 %v38
  %v191 = vunpack.c.l.b16 %v39
  %v192 = vunpack.c.l.b16 %v40
  %v193 = vunpack.c.l.b16 %v41
  %v194 = vunpack.c.l.b16 %v42
  %v195 = vunpack.c.l.b16 %v43
  %v196 = vunpack.c.l.b16 %v44
  %v197 = vunpack.c.l.b16 %v45
  %v198 = vunpack.c.l.b16 %v46
  %v199 = vunpack.c.l.b16 %v47
  %v200 = vunpack.c.l.b16 %v48
  %v201 = vunpack.c.l.b16 %v49
  %v202 = vunpack.c.l.b16 %v50
  %v203 = vunpack.c.l.b16 %v51
  %v204 = vunpack.c.l.b16 %v52
  %v205 = vunpack.c.l.b16 %v53
  %v206 = vunpack.c.l.b16 %v54
  %v207 = vpack.c.b16 %v176, %v175
  %v208 = vpack.c.b16 %v178, %v177
  %v209 = vpack.c.b16 %v180, %v179
  %v210 = vpack.c.b16 %v182, %v181
  %v211 = vpack.c.b16 %v184, %v183
  %v212 = vpack.c.b16 %v186, %v185
  %v213 = vpack.c.b16 %v188, %v187
  %v214 = vpack.c.b16 %v190, %v189
  %v215 = vpack.c.b16 %v192, %v191
  %v216 = vpack.c.b16 %v194, %v193
  %v217 = vpack.c.b16 %v196, %v195
  %v218 = vpack.c.b16 %v198, %v197
  %v219 = vpack.c.b16 %v200, %v199
  %v220 = vpack.c.b16 %v202, %v201
  %v221 = vpack.c.b16 %v204, %v203
  %v222 = vpack.c.b16 %v206, %v205
  %239 = vmatprep.subr.bf16.mxu0 0
  %240 = vmatpush1.bf16.msra.mxu0 %v214
  %241 = vmatprep.subr.bf16.mxu0 0
  %242 = vmatpush1.bf16.msra.mxu0 %v213
  %243 = vmatprep.subr.bf16.mxu0 0
  %244 = vmatpush1.bf16.msra.mxu0 %v212
  %245 = vmatprep.subr.bf16.mxu0 0
  %246 = vmatpush1.bf16.msra.mxu0 %v211
  %247 = vmatprep.subr.bf16.mxu0 0
  %248 = vmatpush1.bf16.msra.mxu0 %v210
  %249 = vmatprep.subr.bf16.mxu0 0
  %250 = vmatpush1.bf16.msra.mxu0 %v209
  %251 = vmatprep.subr.bf16.mxu0 0
  %252 = vmatpush1.bf16.msra.mxu0 %v208
  %253 = vmatprep.subr.bf16.mxu0 0
  %254 = vmatpush1.bf16.msra.mxu0 %v207
  %255 = vmatprep.subr.bf16.mxu0 0
  %256 = vmatpush2.bf16.msra.mxu0 %v222
  %257 = vmatprep.subr.bf16.mxu0 0
  %258 = vmatpush2.bf16.msra.mxu0 %v221
  %259 = vmatprep.subr.bf16.mxu0 0
  %260 = vmatpush2.bf16.msra.mxu0 %v220
  %261 = vmatprep.subr.bf16.mxu0 0
  %262 = vmatpush2.bf16.msra.mxu0 %v219
  %263 = vmatprep.subr.bf16.mxu0 0
  %264 = vmatpush2.bf16.msra.mxu0 %v218
  %265 = vmatprep.subr.bf16.mxu0 0
  %266 = vmatpush2.bf16.msra.mxu0 %v217
  %267 = vmatprep.subr.bf16.mxu0 0
  %268 = vmatpush2.bf16.msra.mxu0 %v216
  %269 = vmatprep.subr.bf16.mxu0 0
  %270 = vmatpush2.bf16.msra.mxu0 %v215
  %271 = vmatprep.mubr.bf16.mxu0 %v128
  %272 = vmatmul.mubr.bf16.gmra.mxu0 %v127
  %v273 = vpop.f32.mrf.mxu0
  %v274 = vadd.f32 %v66, %v273
  %v275 = vpop.f32.mrf.mxu0
  %v276 = vpop.f32.mrf.mxu0
  %v277 = vadd.f32 %v71, %v276
  %v278 = vpop.f32.mrf.mxu0
  %279 = vmatprep.mubr.bf16.mxu0 %v130
  %280 = vmatmul.mubr.bf16.gmra.mxu0 %v129
  %v281 = vpop.f32.mrf.mxu0
  %v282 = vadd.f32 %v76, %v281
  %v283 = vpop.f32.mrf.mxu0
  %v284 = vpop.f32.mrf.mxu0
  %v285 = vadd.f32 %v81, %v284
  %v286 = vpop.f32.mrf.mxu0
  %287 = vmatprep.mubr.bf16.mxu0 %v132
  %288 = vmatmul.mubr.bf16.gmra.mxu0 %v131
  %v289 = vpop.f32.mrf.mxu0
  %v290 = vadd.f32 %v86, %v289
  %v291 = vpop.f32.mrf.mxu0
  %v292 = vpop.f32.mrf.mxu0
  %v293 = vadd.f32 %v91, %v292
  %v294 = vpop.f32.mrf.mxu0
  %295 = vmatprep.mubr.bf16.mxu0 %v134
  %296 = vmatmul.mubr.bf16.gmra.mxu0 %v133
  %v297 = vpop.f32.mrf.mxu0
  %v298 = vadd.f32 %v96, %v297
  %v299 = vpop.f32.mrf.mxu0
  %v300 = vpop.f32.mrf.mxu0
  %v301 = vadd.f32 %v101, %v300
  %v302 = vpop.f32.mrf.mxu0
  %303 = vdwg.mxu0
  %v304 = vmax.f32 %v274, 0.0
  %v305 = vmax.f32 %v277, 0.0
  %v306 = vmax.f32 %v282, 0.0
  %v307 = vmax.f32 %v285, 0.0
  %v308 = vmax.f32 %v290, 0.0
  %v309 = vmax.f32 %v293, 0.0
  %v310 = vmax.f32 %v298, 0.0
  %v311 = vmax.f32 %v301, 0.0
  %312 = vst [vmem:[%s3] sm:$0xff] %v304
  %313 = vst [vmem:[%s3 + $0x8] sm:$0xff] %v305
  %314 = vst [vmem:[%s3 + $0x10] sm:$0xff] %v306
  %315 = vst [vmem:[%s3 + $0x18] sm:$0xff] %v307
  %316 = vst [vmem:[%s3 + $0x20] sm:$0xff] %v308
  %317 = vst [vmem:[%s3 + $0x28] sm:$0xff] %v309
  %318 = vst [vmem:[%s3 + $0x30] sm:$0xff] %v310
  %319 = vst [vmem:[%s3 + $0x38] sm:$0xff] %v311
  // Predicated region
  $region14: #{moc_backbone_forward.36} parent=0 // pred_check
    _
  $region15: #{moc_backbone_forward.36} parent=0 // pred_check_branch
    %321 = sbr.rel (0) target = $region17
  $region16: #{moc_backbone_forward.36} parent=0 // pred_region
    _
  $region17: #{moc_backbone_forward.36} parent=0 // pred_fallthru
    _
  // Predicated region
  $region18: #{moc_backbone_forward.36} parent=0 // pred_check
    _
  $region19: #{moc_backbone_forward.36} parent=0 // pred_check_branch
    %323 = sbr.rel (0) target = $region21
  $region20: #{moc_backbone_forward.36} parent=0 // pred_region
    _
  $region21: #{moc_backbone_forward.36} parent=0 // pred_fallthru
    _

</llo_original>
